<compile_context>
chip_gen: v6e
topology: v6e:2x2x1
jax: 0.10.0
libtpu: 0.0.40
codegen_flags: <defaults>
</compile_context>

<pallas_src>
import functools
import math

import jax
import jax.numpy as jnp
from jax import lax
from jax.experimental import pallas as pl
from jax.experimental.pallas import tpu as pltpu

EPS = 1e-5
F32 = jnp.float32
BF16 = jnp.bfloat16

_MiB = 1024 * 1024

# Set by _detect_buffered_single(); when True, resident weights are single-buffered.
_BUFFERED_SINGLE = False


def _detect_buffered_single():
    """Probe whether pipeline_mode=pl.Buffered(1) is supported on this jax/libtpu."""
    global _BUFFERED_SINGLE
    try:
        if not hasattr(pl, "Buffered"):
            _BUFFERED_SINGLE = False
            return _BUFFERED_SINGLE
        spec = pl.BlockSpec((8, 128), lambda i: (0, 0),
                            pipeline_mode=pl.Buffered(1))

        def _probe(x_ref, o_ref):
            o_ref[...] = x_ref[...] + 1.0

        out = pl.pallas_call(
            _probe,
            grid=(2,),
            in_specs=[spec],
            out_specs=pl.BlockSpec((8, 128), lambda i: (i, 0)),
            out_shape=jax.ShapeDtypeStruct((16, 128), jnp.float32),
        )(jnp.zeros((8, 128), jnp.float32))
        jax.block_until_ready(out)
        _BUFFERED_SINGLE = True
    except Exception:
        _BUFFERED_SINGLE = False
    return _BUFFERED_SINGLE


@functools.lru_cache(maxsize=None)
def _vmem_limit_bytes():
    # v5e/v6e: 128 MiB physical -> ~100 MiB scoped; v7x: 64 MiB physical -> ~56 MiB.
    try:
        cap = int(pltpu.get_tpu_info().vmem_capacity_bytes)
        return max(32 * _MiB, min(cap - 8 * _MiB, 100 * _MiB))
    except Exception:
        return 48 * _MiB


def _compiler_params(semantics):
    try:
        return pltpu.CompilerParams(dimension_semantics=semantics,
                                    vmem_limit_bytes=_vmem_limit_bytes())
    except Exception:
        return pltpu.CompilerParams(dimension_semantics=semantics)


def _cost(flops, bytes_accessed, transcendentals=0):
    try:
        return pl.CostEstimate(flops=int(flops),
                               transcendentals=int(transcendentals),
                               bytes_accessed=int(bytes_accessed))
    except Exception:
        return None


def _layernorm(x, g, b):
    mu = jnp.mean(x, axis=-1, keepdims=True)
    var = jnp.mean(jnp.square(x - mu), axis=-1, keepdims=True)
    return (x - mu) * lax.rsqrt(var + EPS) * g + b


def _pick_chunk(total, target=1024, align=128):
    """Largest lane-aligned divisor of `total` that is <= target (else full)."""
    if total <= target:
        return total
    hc = (target // align) * align
    while hc >= align:
        if total % hc == 0:
            return hc
        hc -= align
    return total


# ---------------------------- Pallas kernels ----------------------------
# Each kernel processes one image per batch-grid step (batch dim squeezed via
# BlockSpec(None, ...)); weight tiles use a constant index_map so they stay
# resident in VMEM across the grid (single-buffered when supported).

def patch_embed_kernel(p_ref, w_ref, o_ref):
    # conv1 (stride == kernel, no bias) as (Np, K_pad) @ (K_pad, C), bf16 MXU.
    o_ref[...] = jnp.dot(p_ref[...], w_ref[...], preferred_element_type=F32)


def ln_pre_kernel(x_ref, pos_ref, g_ref, b_ref, o_ref):
    # + positional embedding, then ln_pre (f32).
    o_ref[...] = _layernorm(x_ref[...] + pos_ref[...], g_ref[...], b_ref[...])


def attn_core_kernel(x_ref, g1_ref, b1_ref, wq_ref, wk_ref, wv_ref,
                     bq_ref, bk_ref, bv_ref, y_ref):
    """ln_1 -> q/k/v projections (LoRA and attn_scale pre-folded into the weights)
    -> softmax attention -> attn @ v (emitted bf16)."""
    h = _layernorm(x_ref[...], g1_ref[...], b1_ref[...])          # (N, C) f32 == `query`
    hb = h.astype(BF16)
    q = jnp.dot(hb, wq_ref[...], preferred_element_type=F32) + bq_ref[...]
    k = jnp.dot(hb, wk_ref[...], preferred_element_type=F32) + bk_ref[...]
    v = jnp.dot(hb, wv_ref[...], preferred_element_type=F32) + bv_ref[...]
    # q @ k^T without an explicit in-kernel transpose, bf16 operands / f32 acc.
    scores = lax.dot_general(q.astype(BF16), k.astype(BF16),
                             (((1,), (1,)), ((), ())),
                             preferred_element_type=F32)          # (N, N)
    smax = jnp.max(scores, axis=-1, keepdims=True)
    e = jnp.exp(scores - smax)
    inv = pl.reciprocal(jnp.sum(e, axis=-1, keepdims=True), approx=True)
    p = (e * inv).astype(BF16)
    y_ref[...] = jnp.dot(p, v.astype(BF16),
                         preferred_element_type=F32).astype(y_ref.dtype)


def block_tail_kernel(x_ref, ys_ref, w_out_ref, b_out_ref,
                      g2_ref, b2_ref, w_fc_ref, b_fc_ref,
                      w_pr_ref, b_pr_ref, o_ref,
                      x1_sc, h2_sc, acc_sc):
    """out_proj -> residual -> ln_2 -> MLP (QuickGELU) -> residual.

    The MLP hidden dim (4C) is tiled over grid axis 1 ("arbitrary"): the fc/proj
    weight chunks stream through VMEM while the c_proj partial sums accumulate
    in a VMEM scratch.  x1 / ln_2(x1) are computed once at chunk 0."""
    hidx = pl.program_id(1)

    @pl.when(hidx == 0)
    def _():
        attn_out = jnp.dot(ys_ref[...], w_out_ref[...],
                           preferred_element_type=F32) + b_out_ref[...]
        x1 = x_ref[...] + attn_out
        x1_sc[...] = x1
        h2_sc[...] = _layernorm(x1, g2_ref[...], b2_ref[...]).astype(BF16)
        acc_sc[...] = jnp.zeros_like(acc_sc)

    u = jnp.dot(h2_sc[...], w_fc_ref[...],
                preferred_element_type=F32) + b_fc_ref[...]        # (N, Hc) f32
    u = u * jax.nn.sigmoid(1.702 * u)                              # QuickGELU (f32)
    acc_sc[...] += jnp.dot(u.astype(BF16), w_pr_ref[...],
                           preferred_element_type=F32)             # (N, C)

    @pl.when(hidx == pl.num_programs(1) - 1)
    def _():
        o_ref[...] = x1_sc[...] + acc_sc[...] + b_pr_ref[...]


def head_kernel(cls_ref, g_ref, b_ref, proj_ref, o_ref):
    # ln_post on the CLS token, then @ visual projection.
    h = _layernorm(cls_ref[...], g_ref[...], b_ref[...])
    o_ref[...] = jnp.dot(h.astype(BF16), proj_ref[...],
                         preferred_element_type=F32)


# ---------------------------- pallas_call wrappers ----------------------------

def _batch_spec(arr):
    """One image per grid step: squeeze the batch dim out of the kernel view."""
    nd = arr.ndim
    return pl.BlockSpec((None,) + tuple(arr.shape[1:]),
                        lambda b, _nd=nd: (b,) + (0,) * (_nd - 1))


def _batch_spec2(arr):
    """Batch-squeezed spec for a 2-axis grid; constant along the second axis."""
    nd = arr.ndim
    return pl.BlockSpec((None,) + tuple(arr.shape[1:]),
                        lambda b, h, _nd=nd: (b,) + (0,) * (_nd - 1))


def _resident_spec(arr):
    """Whole array resident in VMEM for every grid step (weights / biases).
    Single-buffered when pipeline_mode=pl.Buffered(1) is available."""
    nd = arr.ndim
    shape = tuple(arr.shape)
    idx = lambda *_args, _nd=nd: (0,) * _nd
    if _BUFFERED_SINGLE:
        try:
            return pl.BlockSpec(shape, idx, pipeline_mode=pl.Buffered(1))
        except Exception:
            pass
    return pl.BlockSpec(shape, idx)


def _per_image_call(kernel, B, args, batched_flags, out_elem_shape,
                    out_dtype=F32, cost=None):
    in_specs = [_batch_spec(a) if f else _resident_spec(a)
                for a, f in zip(args, batched_flags)]
    n_out = len(out_elem_shape)
    out_specs = pl.BlockSpec((None,) + tuple(out_elem_shape),
                             lambda b, _n=n_out: (b,) + (0,) * _n)
    kwargs = {}
    if cost is not None:
        kwargs["cost_estimate"] = cost
    return pl.pallas_call(
        kernel,
        grid=(B,),
        in_specs=in_specs,
        out_specs=out_specs,
        out_shape=jax.ShapeDtypeStruct((B,) + tuple(out_elem_shape), out_dtype),
        compiler_params=_compiler_params(("parallel",)),
        **kwargs,
    )(*args)


def _block_tail_call(x, ys, w_out, b_out, g2, b2, w_fc, b_fc, w_pr, b_pr, cost=None):
    B, N, C = x.shape
    C4 = w_fc.shape[1]
    Hc = _pick_chunk(C4)
    n_h = C4 // Hc

    in_specs = [
        _batch_spec2(x),
        _batch_spec2(ys),
        _resident_spec(w_out),
        _resident_spec(b_out),
        _resident_spec(g2),
        _resident_spec(b2),
        pl.BlockSpec((C, Hc), lambda b, h: (0, h)),     # fc weight chunk (pipelined)
        pl.BlockSpec((1, Hc), lambda b, h: (0, h)),     # fc bias chunk
        pl.BlockSpec((Hc, C), lambda b, h: (h, 0)),     # proj weight chunk (pipelined)
        _resident_spec(b_pr),
    ]
    out_specs = pl.BlockSpec((None, N, C), lambda b, h: (b, 0, 0))
    kwargs = {}
    if cost is not None:
        kwargs["cost_estimate"] = cost
    return pl.pallas_call(
        block_tail_kernel,
        grid=(B, n_h),
        in_specs=in_specs,
        out_specs=out_specs,
        out_shape=jax.ShapeDtypeStruct((B, N, C), F32),
        scratch_shapes=[pltpu.VMEM((N, C), F32),      # x1
                        pltpu.VMEM((N, C), BF16),     # ln_2(x1), already bf16 for MXU
                        pltpu.VMEM((N, C), F32)],     # c_proj accumulator
        compiler_params=_compiler_params(("parallel", "arbitrary")),
        **kwargs,
    )(x, ys, w_out, b_out, g2, b2, w_fc, b_fc, w_pr, b_pr)


def _whole_call(kernel, out_shape, *args):
    return pl.pallas_call(
        kernel,
        out_shape=out_shape,
        in_specs=[pl.BlockSpec(memory_space=pltpu.MemorySpace.VMEM)] * len(args),
        out_specs=pl.BlockSpec(memory_space=pltpu.MemorySpace.VMEM),
    )(*args)


# ---------------------------- forward ----------------------------

def clip_with_lora_forward(params, image):
    B = image.shape[0]
    C = params['width']
    P = params['patch']
    L = params['num_layers']
    H, W = image.shape[2], image.shape[3]
    gh, gw = H // P, W // P
    Np = gh * gw
    N = Np + 1
    K = 3 * P * P
    K_pad = params['conv_w_t'].shape[0]
    C4 = 4 * C
    lora_scale = float(params['lora_alpha']) / float(params['lora_rank'])
    attn_scale = float(C) ** (-0.5)

    # conv1 (kernel == stride, bias=False) as unfold + per-image matmul.  The
    # contraction dim is zero-padded to a lane-aligned K_pad (exact: padded
    # columns multiply padded zero weight rows).
    patches = image.reshape(B, 3, gh, P, gw, P).transpose(0, 2, 4, 1, 3, 5)
    patches = patches.reshape(B, Np, K)
    if K_pad != K:
        patches = jnp.pad(patches, ((0, 0), (0, 0), (0, K_pad - K)))
    patches = patches.astype(BF16)

    tok = _per_image_call(
        patch_embed_kernel, B,
        (patches, params['conv_w_t']),
        (True, False),
        (Np, C), F32,
        cost=_cost(2 * B * Np * K_pad * C,
                   B * Np * K_pad * 2 + K_pad * C * 2 + B * Np * C * 4))

    cls = jnp.broadcast_to(params['class_emb'][None, None, :], (B, 1, C)).astype(F32)
    x = jnp.concatenate([cls, tok], axis=1)                       # (B, N, C)

    x = _per_image_call(
        ln_pre_kernel, B,
        (x, params['pos_emb'], params['ln_pre_g'], params['ln_pre_b']),
        (True, False, False, False),
        (N, C), F32,
        cost=_cost(10 * B * N * C, 2 * B * N * C * 4 + N * C * 4))

    # ---- hoisted LoRA fold for ALL layers (outside the per-layer loop) ----
    # Exact algebra: ((h @ down.T) @ up.T) * s == h @ (down.T @ up.T * s).
    # attn_scale is folded into the q weight/bias here as well, so the kernel
    # never multiplies q by the scale.
    def _fold(base_t, down, up):
        delta = jnp.einsum('lrc,ldr->lcd', down, up) * lora_scale
        return base_t + delta

    wq_all = (_fold(params['wq_t'], params['lq_down'], params['lq_up'])
              * attn_scale).astype(BF16)                          # (L, C, C)
    wk_all = _fold(params['wk_t'], params['lk_down'], params['lk_up']).astype(BF16)
    wv_all = _fold(params['wv_t'], params['lv_down'], params['lv_up']).astype(BF16)
    bq_all = params['bq'] * attn_scale                            # (L, 1, C) f32

    attn_cost = _cost(6 * B * N * C * C + 4 * B * N * N * C,
                      B * N * C * 4 + 3 * C * C * 2 + B * N * C * 2,
                      transcendentals=B * N * N)
    tail_cost = _cost(2 * B * N * C * C + 4 * B * N * C * C4,
                      B * N * C * 10 + (C * C + 2 * C * C4) * 2,
                      transcendentals=B * N * C4)

    # TODO(synk): the original code wraps an unknown `base_clip_model`; the OpenAI-CLIP
    # ResidualAttentionBlock indexes `self.attn(...)[0]`, which is inconsistent with the
    # patched lora_forward returning a plain tensor.  We use the patched-forward return
    # value whole (x = x + lora_attn(ln_1(x))), the only self-consistent interpretation.
    for li in range(L):
        y_att = _per_image_call(
            attn_core_kernel, B,
            (x,
             params['ln1_g'][li], params['ln1_b'][li],
             wq_all[li], wk_all[li], wv_all[li],
             bq_all[li], params['bk'][li], params['bv'][li]),
            (True, False, False, False, False, False, False, False, False),
            (N, C), BF16, cost=attn_cost)

        # Exact reproduction of `(attn @ v).transpose(1, 2).reshape(B, N, C)` from the
        # patched lora_forward (a head-less data scramble since q/k/v carry no head
        # dim) — pure glue, kept in bf16 to halve the per-layer HBM roundtrip.
        y_scr = y_att.swapaxes(1, 2).reshape(B, N, C)

        x = _block_tail_call(
            x, y_scr,
            params['out_w_t'][li], params['out_b'][li],
            params['ln2_g'][li], params['ln2_b'][li],
            params['fc_w_t'][li], params['fc_b'][li],
            params['pr_w_t'][li], params['pr_b'][li],
            cost=tail_cost)

    cls_tok = x[:, 0, :]                                           # (B, C)
    feats = _whole_call(head_kernel,
                        jax.ShapeDtypeStruct((B, params['out_dim']), F32),
                        cls_tok,
                        params['ln_post_g'], params['ln_post_b'],
                        params['visual_proj'])
    return feats                                                   # (B, out_dim)


# ---------------------------- parameters ----------------------------

def init_params(key, *, width, patch, layers, rank, alpha, out_dim, n_tokens):
    keys = iter(jax.random.split(key, 16 + 24 * max(layers, 1)))

    def nrm(shape, scale=0.02):
        return scale * jax.random.normal(next(keys), shape, dtype=F32)

    C = width
    K = 3 * patch * patch
    K_pad = ((K + 127) // 128) * 128          # lane-align the conv1 contraction dim
    conv_w = nrm((C, K)).T                    # (K, C): conv1.weight flattened & transposed
    conv_w_t = jnp.zeros((K_pad, C), F32).at[:K, :].set(conv_w).astype(BF16)

    def stack(fn):
        return jnp.stack([fn() for _ in range(layers)], axis=0)

    kaiming_bound = math.sqrt(6.0 / C)        # rough kaiming-uniform scale for lora_down

    params = {
        'width': C, 'patch': patch, 'out_dim': out_dim, 'num_layers': layers,
        'lora_rank': rank, 'lora_alpha': alpha,
        'conv_w_t': conv_w_t,
        'class_emb': nrm((C,)),
        'pos_emb': nrm((n_tokens, C)),
        'ln_pre_g': jnp.ones((1, C), F32), 'ln_pre_b': jnp.zeros((1, C), F32),
        'ln_post_g': jnp.ones((1, C), F32), 'ln_post_b': jnp.zeros((1, C), F32),
        'visual_proj': nrm((C, out_dim)).astype(BF16),
        # ---- per-layer stacks (L leading dim) ----
        'ln1_g': jnp.ones((layers, 1, C), F32), 'ln1_b': jnp.zeros((layers, 1, C), F32),
        # MultiheadAttention.in_proj_weight (3C, C): rows split into Wq/Wk/Wv and
        # pre-transposed -> (L, C, C); kept f32 so the per-forward LoRA fold is exact.
        'wq_t': stack(lambda: nrm((C, C)).T),
        'wk_t': stack(lambda: nrm((C, C)).T),
        'wv_t': stack(lambda: nrm((C, C)).T),
        'bq': jnp.zeros((layers, 1, C), F32),
        'bk': jnp.zeros((layers, 1, C), F32),
        'bv': jnp.zeros((layers, 1, C), F32),
        'out_w_t': stack(lambda: nrm((C, C)).T).astype(BF16),      # out_proj.weight^T
        'out_b': jnp.zeros((layers, 1, C), F32),
        'ln2_g': jnp.ones((layers, 1, C), F32), 'ln2_b': jnp.zeros((layers, 1, C), F32),
        'fc_w_t': stack(lambda: nrm((4 * C, C)).T).astype(BF16),   # (L, C, 4C)
        'fc_b': jnp.zeros((layers, 1, 4 * C), F32),
        'pr_w_t': stack(lambda: nrm((C, 4 * C)).T).astype(BF16),   # (L, 4C, C)
        'pr_b': jnp.zeros((layers, 1, C), F32),
        # LoRALayer shapes: lora_down.weight (rank, C), lora_up.weight (C, rank).
        # NOTE: the module zero-inits lora_up; we use small deterministic non-zero
        # values so the LoRA path is numerically exercised (semantics identical).
        'lq_down': stack(lambda: nrm((rank, C), kaiming_bound)),
        'lk_down': stack(lambda: nrm((rank, C), kaiming_bound)),
        'lv_down': stack(lambda: nrm((rank, C), kaiming_bound)),
        'lq_up': stack(lambda: nrm((C, rank), 0.02)),
        'lk_up': stack(lambda: nrm((C, rank), 0.02)),
        'lv_up': stack(lambda: nrm((C, rank), 0.02)),
    }
    return params


if __name__ == "__main__":
    key = jax.random.PRNGKey(0)
    B, CH, HW, P = 2, 3, 16, 8
    width, layers, rank, alpha, out_dim = 32, 2, 8, 16, 16
    n_tokens = (HW // P) ** 2 + 1

    _detect_buffered_single()   # probe pl.Buffered(1) support before tracing

    params = init_params(key, width=width, patch=P, layers=layers, rank=rank,
                         alpha=alpha, out_dim=out_dim, n_tokens=n_tokens)
    image = jax.random.normal(jax.random.fold_in(key, 999),
                              (B, CH, HW, HW), dtype=F32)

    fwd = jax.jit(lambda img: clip_with_lora_forward(params, img))
    feats = fwd(image)
    jax.block_until_ready(feats)
    assert feats.shape == (B, out_dim) and feats.dtype == F32
    print("KERNEL_OK")
</pallas_src>

<mosaic_0001>
module attributes {stable_mosaic.version = 11 : i64} {
  func.func @_probe(%arg0: i32, %arg1: memref<8x128xf32, #tpu.memory_space<vmem>>, %arg2: memref<8x128xf32, #tpu.memory_space<vmem>>) attributes {dimension_semantics = [#tpu.dimension_semantics<arbitrary>], iteration_bounds = array<i64: 2>, scalar_prefetch = 0 : i64, scratch_operands = 0 : i64, tpu.core_type = #tpu.core_type<tc>, window_params = [{pipeline_mode = #tpu.pipeline_mode<synchronous>, transform_indices = @transform_0, window_bounds = array<i64: 8, 128>}, {transform_indices = @transform_1, window_bounds = array<i64: 8, 128>}]} {
    %c0 = arith.constant 0 : index
    %c0_0 = arith.constant 0 : index
    %0 = vector.load %arg1[%c0, %c0_0] : memref<8x128xf32, #tpu.memory_space<vmem>>, vector<8x128xf32>
    %cst = arith.constant 1.000000e+00 : f32
    %1 = vector.broadcast %cst : f32 to vector<8x128xf32>
    %2 = arith.addf %0, %1 : vector<8x128xf32>
    %c0_1 = arith.constant 0 : index
    %c0_2 = arith.constant 0 : index
    %3 = vector.load %arg2[%c0_1, %c0_2] : memref<8x128xf32, #tpu.memory_space<vmem>>, vector<8x128xf32>
    tpu.vector_store %arg2[%c0_1, %c0_2], %2 {strides = array<i32>} : memref<8x128xf32, #tpu.memory_space<vmem>>, vector<8x128xf32>,
    return
  }
  func.func @transform_0(%arg0: i32) -> (i32, i32) {
    %c0_i32 = arith.constant 0 : i32
    %c0_i32_0 = arith.constant 0 : i32
    %c0_i32_1 = arith.constant 0 : i32
    return %c0_i32, %c0_i32_0 : i32, i32
  }
  func.func @transform_1(%arg0: i32) -> (i32, i32) {
    %c0_i32 = arith.constant 0 : i32
    %c0_i32_0 = arith.constant 0 : i32
    return %arg0, %c0_i32 : i32, i32
  }
}

module attributes {stable_mosaic.version = 11 : i64} {
  func.func @attn_core_kernel(%arg0: i32, %arg1: memref<1x5x32xf32, #tpu.memory_space<vmem>>, %arg2: memref<1x32xf32, #tpu.memory_space<vmem>>, %arg3: memref<1x32xf32, #tpu.memory_space<vmem>>, %arg4: memref<32x32xbf16, #tpu.memory_space<vmem>>, %arg5: memref<32x32xbf16, #tpu.memory_space<vmem>>, %arg6: memref<32x32xbf16, #tpu.memory_space<vmem>>, %arg7: memref<1x32xf32, #tpu.memory_space<vmem>>, %arg8: memref<1x32xf32, #tpu.memory_space<vmem>>, %arg9: memref<1x32xf32, #tpu.memory_space<vmem>>, %arg10: memref<1x5x32xbf16, #tpu.memory_space<vmem>>) attributes {dimension_semantics = [#tpu.dimension_semantics<parallel>], iteration_bounds = array<i64: 2>, scalar_prefetch = 0 : i64, scratch_operands = 0 : i64, tpu.core_type = #tpu.core_type<tc>, window_params = [{transform_indices = @transform_0, window_bounds = array<i64: 1, 5, 32>}, {pipeline_mode = #tpu.pipeline_mode<synchronous>, transform_indices = @transform_1, window_bounds = array<i64: 1, 32>}, {pipeline_mode = #tpu.pipeline_mode<synchronous>, transform_indices = @transform_2, window_bounds = array<i64: 1, 32>}, {pipeline_mode = #tpu.pipeline_mode<synchronous>, transform_indices = @transform_3, window_bounds = array<i64: 32, 32>}, {pipeline_mode = #tpu.pipeline_mode<synchronous>, transform_indices = @transform_4, window_bounds = array<i64: 32, 32>}, {pipeline_mode = #tpu.pipeline_mode<synchronous>, transform_indices = @transform_5, window_bounds = array<i64: 32, 32>}, {pipeline_mode = #tpu.pipeline_mode<synchronous>, transform_indices = @transform_6, window_bounds = array<i64: 1, 32>}, {pipeline_mode = #tpu.pipeline_mode<synchronous>, transform_indices = @transform_7, window_bounds = array<i64: 1, 32>}, {pipeline_mode = #tpu.pipeline_mode<synchronous>, transform_indices = @transform_8, window_bounds = array<i64: 1, 32>}, {transform_indices = @transform_9, window_bounds = array<i64: 1, 5, 32>}]} {
    %c0 = arith.constant 0 : index
    %c0_0 = arith.constant 0 : index
    %c0_1 = arith.constant 0 : index
    %0 = vector.load %arg1[%c0, %c0_0, %c0_1] : memref<1x5x32xf32, #tpu.memory_space<vmem>>, vector<1x5x32xf32>
    %1 = vector.shape_cast %0 : vector<1x5x32xf32> to vector<5x32xf32>
    %c0_2 = arith.constant 0 : index
    %c0_3 = arith.constant 0 : index
    %2 = vector.load %arg2[%c0_2, %c0_3] : memref<1x32xf32, #tpu.memory_space<vmem>>, vector<1x32xf32>
    %c0_4 = arith.constant 0 : index
    %c0_5 = arith.constant 0 : index
    %3 = vector.load %arg3[%c0_4, %c0_5] : memref<1x32xf32, #tpu.memory_space<vmem>>, vector<1x32xf32>
    %cst = arith.constant dense<0.000000e+00> : vector<5xf32>
    %4 = vector.multi_reduction <add>, %1, %cst [1] : vector<5x32xf32> to vector<5xf32>
    %5 = vector.shape_cast %4 : vector<5xf32> to vector<5x1xf32>
    %cst_6 = arith.constant 3.200000e+01 : f32
    %6 = vector.broadcast %cst_6 : f32 to vector<5x1xf32>
    %7 = arith.divf %5, %6 : vector<5x1xf32>
    %8 = vector.broadcast %7 : vector<5x1xf32> to vector<5x32xf32>
    %9 = arith.subf %1, %8 : vector<5x32xf32>
    %10 = arith.mulf %9, %9 : vector<5x32xf32>
    %cst_7 = arith.constant dense<0.000000e+00> : vector<5xf32>
    %11 = vector.multi_reduction <add>, %10, %cst_7 [1] : vector<5x32xf32> to vector<5xf32>
    %12 = vector.shape_cast %11 : vector<5xf32> to vector<5x1xf32>
    %cst_8 = arith.constant 3.200000e+01 : f32
    %13 = vector.broadcast %cst_8 : f32 to vector<5x1xf32>
    %14 = arith.divf %12, %13 : vector<5x1xf32>
    %15 = vector.broadcast %7 : vector<5x1xf32> to vector<5x32xf32>
    %16 = arith.subf %1, %15 : vector<5x32xf32>
    %cst_9 = arith.constant 9.99999974E-6 : f32
    %17 = vector.broadcast %cst_9 : f32 to vector<5x1xf32>
    %18 = arith.addf %14, %17 : vector<5x1xf32>
    %19 = math.rsqrt %18 : vector<5x1xf32>
    %20 = vector.broadcast %19 : vector<5x1xf32> to vector<5x32xf32>
    %21 = arith.mulf %16, %20 : vector<5x32xf32>
    %22 = vector.broadcast %2 : vector<1x32xf32> to vector<5x32xf32>
    %23 = arith.mulf %21, %22 : vector<5x32xf32>
    %24 = vector.broadcast %3 : vector<1x32xf32> to vector<5x32xf32>
    %25 = arith.addf %23, %24 : vector<5x32xf32>
    %26 = arith.truncf %25 : vector<5x32xf32> to vector<5x32xbf16>
    %c0_10 = arith.constant 0 : index
    %c0_11 = arith.constant 0 : index
    %27 = vector.load %arg4[%c0_10, %c0_11] : memref<32x32xbf16, #tpu.memory_space<vmem>>, vector<32x32xbf16>
    %cst_12 = arith.constant dense<0.000000e+00> : vector<5x32xf32>
    %28 = tpu.matmul %26, %27, %cst_12 {dimension_numbers = #tpu.dot_dimension_numbers<[1], [0], [0], [1], [0, 0, 1, 1], [], []>} : vector<5x32xbf16>, vector<32x32xbf16>, vector<5x32xf32> -> vector<5x32xf32>
    %c0_13 = arith.constant 0 : index
    %c0_14 = arith.constant 0 : index
    %29 = vector.load %arg7[%c0_13, %c0_14] : memref<1x32xf32, #tpu.memory_space<vmem>>, vector<1x32xf32>
    %30 = vector.broadcast %29 : vector<1x32xf32> to vector<5x32xf32>
    %31 = arith.addf %28, %30 : vector<5x32xf32>
    %c0_15 = arith.constant 0 : index
    %c0_16 = arith.constant 0 : index
    %32 = vector.load %arg5[%c0_15, %c0_16] : memref<32x32xbf16, #tpu.memory_space<vmem>>, vector<32x32xbf16>
    %cst_17 = arith.constant dense<0.000000e+00> : vector<5x32xf32>
    %33 = tpu.matmul %26, %32, %cst_17 {dimension_numbers = #tpu.dot_dimension_numbers<[1], [0], [0], [1], [0, 0, 1, 1], [], []>} : vector<5x32xbf16>, vector<32x32xbf16>, vector<5x32xf32> -> vector<5x32xf32>
    %c0_18 = arith.constant 0 : index
    %c0_19 = arith.constant 0 : index
    %34 = vector.load %arg8[%c0_18, %c0_19] : memref<1x32xf32, #tpu.memory_space<vmem>>, vector<1x32xf32>
    %35 = vector.broadcast %34 : vector<1x32xf32> to vector<5x32xf32>
    %36 = arith.addf %33, %35 : vector<5x32xf32>
    %c0_20 = arith.constant 0 : index
    %c0_21 = arith.constant 0 : index
    %37 = vector.load %arg6[%c0_20, %c0_21] : memref<32x32xbf16, #tpu.memory_space<vmem>>, vector<32x32xbf16>
    %cst_22 = arith.constant dense<0.000000e+00> : vector<5x32xf32>
    %38 = tpu.matmul %26, %37, %cst_22 {dimension_numbers = #tpu.dot_dimension_numbers<[1], [0], [0], [1], [0, 0, 1, 1], [], []>} : vector<5x32xbf16>, vector<32x32xbf16>, vector<5x32xf32> -> vector<5x32xf32>
    %c0_23 = arith.constant 0 : index
    %c0_24 = arith.constant 0 : index
    %39 = vector.load %arg9[%c0_23, %c0_24] : memref<1x32xf32, #tpu.memory_space<vmem>>, vector<1x32xf32>
    %40 = vector.broadcast %39 : vector<1x32xf32> to vector<5x32xf32>
    %41 = arith.addf %38, %40 : vector<5x32xf32>
    %42 = arith.truncf %31 : vector<5x32xf32> to vector<5x32xbf16>
    %43 = arith.truncf %36 : vector<5x32xf32> to vector<5x32xbf16>
    %cst_25 = arith.constant dense<0.000000e+00> : vector<5x5xf32>
    %44 = tpu.matmul %42, %43, %cst_25 {dimension_numbers = #tpu.dot_dimension_numbers<[1], [1], [0], [0], [0, 0, 1, 0], [], []>} : vector<5x32xbf16>, vector<5x32xbf16>, vector<5x5xf32> -> vector<5x5xf32>
    %cst_26 = arith.constant dense<0xFF800000> : vector<5xf32>
    %45 = vector.multi_reduction <maximumf>, %44, %cst_26 [1] : vector<5x5xf32> to vector<5xf32>
    %46 = vector.shape_cast %45 : vector<5xf32> to vector<5x1xf32>
    %47 = vector.broadcast %46 : vector<5x1xf32> to vector<5x5xf32>
    %48 = arith.subf %44, %47 : vector<5x5xf32>
    %49 = math.exp %48 : vector<5x5xf32>
    %cst_27 = arith.constant dense<0.000000e+00> : vector<5xf32>
    %50 = vector.multi_reduction <add>, %49, %cst_27 [1] : vector<5x5xf32> to vector<5xf32>
    %51 = vector.shape_cast %50 : vector<5xf32> to vector<5x1xf32>
    %52 = tpu.reciprocal %51 {approx = true} : vector<5x1xf32> -> vector<5x1xf32>
    %53 = vector.broadcast %52 : vector<5x1xf32> to vector<5x5xf32>
    %54 = arith.mulf %49, %53 : vector<5x5xf32>
    %55 = arith.truncf %54 : vector<5x5xf32> to vector<5x5xbf16>
    %56 = arith.truncf %41 : vector<5x32xf32> to vector<5x32xbf16>
    %cst_28 = arith.constant dense<0.000000e+00> : vector<5x32xf32>
    %57 = tpu.matmul %55, %56, %cst_28 {dimension_numbers = #tpu.dot_dimension_numbers<[1], [0], [0], [1], [0, 0, 1, 1], [], []>} : vector<5x5xbf16>, vector<5x32xbf16>, vector<5x32xf32> -> vector<5x32xf32>
    %58 = arith.truncf %57 : vector<5x32xf32> to vector<5x32xbf16>
    %c0_29 = arith.constant 0 : index
    %c0_30 = arith.constant 0 : index
    %c0_31 = arith.constant 0 : index
    %59 = vector.load %arg10[%c0_29, %c0_30, %c0_31] : memref<1x5x32xbf16, #tpu.memory_space<vmem>>, vector<1x5x32xbf16>
    %60 = vector.shape_cast %59 : vector<1x5x32xbf16> to vector<5x32xbf16>
    %61 = vector.shape_cast %58 : vector<5x32xbf16> to vector<1x5x32xbf16>
    tpu.vector_store %arg10[%c0_29, %c0_30, %c0_31], %61 {strides = array<i32>} : memref<1x5x32xbf16, #tpu.memory_space<vmem>>, vector<1x5x32xbf16>,
    return
  }
  func.func @transform_0(%arg0: i32) -> (i32, i32, i32) {
    %c0_i32 = arith.constant 0 : i32
    %c0_i32_0 = arith.constant 0 : i32
    %c0_i32_1 = arith.constant 0 : i32
    return %arg0, %c0_i32, %c0_i32_0 : i32, i32, i32
  }
  func.func @transform_1(%arg0: i32) -> (i32, i32) {
    %c0_i32 = arith.constant 0 : i32
    %c0_i32_0 = arith.constant 0 : i32
    %c0_i32_1 = arith.constant 0 : i32
    return %c0_i32, %c0_i32_0 : i32, i32
  }
  func.func @transform_2(%arg0: i32) -> (i32, i32) {
    %c0_i32 = arith.constant 0 : i32
    %c0_i32_0 = arith.constant 0 : i32
    %c0_i32_1 = arith.constant 0 : i32
    return %c0_i32, %c0_i32_0 : i32, i32
  }
  func.func @transform_3(%arg0: i32) -> (i32, i32) {
    %c0_i32 = arith.constant 0 : i32
    %c0_i32_0 = arith.constant 0 : i32
    %c0_i32_1 = arith.constant 0 : i32
    return %c0_i32, %c0_i32_0 : i32, i32
  }
  func.func @transform_4(%arg0: i32) -> (i32, i32) {
    %c0_i32 = arith.constant 0 : i32
    %c0_i32_0 = arith.constant 0 : i32
    %c0_i32_1 = arith.constant 0 : i32
    return %c0_i32, %c0_i32_0 : i32, i32
  }
  func.func @transform_5(%arg0: i32) -> (i32, i32) {
    %c0_i32 = arith.constant 0 : i32
    %c0_i32_0 = arith.constant 0 : i32
    %c0_i32_1 = arith.constant 0 : i32
    return %c0_i32, %c0_i32_0 : i32, i32
  }
  func.func @transform_6(%arg0: i32) -> (i32, i32) {
    %c0_i32 = arith.constant 0 : i32
    %c0_i32_0 = arith.constant 0 : i32
    %c0_i32_1 = arith.constant 0 : i32
    return %c0_i32, %c0_i32_0 : i32, i32
  }
  func.func @transform_7(%arg0: i32) -> (i32, i32) {
    %c0_i32 = arith.constant 0 : i32
    %c0_i32_0 = arith.constant 0 : i32
    %c0_i32_1 = arith.constant 0 : i32
    return %c0_i32, %c0_i32_0 : i32, i32
  }
  func.func @transform_8(%arg0: i32) -> (i32, i32) {
    %c0_i32 = arith.constant 0 : i32
    %c0_i32_0 = arith.constant 0 : i32
    %c0_i32_1 = arith.constant 0 : i32
    return %c0_i32, %c0_i32_0 : i32, i32
  }
  func.func @transform_9(%arg0: i32) -> (i32, i32, i32) {
    %c0_i32 = arith.constant 0 : i32
    %c0_i32_0 = arith.constant 0 : i32
    %c0_i32_1 = arith.constant 0 : i32
    return %arg0, %c0_i32, %c0_i32_0 : i32, i32, i32
  }
}

module attributes {stable_mosaic.version = 11 : i64} {
  func.func @patch_embed_kernel(%arg0: i32, %arg1: memref<1x4x256xbf16, #tpu.memory_space<vmem>>, %arg2: memref<256x32xbf16, #tpu.memory_space<vmem>>, %arg3: memref<1x4x32xf32, #tpu.memory_space<vmem>>) attributes {dimension_semantics = [#tpu.dimension_semantics<parallel>], iteration_bounds = array<i64: 2>, scalar_prefetch = 0 : i64, scratch_operands = 0 : i64, tpu.core_type = #tpu.core_type<tc>, window_params = [{transform_indices = @transform_0, window_bounds = array<i64: 1, 4, 256>}, {pipeline_mode = #tpu.pipeline_mode<synchronous>, transform_indices = @transform_1, window_bounds = array<i64: 256, 32>}, {transform_indices = @transform_2, window_bounds = array<i64: 1, 4, 32>}]} {
    %c0 = arith.constant 0 : index
    %c0_0 = arith.constant 0 : index
    %c0_1 = arith.constant 0 : index
    %0 = vector.load %arg1[%c0, %c0_0, %c0_1] : memref<1x4x256xbf16, #tpu.memory_space<vmem>>, vector<1x4x256xbf16>
    %1 = vector.shape_cast %0 : vector<1x4x256xbf16> to vector<4x256xbf16>
    %c0_2 = arith.constant 0 : index
    %c0_3 = arith.constant 0 : index
    %2 = vector.load %arg2[%c0_2, %c0_3] : memref<256x32xbf16, #tpu.memory_space<vmem>>, vector<256x32xbf16>
    %cst = arith.constant dense<0.000000e+00> : vector<4x32xf32>
    %3 = tpu.matmul %1, %2, %cst {dimension_numbers = #tpu.dot_dimension_numbers<[1], [0], [0], [1], [0, 0, 1, 1], [], []>} : vector<4x256xbf16>, vector<256x32xbf16>, vector<4x32xf32> -> vector<4x32xf32>
    %c0_4 = arith.constant 0 : index
    %c0_5 = arith.constant 0 : index
    %c0_6 = arith.constant 0 : index
    %4 = vector.load %arg3[%c0_4, %c0_5, %c0_6] : memref<1x4x32xf32, #tpu.memory_space<vmem>>, vector<1x4x32xf32>
    %5 = vector.shape_cast %4 : vector<1x4x32xf32> to vector<4x32xf32>
    %6 = vector.shape_cast %3 : vector<4x32xf32> to vector<1x4x32xf32>
    tpu.vector_store %arg3[%c0_4, %c0_5, %c0_6], %6 {strides = array<i32>} : memref<1x4x32xf32, #tpu.memory_space<vmem>>, vector<1x4x32xf32>,
    return
  }
  func.func @transform_0(%arg0: i32) -> (i32, i32, i32) {
    %c0_i32 = arith.constant 0 : i32
    %c0_i32_0 = arith.constant 0 : i32
    %c0_i32_1 = arith.constant 0 : i32
    return %arg0, %c0_i32, %c0_i32_0 : i32, i32, i32
  }
  func.func @transform_1(%arg0: i32) -> (i32, i32) {
    %c0_i32 = arith.constant 0 : i32
    %c0_i32_0 = arith.constant 0 : i32
    %c0_i32_1 = arith.constant 0 : i32
    return %c0_i32, %c0_i32_0 : i32, i32
  }
  func.func @transform_2(%arg0: i32) -> (i32, i32, i32) {
    %c0_i32 = arith.constant 0 : i32
    %c0_i32_0 = arith.constant 0 : i32
    %c0_i32_1 = arith.constant 0 : i32
    return %arg0, %c0_i32, %c0_i32_0 : i32, i32, i32
  }
}

module attributes {stable_mosaic.version = 11 : i64} {
  func.func @ln_pre_kernel(%arg0: i32, %arg1: memref<1x5x32xf32, #tpu.memory_space<vmem>>, %arg2: memref<5x32xf32, #tpu.memory_space<vmem>>, %arg3: memref<1x32xf32, #tpu.memory_space<vmem>>, %arg4: memref<1x32xf32, #tpu.memory_space<vmem>>, %arg5: memref<1x5x32xf32, #tpu.memory_space<vmem>>) attributes {dimension_semantics = [#tpu.dimension_semantics<parallel>], iteration_bounds = array<i64: 2>, scalar_prefetch = 0 : i64, scratch_operands = 0 : i64, tpu.core_type = #tpu.core_type<tc>, window_params = [{transform_indices = @transform_0, window_bounds = array<i64: 1, 5, 32>}, {pipeline_mode = #tpu.pipeline_mode<synchronous>, transform_indices = @transform_1, window_bounds = array<i64: 5, 32>}, {pipeline_mode = #tpu.pipeline_mode<synchronous>, transform_indices = @transform_2, window_bounds = array<i64: 1, 32>}, {pipeline_mode = #tpu.pipeline_mode<synchronous>, transform_indices = @transform_3, window_bounds = array<i64: 1, 32>}, {transform_indices = @transform_4, window_bounds = array<i64: 1, 5, 32>}]} {
    %c0 = arith.constant 0 : index
    %c0_0 = arith.constant 0 : index
    %c0_1 = arith.constant 0 : index
    %0 = vector.load %arg1[%c0, %c0_0, %c0_1] : memref<1x5x32xf32, #tpu.memory_space<vmem>>, vector<1x5x32xf32>
    %1 = vector.shape_cast %0 : vector<1x5x32xf32> to vector<5x32xf32>
    %c0_2 = arith.constant 0 : index
    %c0_3 = arith.constant 0 : index
    %2 = vector.load %arg2[%c0_2, %c0_3] : memref<5x32xf32, #tpu.memory_space<vmem>>, vector<5x32xf32>
    %3 = arith.addf %1, %2 : vector<5x32xf32>
    %c0_4 = arith.constant 0 : index
    %c0_5 = arith.constant 0 : index
    %4 = vector.load %arg3[%c0_4, %c0_5] : memref<1x32xf32, #tpu.memory_space<vmem>>, vector<1x32xf32>
    %c0_6 = arith.constant 0 : index
    %c0_7 = arith.constant 0 : index
    %5 = vector.load %arg4[%c0_6, %c0_7] : memref<1x32xf32, #tpu.memory_space<vmem>>, vector<1x32xf32>
    %cst = arith.constant dense<0.000000e+00> : vector<5xf32>
    %6 = vector.multi_reduction <add>, %3, %cst [1] : vector<5x32xf32> to vector<5xf32>
    %7 = vector.shape_cast %6 : vector<5xf32> to vector<5x1xf32>
    %cst_8 = arith.constant 3.200000e+01 : f32
    %8 = vector.broadcast %cst_8 : f32 to vector<5x1xf32>
    %9 = arith.divf %7, %8 : vector<5x1xf32>
    %10 = vector.broadcast %9 : vector<5x1xf32> to vector<5x32xf32>
    %11 = arith.subf %3, %10 : vector<5x32xf32>
    %12 = arith.mulf %11, %11 : vector<5x32xf32>
    %cst_9 = arith.constant dense<0.000000e+00> : vector<5xf32>
    %13 = vector.multi_reduction <add>, %12, %cst_9 [1] : vector<5x32xf32> to vector<5xf32>
    %14 = vector.shape_cast %13 : vector<5xf32> to vector<5x1xf32>
    %cst_10 = arith.constant 3.200000e+01 : f32
    %15 = vector.broadcast %cst_10 : f32 to vector<5x1xf32>
    %16 = arith.divf %14, %15 : vector<5x1xf32>
    %17 = vector.broadcast %9 : vector<5x1xf32> to vector<5x32xf32>
    %18 = arith.subf %3, %17 : vector<5x32xf32>
    %cst_11 = arith.constant 9.99999974E-6 : f32
    %19 = vector.broadcast %cst_11 : f32 to vector<5x1xf32>
    %20 = arith.addf %16, %19 : vector<5x1xf32>
    %21 = math.rsqrt %20 : vector<5x1xf32>
    %22 = vector.broadcast %21 : vector<5x1xf32> to vector<5x32xf32>
    %23 = arith.mulf %18, %22 : vector<5x32xf32>
    %24 = vector.broadcast %4 : vector<1x32xf32> to vector<5x32xf32>
    %25 = arith.mulf %23, %24 : vector<5x32xf32>
    %26 = vector.broadcast %5 : vector<1x32xf32> to vector<5x32xf32>
    %27 = arith.addf %25, %26 : vector<5x32xf32>
    %c0_12 = arith.constant 0 : index
    %c0_13 = arith.constant 0 : index
    %c0_14 = arith.constant 0 : index
    %28 = vector.load %arg5[%c0_12, %c0_13, %c0_14] : memref<1x5x32xf32, #tpu.memory_space<vmem>>, vector<1x5x32xf32>
    %29 = vector.shape_cast %28 : vector<1x5x32xf32> to vector<5x32xf32>
    %30 = vector.shape_cast %27 : vector<5x32xf32> to vector<1x5x32xf32>
    tpu.vector_store %arg5[%c0_12, %c0_13, %c0_14], %30 {strides = array<i32>} : memref<1x5x32xf32, #tpu.memory_space<vmem>>, vector<1x5x32xf32>,
    return
  }
  func.func @transform_0(%arg0: i32) -> (i32, i32, i32) {
    %c0_i32 = arith.constant 0 : i32
    %c0_i32_0 = arith.constant 0 : i32
    %c0_i32_1 = arith.constant 0 : i32
    return %arg0, %c0_i32, %c0_i32_0 : i32, i32, i32
  }
  func.func @transform_1(%arg0: i32) -> (i32, i32) {
    %c0_i32 = arith.constant 0 : i32
    %c0_i32_0 = arith.constant 0 : i32
    %c0_i32_1 = arith.constant 0 : i32
    return %c0_i32, %c0_i32_0 : i32, i32
  }
  func.func @transform_2(%arg0: i32) -> (i32, i32) {
    %c0_i32 = arith.constant 0 : i32
    %c0_i32_0 = arith.constant 0 : i32
    %c0_i32_1 = arith.constant 0 : i32
    return %c0_i32, %c0_i32_0 : i32, i32
  }
  func.func @transform_3(%arg0: i32) -> (i32, i32) {
    %c0_i32 = arith.constant 0 : i32
    %c0_i32_0 = arith.constant 0 : i32
    %c0_i32_1 = arith.constant 0 : i32
    return %c0_i32, %c0_i32_0 : i32, i32
  }
  func.func @transform_4(%arg0: i32) -> (i32, i32, i32) {
    %c0_i32 = arith.constant 0 : i32
    %c0_i32_0 = arith.constant 0 : i32
    %c0_i32_1 = arith.constant 0 : i32
    return %arg0, %c0_i32, %c0_i32_0 : i32, i32, i32
  }
}

module attributes {stable_mosaic.version = 11 : i64} {
  func.func @head_kernel(%arg0: memref<2x32xf32, #tpu.memory_space<vmem>>, %arg1: memref<1x32xf32, #tpu.memory_space<vmem>>, %arg2: memref<1x32xf32, #tpu.memory_space<vmem>>, %arg3: memref<32x16xbf16, #tpu.memory_space<vmem>>, %arg4: memref<2x16xf32, #tpu.memory_space<vmem>>) attributes {dimension_semantics = [], scalar_prefetch = 0 : i64, scratch_operands = 0 : i64, tpu.core_type = #tpu.core_type<tc>} {
    %c0 = arith.constant 0 : index
    %c0_0 = arith.constant 0 : index
    %0 = vector.load %arg0[%c0, %c0_0] : memref<2x32xf32, #tpu.memory_space<vmem>>, vector<2x32xf32>
    %c0_1 = arith.constant 0 : index
    %c0_2 = arith.constant 0 : index
    %1 = vector.load %arg1[%c0_1, %c0_2] : memref<1x32xf32, #tpu.memory_space<vmem>>, vector<1x32xf32>
    %c0_3 = arith.constant 0 : index
    %c0_4 = arith.constant 0 : index
    %2 = vector.load %arg2[%c0_3, %c0_4] : memref<1x32xf32, #tpu.memory_space<vmem>>, vector<1x32xf32>
    %cst = arith.constant dense<0.000000e+00> : vector<2xf32>
    %3 = vector.multi_reduction <add>, %0, %cst [1] : vector<2x32xf32> to vector<2xf32>
    %4 = vector.shape_cast %3 : vector<2xf32> to vector<2x1xf32>
    %cst_5 = arith.constant 3.200000e+01 : f32
    %5 = vector.broadcast %cst_5 : f32 to vector<2x1xf32>
    %6 = arith.divf %4, %5 : vector<2x1xf32>
    %7 = vector.broadcast %6 : vector<2x1xf32> to vector<2x32xf32>
    %8 = arith.subf %0, %7 : vector<2x32xf32>
    %9 = arith.mulf %8, %8 : vector<2x32xf32>
    %cst_6 = arith.constant dense<0.000000e+00> : vector<2xf32>
    %10 = vector.multi_reduction <add>, %9, %cst_6 [1] : vector<2x32xf32> to vector<2xf32>
    %11 = vector.shape_cast %10 : vector<2xf32> to vector<2x1xf32>
    %cst_7 = arith.constant 3.200000e+01 : f32
    %12 = vector.broadcast %cst_7 : f32 to vector<2x1xf32>
    %13 = arith.divf %11, %12 : vector<2x1xf32>
    %14 = vector.broadcast %6 : vector<2x1xf32> to vector<2x32xf32>
    %15 = arith.subf %0, %14 : vector<2x32xf32>
    %cst_8 = arith.constant 9.99999974E-6 : f32
    %16 = vector.broadcast %cst_8 : f32 to vector<2x1xf32>
    %17 = arith.addf %13, %16 : vector<2x1xf32>
    %18 = math.rsqrt %17 : vector<2x1xf32>
    %19 = vector.broadcast %18 : vector<2x1xf32> to vector<2x32xf32>
    %20 = arith.mulf %15, %19 : vector<2x32xf32>
    %21 = vector.broadcast %1 : vector<1x32xf32> to vector<2x32xf32>
    %22 = arith.mulf %20, %21 : vector<2x32xf32>
    %23 = vector.broadcast %2 : vector<1x32xf32> to vector<2x32xf32>
    %24 = arith.addf %22, %23 : vector<2x32xf32>
    %25 = arith.truncf %24 : vector<2x32xf32> to vector<2x32xbf16>
    %c0_9 = arith.constant 0 : index
    %c0_10 = arith.constant 0 : index
    %26 = vector.load %arg3[%c0_9, %c0_10] : memref<32x16xbf16, #tpu.memory_space<vmem>>, vector<32x16xbf16>
    %cst_11 = arith.constant dense<0.000000e+00> : vector<2x16xf32>
    %27 = tpu.matmul %25, %26, %cst_11 {dimension_numbers = #tpu.dot_dimension_numbers<[1], [0], [0], [1], [0, 0, 1, 1], [], []>} : vector<2x32xbf16>, vector<32x16xbf16>, vector<2x16xf32> -> vector<2x16xf32>
    %c0_12 = arith.constant 0 : index
    %c0_13 = arith.constant 0 : index
    %28 = vector.load %arg4[%c0_12, %c0_13] : memref<2x16xf32, #tpu.memory_space<vmem>>, vector<2x16xf32>
    tpu.vector_store %arg4[%c0_12, %c0_13], %27 {strides = array<i32>} : memref<2x16xf32, #tpu.memory_space<vmem>>, vector<2x16xf32>,
    return
  }
}

module attributes {stable_mosaic.version = 11 : i64} {
  func.func @block_tail_kernel(%arg0: i32, %arg1: i32, %arg2: memref<1x5x32xf32, #tpu.memory_space<vmem>>, %arg3: memref<1x5x32xbf16, #tpu.memory_space<vmem>>, %arg4: memref<32x32xbf16, #tpu.memory_space<vmem>>, %arg5: memref<1x32xf32, #tpu.memory_space<vmem>>, %arg6: memref<1x32xf32, #tpu.memory_space<vmem>>, %arg7: memref<1x32xf32, #tpu.memory_space<vmem>>, %arg8: memref<32x128xbf16, #tpu.memory_space<vmem>>, %arg9: memref<1x128xf32, #tpu.memory_space<vmem>>, %arg10: memref<128x32xbf16, #tpu.memory_space<vmem>>, %arg11: memref<1x32xf32, #tpu.memory_space<vmem>>, %arg12: memref<1x5x32xf32, #tpu.memory_space<vmem>>, %arg13: memref<5x32xf32, #tpu.memory_space<vmem>>, %arg14: memref<5x32xbf16, #tpu.memory_space<vmem>>, %arg15: memref<5x32xf32, #tpu.memory_space<vmem>>) attributes {dimension_semantics = [#tpu.dimension_semantics<parallel>, #tpu.dimension_semantics<arbitrary>], iteration_bounds = array<i64: 2, 1>, scalar_prefetch = 0 : i64, scratch_operands = 3 : i64, tpu.core_type = #tpu.core_type<tc>, window_params = [{transform_indices = @transform_0, window_bounds = array<i64: 1, 5, 32>}, {transform_indices = @transform_1, window_bounds = array<i64: 1, 5, 32>}, {pipeline_mode = #tpu.pipeline_mode<synchronous>, transform_indices = @transform_2, window_bounds = array<i64: 32, 32>}, {pipeline_mode = #tpu.pipeline_mode<synchronous>, transform_indices = @transform_3, window_bounds = array<i64: 1, 32>}, {pipeline_mode = #tpu.pipeline_mode<synchronous>, transform_indices = @transform_4, window_bounds = array<i64: 1, 32>}, {pipeline_mode = #tpu.pipeline_mode<synchronous>, transform_indices = @transform_5, window_bounds = array<i64: 1, 32>}, {transform_indices = @transform_6, window_bounds = array<i64: 32, 128>}, {transform_indices = @transform_7, window_bounds = array<i64: 1, 128>}, {transform_indices = @transform_8, window_bounds = array<i64: 128, 32>}, {pipeline_mode = #tpu.pipeline_mode<synchronous>, transform_indices = @transform_9, window_bounds = array<i64: 1, 32>}, {transform_indices = @transform_10, window_bounds = array<i64: 1, 5, 32>}]} {
    %c0_i32 = arith.constant 0 : i32
    %0 = arith.cmpi eq, %arg1, %c0_i32 : i32
    %1 = arith.extui %0 : i1 to i32
    %c0_i32_0 = arith.constant 0 : i32
    %2 = arith.cmpi ne, %1, %c0_i32_0 : i32
    scf.if %2 {
      %c0_17 = arith.constant 0 : index
      %c0_18 = arith.constant 0 : index
      %c0_19 = arith.constant 0 : index
      %26 = vector.load %arg3[%c0_17, %c0_18, %c0_19] : memref<1x5x32xbf16, #tpu.memory_space<vmem>>, vector<1x5x32xbf16>
      %27 = vector.shape_cast %26 : vector<1x5x32xbf16> to vector<5x32xbf16>
      %c0_20 = arith.constant 0 : index
      %c0_21 = arith.constant 0 : index
      %28 = vector.load %arg4[%c0_20, %c0_21] : memref<32x32xbf16, #tpu.memory_space<vmem>>, vector<32x32xbf16>
      %cst_22 = arith.constant dense<0.000000e+00> : vector<5x32xf32>
      %29 = tpu.matmul %27, %28, %cst_22 {dimension_numbers = #tpu.dot_dimension_numbers<[1], [0], [0], [1], [0, 0, 1, 1], [], []>} : vector<5x32xbf16>, vector<32x32xbf16>, vector<5x32xf32> -> vector<5x32xf32>
      %c0_23 = arith.constant 0 : index
      %c0_24 = arith.constant 0 : index
      %30 = vector.load %arg5[%c0_23, %c0_24] : memref<1x32xf32, #tpu.memory_space<vmem>>, vector<1x32xf32>
      %31 = vector.broadcast %30 : vector<1x32xf32> to vector<5x32xf32>
      %32 = arith.addf %29, %31 : vector<5x32xf32>
      %c0_25 = arith.constant 0 : index
      %c0_26 = arith.constant 0 : index
      %c0_27 = arith.constant 0 : index
      %33 = vector.load %arg2[%c0_25, %c0_26, %c0_27] : memref<1x5x32xf32, #tpu.memory_space<vmem>>, vector<1x5x32xf32>
      %34 = vector.shape_cast %33 : vector<1x5x32xf32> to vector<5x32xf32>
      %35 = arith.addf %34, %32 : vector<5x32xf32>
      %c0_28 = arith.constant 0 : index
      %c0_29 = arith.constant 0 : index
      %36 = vector.load %arg13[%c0_28, %c0_29] : memref<5x32xf32, #tpu.memory_space<vmem>>, vector<5x32xf32>
      tpu.vector_store %arg13[%c0_28, %c0_29], %35 {strides = array<i32>} : memref<5x32xf32, #tpu.memory_space<vmem>>, vector<5x32xf32>,
      %c0_30 = arith.constant 0 : index
      %c0_31 = arith.constant 0 : index
      %37 = vector.load %arg6[%c0_30, %c0_31] : memref<1x32xf32, #tpu.memory_space<vmem>>, vector<1x32xf32>
      %c0_32 = arith.constant 0 : index
      %c0_33 = arith.constant 0 : index
      %38 = vector.load %arg7[%c0_32, %c0_33] : memref<1x32xf32, #tpu.memory_space<vmem>>, vector<1x32xf32>
      %cst_34 = arith.constant dense<0.000000e+00> : vector<5xf32>
      %39 = vector.multi_reduction <add>, %35, %cst_34 [1] : vector<5x32xf32> to vector<5xf32>
      %40 = vector.shape_cast %39 : vector<5xf32> to vector<5x1xf32>
      %cst_35 = arith.constant 3.200000e+01 : f32
      %41 = vector.broadcast %cst_35 : f32 to vector<5x1xf32>
      %42 = arith.divf %40, %41 : vector<5x1xf32>
      %43 = vector.broadcast %42 : vector<5x1xf32> to vector<5x32xf32>
      %44 = arith.subf %35, %43 : vector<5x32xf32>
      %45 = arith.mulf %44, %44 : vector<5x32xf32>
      %cst_36 = arith.constant dense<0.000000e+00> : vector<5xf32>
      %46 = vector.multi_reduction <add>, %45, %cst_36 [1] : vector<5x32xf32> to vector<5xf32>
      %47 = vector.shape_cast %46 : vector<5xf32> to vector<5x1xf32>
      %cst_37 = arith.constant 3.200000e+01 : f32
      %48 = vector.broadcast %cst_37 : f32 to vector<5x1xf32>
      %49 = arith.divf %47, %48 : vector<5x1xf32>
      %50 = vector.broadcast %42 : vector<5x1xf32> to vector<5x32xf32>
      %51 = arith.subf %35, %50 : vector<5x32xf32>
      %cst_38 = arith.constant 9.99999974E-6 : f32
      %52 = vector.broadcast %cst_38 : f32 to vector<5x1xf32>
      %53 = arith.addf %49, %52 : vector<5x1xf32>
      %54 = math.rsqrt %53 : vector<5x1xf32>
      %55 = vector.broadcast %54 : vector<5x1xf32> to vector<5x32xf32>
      %56 = arith.mulf %51, %55 : vector<5x32xf32>
      %57 = vector.broadcast %37 : vector<1x32xf32> to vector<5x32xf32>
      %58 = arith.mulf %56, %57 : vector<5x32xf32>
      %59 = vector.broadcast %38 : vector<1x32xf32> to vector<5x32xf32>
      %60 = arith.addf %58, %59 : vector<5x32xf32>
      %61 = arith.truncf %60 : vector<5x32xf32> to vector<5x32xbf16>
      %c0_39 = arith.constant 0 : index
      %c0_40 = arith.constant 0 : index
      %62 = vector.load %arg14[%c0_39, %c0_40] : memref<5x32xbf16, #tpu.memory_space<vmem>>, vector<5x32xbf16>
      tpu.vector_store %arg14[%c0_39, %c0_40], %61 {strides = array<i32>} : memref<5x32xbf16, #tpu.memory_space<vmem>>, vector<5x32xbf16>,
      %cst_41 = arith.constant 0.000000e+00 : f32
      %63 = vector.broadcast %cst_41 : f32 to vector<5x32xf32>
      %c0_42 = arith.constant 0 : index
      %c0_43 = arith.constant 0 : index
      %64 = vector.load %arg15[%c0_42, %c0_43] : memref<5x32xf32, #tpu.memory_space<vmem>>, vector<5x32xf32>
      tpu.vector_store %arg15[%c0_42, %c0_43], %63 {strides = array<i32>} : memref<5x32xf32, #tpu.memory_space<vmem>>, vector<5x32xf32>,
    } else {
    }
    %c0 = arith.constant 0 : index
    %c0_1 = arith.constant 0 : index
    %3 = vector.load %arg14[%c0, %c0_1] : memref<5x32xbf16, #tpu.memory_space<vmem>>, vector<5x32xbf16>
    %c0_2 = arith.constant 0 : index
    %c0_3 = arith.constant 0 : index
    %4 = vector.load %arg8[%c0_2, %c0_3] : memref<32x128xbf16, #tpu.memory_space<vmem>>, vector<32x128xbf16>
    %cst = arith.constant dense<0.000000e+00> : vector<5x128xf32>
    %5 = tpu.matmul %3, %4, %cst {dimension_numbers = #tpu.dot_dimension_numbers<[1], [0], [0], [1], [0, 0, 1, 1], [], []>} : vector<5x32xbf16>, vector<32x128xbf16>, vector<5x128xf32> -> vector<5x128xf32>
    %c0_4 = arith.constant 0 : index
    %c0_5 = arith.constant 0 : index
    %6 = vector.load %arg9[%c0_4, %c0_5] : memref<1x128xf32, #tpu.memory_space<vmem>>, vector<1x128xf32>
    %7 = vector.broadcast %6 : vector<1x128xf32> to vector<5x128xf32>
    %8 = arith.addf %5, %7 : vector<5x128xf32>
    %cst_6 = arith.constant 1.702000e+00 : f32
    %9 = vector.broadcast %cst_6 : f32 to vector<5x128xf32>
    %10 = arith.mulf %9, %8 : vector<5x128xf32>
    %11 = arith.negf %10 : vector<5x128xf32>
    %12 = math.exp %11 : vector<5x128xf32>
    %cst_7 = arith.constant 1.000000e+00 : f32
    %13 = vector.broadcast %cst_7 : f32 to vector<5x128xf32>
    %14 = arith.addf %13, %12 : vector<5x128xf32>
    %15 = arith.divf %13, %14 : vector<5x128xf32>
    %16 = arith.mulf %8, %15 : vector<5x128xf32>
    %c0_8 = arith.constant 0 : index
    %c0_9 = arith.constant 0 : index
    %17 = vector.load %arg15[%c0_8, %c0_9] : memref<5x32xf32, #tpu.memory_space<vmem>>, vector<5x32xf32>
    %18 = arith.truncf %16 : vector<5x128xf32> to vector<5x128xbf16>
    %c0_10 = arith.constant 0 : index
    %c0_11 = arith.constant 0 : index
    %19 = vector.load %arg10[%c0_10, %c0_11] : memref<128x32xbf16, #tpu.memory_space<vmem>>, vector<128x32xbf16>
    %cst_12 = arith.constant dense<0.000000e+00> : vector<5x32xf32>
    %20 = tpu.matmul %18, %19, %cst_12 {dimension_numbers = #tpu.dot_dimension_numbers<[1], [0], [0], [1], [0, 0, 1, 1], [], []>} : vector<5x128xbf16>, vector<128x32xbf16>, vector<5x32xf32> -> vector<5x32xf32>
    %21 = arith.addf %17, %20 : vector<5x32xf32>
    %c0_13 = arith.constant 0 : index
    %c0_14 = arith.constant 0 : index
    %22 = vector.load %arg15[%c0_13, %c0_14] : memref<5x32xf32, #tpu.memory_space<vmem>>, vector<5x32xf32>
    tpu.vector_store %arg15[%c0_13, %c0_14], %21 {strides = array<i32>} : memref<5x32xf32, #tpu.memory_space<vmem>>, vector<5x32xf32>,
    %c0_i32_15 = arith.constant 0 : i32
    %23 = arith.cmpi eq, %arg1, %c0_i32_15 : i32
    %24 = arith.extui %23 : i1 to i32
    %c0_i32_16 = arith.constant 0 : i32
    %25 = arith.cmpi ne, %24, %c0_i32_16 : i32
    scf.if %25 {
      %c0_17 = arith.constant 0 : index
      %c0_18 = arith.constant 0 : index
      %26 = vector.load %arg13[%c0_17, %c0_18] : memref<5x32xf32, #tpu.memory_space<vmem>>, vector<5x32xf32>
      %c0_19 = arith.constant 0 : index
      %c0_20 = arith.constant 0 : index
      %27 = vector.load %arg15[%c0_19, %c0_20] : memref<5x32xf32, #tpu.memory_space<vmem>>, vector<5x32xf32>
      %28 = arith.addf %26, %27 : vector<5x32xf32>
      %c0_21 = arith.constant 0 : index
      %c0_22 = arith.constant 0 : index
      %29 = vector.load %arg11[%c0_21, %c0_22] : memref<1x32xf32, #tpu.memory_space<vmem>>, vector<1x32xf32>
      %30 = vector.broadcast %29 : vector<1x32xf32> to vector<5x32xf32>
      %31 = arith.addf %28, %30 : vector<5x32xf32>
      %c0_23 = arith.constant 0 : index
      %c0_24 = arith.constant 0 : index
      %c0_25 = arith.constant 0 : index
      %32 = vector.load %arg12[%c0_23, %c0_24, %c0_25] : memref<1x5x32xf32, #tpu.memory_space<vmem>>, vector<1x5x32xf32>
      %33 = vector.shape_cast %32 : vector<1x5x32xf32> to vector<5x32xf32>
      %34 = vector.shape_cast %31 : vector<5x32xf32> to vector<1x5x32xf32>
      tpu.vector_store %arg12[%c0_23, %c0_24, %c0_25], %34 {strides = array<i32>} : memref<1x5x32xf32, #tpu.memory_space<vmem>>, vector<1x5x32xf32>,
    } else {
    }
    return
  }
  func.func @transform_0(%arg0: i32, %arg1: i32) -> (i32, i32, i32) {
    %c0_i32 = arith.constant 0 : i32
    %c0_i32_0 = arith.constant 0 : i32
    %c0_i32_1 = arith.constant 0 : i32
    return %arg0, %c0_i32, %c0_i32_0 : i32, i32, i32
  }
  func.func @transform_1(%arg0: i32, %arg1: i32) -> (i32, i32, i32) {
    %c0_i32 = arith.constant 0 : i32
    %c0_i32_0 = arith.constant 0 : i32
    %c0_i32_1 = arith.constant 0 : i32
    return %arg0, %c0_i32, %c0_i32_0 : i32, i32, i32
  }
  func.func @transform_2(%arg0: i32, %arg1: i32) -> (i32, i32) {
    %c0_i32 = arith.constant 0 : i32
    %c0_i32_0 = arith.constant 0 : i32
    %c0_i32_1 = arith.constant 0 : i32
    return %c0_i32, %c0_i32_0 : i32, i32
  }
  func.func @transform_3(%arg0: i32, %arg1: i32) -> (i32, i32) {
    %c0_i32 = arith.constant 0 : i32
    %c0_i32_0 = arith.constant 0 : i32
    %c0_i32_1 = arith.constant 0 : i32
    return %c0_i32, %c0_i32_0 : i32, i32
  }
  func.func @transform_4(%arg0: i32, %arg1: i32) -> (i32, i32) {
    %c0_i32 = arith.constant 0 : i32
    %c0_i32_0 = arith.constant 0 : i32
    %c0_i32_1 = arith.constant 0 : i32
    return %c0_i32, %c0_i32_0 : i32, i32
  }
  func.func @transform_5(%arg0: i32, %arg1: i32) -> (i32, i32) {
    %c0_i32 = arith.constant 0 : i32
    %c0_i32_0 = arith.constant 0 : i32
    %c0_i32_1 = arith.constant 0 : i32
    return %c0_i32, %c0_i32_0 : i32, i32
  }
  func.func @transform_6(%arg0: i32, %arg1: i32) -> (i32, i32) {
    %c0_i32 = arith.constant 0 : i32
    %c0_i32_0 = arith.constant 0 : i32
    return %c0_i32, %arg1 : i32, i32
  }
  func.func @transform_7(%arg0: i32, %arg1: i32) -> (i32, i32) {
    %c0_i32 = arith.constant 0 : i32
    %c0_i32_0 = arith.constant 0 : i32
    return %c0_i32, %arg1 : i32, i32
  }
  func.func @transform_8(%arg0: i32, %arg1: i32) -> (i32, i32) {
    %c0_i32 = arith.constant 0 : i32
    %c0_i32_0 = arith.constant 0 : i32
    return %arg1, %c0_i32 : i32, i32
  }
  func.func @transform_9(%arg0: i32, %arg1: i32) -> (i32, i32) {
    %c0_i32 = arith.constant 0 : i32
    %c0_i32_0 = arith.constant 0 : i32
    %c0_i32_1 = arith.constant 0 : i32
    return %c0_i32, %c0_i32_0 : i32, i32
  }
  func.func @transform_10(%arg0: i32, %arg1: i32) -> (i32, i32, i32) {
    %c0_i32 = arith.constant 0 : i32
    %c0_i32_0 = arith.constant 0 : i32
    %c0_i32_1 = arith.constant 0 : i32
    return %arg0, %c0_i32, %c0_i32_0 : i32, i32, i32
  }
}

</mosaic_0001>

<llo_original>
// kernel: tpu_custom_call.1
$region0: #{tpu_custom_call.1}
  #allocation0 [shape = 'u32[]', space=smem, size = 0x4, offset = 0x4, fixed_abs, tag = 'smem constant byte address 0x4 - core index']
  #allocation1 [shape = 'u32[144,128]{1,0:T(1,128)}', space=vmem, size = 0x12000, scoped, tag = 'internal scratch']
  %s0 = inlined_call_operand.hbm [shape: f32[8,128], index: 0, kind: input, shape index: {}]
  %s1 = inlined_call_operand.hbm [shape: f32[16,128], index: 1, kind: output, shape index: {}]
  %s2 = sld [smem:[#allocation0]]
  $region41: #{tpu_custom_call.1} parent=0
    _
  %s4 = ssub.s32 1, %s2
  %s5 = scalar_select 0, %s4, %s2
  $region1: #{tpu_custom_call.1} parent=0
    #allocation2 [shape = 'u8[4096]{0}', space=vmem, size = 0x1000, scoped, tag = 'input window, operand 0, single buffered']
    #allocation3 [shape = 's32[2]{0}', space=sflag, size = 0x8, scoped, tag = 'scoped memory for tpu_custom_call.1']
    #allocation4 [shape = 's32[2]{0}', space=sflag, size = 0x8, scoped, tag = 'scoped memory for tpu_custom_call.1']
    #allocation5 [shape = 'u8[8192]{0}', space=vmem, size = 0x2000, scoped, tag = 'output window, operand 0']
    %6 = vsyncpa [#allocation3], 0
    %7 = vsyncpa [#allocation4], 0
    %s8 = scalar_lea.sflag [#allocation4], 1
    %9 = vsyncpa %s8, 0
    loop: start=0, step=1, limit=4
    $region2: #{tpu_custom_call.1} parent=1 // loop_pre_header
      _
    $region3: #{tpu_custom_call.1} parent=1 // loop_header
      %s11 = sphi 0, %s15
      %p12 = scmp.ge.s32.totalorder %s11, 4
      %s19 = sphi 0, %s19
      %s21 = sphi 0, %s19
      %s22 = sphi 0, %s21
      %s36 = sphi 0, %s22
      %s42 = sphi 0, %s44
      %s45 = sphi 0, %s42
      %s46 = sphi 0, %s45
      %s62 = sphi 0, %s46
    $region4: #{tpu_custom_call.1} parent=1 // loop_header_branch
      %14 = sbr.rel (%p12) target = $region8
    $region5: #{tpu_custom_call.1} parent=1 // loop_body
      %s16 = ssub.s32 %s11, 1
      %s17 = ssub.s32 %s11, 2
      %s18 = sadd.s32 %s11, 1
      %s20 = sadd.s32 %s19, 1
      %p23 = scmp.eq.s32.totalorder %s11, 1
      %p24 = scmp.ne.s32.totalorder %s19, %s21
      %p25 = scmp.eq.s32.totalorder %s11, 0
      %p26 = por %p24, %p25
      %p27 = scmp.ne.s32.totalorder %s19, %s21
      %p28 = scmp.eq.s32.totalorder %s16, 1
      %p29 = por %p27, %p28
      %p30 = scmp.ne.s32.totalorder %s21, %s22
      %p31 = scmp.eq.s32.totalorder %s16, 0
      %p32 = por %p30, %p31
      %p33 = scmp.ne.s32.totalorder %s21, %s22
      %p34 = scmp.eq.s32.totalorder %s17, 1
      %p35 = por %p33, %p34
      %p37 = scmp.ne.s32.totalorder %s22, %s36
      %p38 = scmp.eq.s32.totalorder %s17, 0
      %p39 = por %p37, %p38
      %s40 = ssub.s32 %s11, %s18
      %p41 = scmp.eq.s32.totalorder %s40, 0
      %s43 = sadd.s32 %s42, 1
      %s44 = scalar_select %p41, %s42, %s43
      %p47 = pneg %p41
      %p48 = scmp.eq.s32.totalorder %s11, 1
      %p49 = por %p47, %p48
      %p50 = scmp.ne.s32.totalorder %s42, %s45
      %p51 = scmp.eq.s32.totalorder %s11, 0
      %p52 = por %p50, %p51
      %p53 = scmp.ne.s32.totalorder %s42, %s45
      %p54 = scmp.eq.s32.totalorder %s16, 1
      %p55 = por %p53, %p54
      %p56 = scmp.ne.s32.totalorder %s45, %s46
      %p57 = scmp.eq.s32.totalorder %s16, 0
      %p58 = por %p56, %p57
      %p59 = scmp.ne.s32.totalorder %s45, %s46
      %p60 = scmp.eq.s32.totalorder %s17, 1
      %p61 = por %p59, %p60
      %p63 = scmp.ne.s32.totalorder %s46, %s62
      %p64 = scmp.eq.s32.totalorder %s17, 0
      %p65 = por %p63, %p64
      %p66 = scmp.le.s32.totalorder 1, %s11
      %p67 = scmp.lt.s32.totalorder %s11, 3
      %p68 = pnand %p66, %p67
      %p69 = pneg %p68
      // Predicated region
      $region9: #{tpu_custom_call.1} parent=5 // pred_check
        _
      $region10: #{tpu_custom_call.1} parent=5 // pred_check_branch
        %71 = sbr.rel (%p68) target = $region12
      $region11: #{tpu_custom_call.1} parent=5 // pred_region
        %s72 = ssub.s32 %s11, 1
        // Predicated region
        $region13: #{tpu_custom_call.1} parent=11 // pred_check
          %p73 = pneg %p32
        $region14: #{tpu_custom_call.1} parent=11 // pred_check_branch
          %75 = sbr.rel (%p73) target = $region16
        $region15: #{tpu_custom_call.1} parent=11 // pred_region
          %s77 = ssub.s32 128, 128
          %78 = vsyncadd [#allocation3], %s77
          %s80 = sshll.u32 [#allocation2], 4
          %s81 = int_to_ptr.vmem [resolvable:$true] %s80
          %83 = dma.hbm_to_vmem [thread:$0]  %s0, 128, %s81, [#allocation3]
        $region16: #{tpu_custom_call.1} parent=11 // pred_fallthru
          _
      $region12: #{tpu_custom_call.1} parent=5 // pred_fallthru
        _
      %p84 = scmp.lt.s32.totalorder %s11, 2
      // Predicated region
      $region17: #{tpu_custom_call.1} parent=5 // pred_check
        %p85 = pneg %p84
      $region18: #{tpu_custom_call.1} parent=5 // pred_check_branch
        %87 = sbr.rel (%p85) target = $region20
      $region19: #{tpu_custom_call.1} parent=5 // pred_region
        _
      $region20: #{tpu_custom_call.1} parent=5 // pred_fallthru
        _
      %p88 = scmp.le.s32.totalorder 1, %s11
      %p89 = scmp.lt.s32.totalorder %s11, 3
      %p90 = pnand %p88, %p89
      %p91 = pneg %p90
      // Predicated region
      $region21: #{tpu_custom_call.1} parent=5 // pred_check
        _
      $region22: #{tpu_custom_call.1} parent=5 // pred_check_branch
        %93 = sbr.rel (%p90) target = $region24
      $region23: #{tpu_custom_call.1} parent=5 // pred_region
        %s94 = ssub.s32 %s11, 1
        // Predicated region
        $region25: #{tpu_custom_call.1} parent=23 // pred_check
          %p95 = pneg %p32
        $region26: #{tpu_custom_call.1} parent=23 // pred_check_branch
          %97 = sbr.rel (%p95) target = $region28
        $region27: #{tpu_custom_call.1} parent=23 // pred_region
          %98 = dma.done [#allocation3], 128
        $region28: #{tpu_custom_call.1} parent=23 // pred_fallthru
          _
        %p99 = pneg %p32
        %p100 = pneg %p29
        %p101 = pneg %p58
        %p102 = pneg %p55
        %s103 = sand.u32 %s45, 1
        %s104 = scalar_lea.sflag [#allocation4], %s103
        %s105 = sand.u32 %s45, 1
        %s106 = smul.addr %s105, 8
        %s107 = scalar_lea.vmem [#allocation5], %s106
        %v108 = vld [vmem:[#allocation2] sm:$0xff]
        %v109 = vadd.f32 %v108, 1.0
        %110 = vst [vmem:[%s107] sm:$0xff] %v109
        %s111 = sand.u32 %s45, 1
        %s112 = scalar_lea.sflag [#allocation4], %s111
        %s113 = sand.u32 %s45, 1
        %s114 = smul.addr %s113, 8
        %s115 = scalar_lea.vmem [#allocation5], %s114
        // Predicated region
        $region29: #{tpu_custom_call.1} parent=23 // pred_check
          %p116 = pneg %p55
        $region30: #{tpu_custom_call.1} parent=23 // pred_check_branch
          %118 = sbr.rel (%p116) target = $region32
        $region31: #{tpu_custom_call.1} parent=23 // pred_region
          %s120 = ssub.s32 128, 128
          %121 = vsyncadd %s112, %s120
          %s122 = smul.addr %s16, 128
          %s123 = scalar_lea.hbm %s1, %s122
          %s125 = sshll.u32 %s115, 4
          %s126 = int_to_ptr.vmem [resolvable:$true] %s125
          %128 = dma.vmem_to_hbm [thread:$0]  %s126, 128, %s123, %s112
        $region32: #{tpu_custom_call.1} parent=23 // pred_fallthru
          _
      $region24: #{tpu_custom_call.1} parent=5 // pred_fallthru
        _
      %p129 = scmp.le.s32.totalorder 2, %s11
      // Predicated region
      $region33: #{tpu_custom_call.1} parent=5 // pred_check
        %p130 = pneg %p129
      $region34: #{tpu_custom_call.1} parent=5 // pred_check_branch
        %132 = sbr.rel (%p130) target = $region36
      $region35: #{tpu_custom_call.1} parent=5 // pred_region
        %s133 = ssub.s32 %s11, 2
        // Predicated region
        $region37: #{tpu_custom_call.1} parent=35 // pred_check
          %p134 = pneg %p61
        $region38: #{tpu_custom_call.1} parent=35 // pred_check_branch
          %136 = sbr.rel (%p134) target = $region40
        $region39: #{tpu_custom_call.1} parent=35 // pred_region
          %s137 = sand.u32 %s46, 1
          %s138 = scalar_lea.sflag [#allocation4], %s137
          %s139 = sand.u32 %s46, 1
          %s140 = smul.addr %s139, 8
          %s141 = scalar_lea.vmem [#allocation5], %s140
          %142 = dma.done %s138, 128
        $region40: #{tpu_custom_call.1} parent=35 // pred_fallthru
          _
      $region36: #{tpu_custom_call.1} parent=5 // pred_fallthru
        _
    $region6: #{tpu_custom_call.1} parent=1 // loop_footer
      %s15 = sadd.s32 1, %s11
    $region7: #{tpu_custom_call.1} parent=1 // loop_footer_branch
      %10 = sbr.rel target = $region3
    $region8: #{tpu_custom_call.1} parent=1 // loop_exit
      _
    %143 = vsyncpa [#allocation3], 1
    %s144 = scalar_lea.sflag [#allocation3], 1
    %145 = vsyncpa %s144, 1
    %146 = vsyncpa [#allocation4], 1
    %s147 = scalar_lea.sflag [#allocation4], 1
    %148 = vsyncpa %s147, 1

// kernel: _lambda_.9
$region0: #{_lambda_.9}
  #allocation0 [shape = 'u32[]', space=smem, size = 0x4, offset = 0x4, fixed_abs, tag = 'smem constant byte address 0x4 - core index']
  #allocation1 [shape = 'u32[144,128]{1,0:T(1,128)}', space=vmem, size = 0x12000, scoped, tag = 'internal scratch']
  %s0 = inlined_call_operand.vmem [shape: f32[2,5,32], index: 0, kind: input, shape index: {}]
  %s1 = inlined_call_operand.vmem [shape: f32[1,32], index: 1, kind: input, shape index: {}]
  %s2 = inlined_call_operand.vmem [shape: f32[1,32], index: 2, kind: input, shape index: {}, may-alias: {2,6,7,8}]
  %s3 = inlined_call_operand.vmem [shape: bf16[32,32], index: 3, kind: input, shape index: {}]
  %s4 = inlined_call_operand.vmem [shape: bf16[32,32], index: 4, kind: input, shape index: {}]
  %s5 = inlined_call_operand.vmem [shape: bf16[32,32], index: 5, kind: input, shape index: {}]
  %s6 = inlined_call_operand.vmem [shape: f32[1,32], index: 6, kind: input, shape index: {}, may-alias: {2,6,7,8}]
  %s7 = inlined_call_operand.vmem [shape: f32[1,32], index: 7, kind: input, shape index: {}, may-alias: {2,6,7,8}]
  %s8 = inlined_call_operand.vmem [shape: f32[1,32], index: 8, kind: input, shape index: {}, may-alias: {2,6,7,8}]
  %s9 = inlined_call_operand.vmem [shape: bf16[2,5,32], index: 9, kind: output, shape index: {}]
  %s10 = sld [smem:[#allocation0]]
  $region69: #{_lambda_.9} parent=0
    _
  %s12 = ssub.s32 1, %s10
  %s13 = scalar_select 0, %s12, %s10
  loop: start=0, step=1, limit=4
  $region2: #{_lambda_.9} parent=0 // loop_pre_header
    _
  $region3: #{_lambda_.9} parent=0 // loop_header
    %s15 = sphi 0, %s19
    %p16 = scmp.ge.s32.totalorder %s15, 4
    %s25 = sphi 0, %s27
    %s28 = sphi 0, %s25
    %s29 = sphi 0, %s28
    %s45 = sphi 0, %s29
    %s49 = sphi 0, %s49
    %s51 = sphi 0, %s49
    %s52 = sphi 0, %s51
    %s66 = sphi 0, %s52
    %s70 = sphi 0, %s70
    %s72 = sphi 0, %s70
    %s73 = sphi 0, %s72
    %s87 = sphi 0, %s73
    %s91 = sphi 0, %s91
    %s93 = sphi 0, %s91
    %s94 = sphi 0, %s93
    %s108 = sphi 0, %s94
    %s112 = sphi 0, %s112
    %s114 = sphi 0, %s112
    %s115 = sphi 0, %s114
    %s129 = sphi 0, %s115
    %s133 = sphi 0, %s133
    %s135 = sphi 0, %s133
    %s136 = sphi 0, %s135
    %s150 = sphi 0, %s136
    %s154 = sphi 0, %s154
    %s156 = sphi 0, %s154
    %s157 = sphi 0, %s156
    %s171 = sphi 0, %s157
    %s175 = sphi 0, %s175
    %s177 = sphi 0, %s175
    %s178 = sphi 0, %s177
    %s192 = sphi 0, %s178
    %s196 = sphi 0, %s196
    %s198 = sphi 0, %s196
    %s199 = sphi 0, %s198
    %s213 = sphi 0, %s199
    %s219 = sphi 0, %s221
    %s222 = sphi 0, %s219
    %s223 = sphi 0, %s222
    %s239 = sphi 0, %s223
  $region4: #{_lambda_.9} parent=0 // loop_header_branch
    %18 = sbr.rel (%p16) target = $region8
  $region5: #{_lambda_.9} parent=0 // loop_body
    %s20 = ssub.s32 %s15, 1
    %s21 = ssub.s32 %s15, 2
    %s22 = sadd.s32 %s15, 1
    %s23 = ssub.s32 %s15, %s22
    %p24 = scmp.eq.s32.totalorder %s23, 0
    %s26 = sadd.s32 %s25, 1
    %s27 = scalar_select %p24, %s25, %s26
    %p30 = pneg %p24
    %p31 = scmp.eq.s32.totalorder %s15, 1
    %p32 = por %p30, %p31
    %p33 = scmp.ne.s32.totalorder %s25, %s28
    %p34 = scmp.eq.s32.totalorder %s15, 0
    %p35 = por %p33, %p34
    %p36 = scmp.ne.s32.totalorder %s25, %s28
    %p37 = scmp.eq.s32.totalorder %s20, 1
    %p38 = por %p36, %p37
    %p39 = scmp.ne.s32.totalorder %s28, %s29
    %p40 = scmp.eq.s32.totalorder %s20, 0
    %p41 = por %p39, %p40
    %p42 = scmp.ne.s32.totalorder %s28, %s29
    %p43 = scmp.eq.s32.totalorder %s21, 1
    %p44 = por %p42, %p43
    %p46 = scmp.ne.s32.totalorder %s29, %s45
    %p47 = scmp.eq.s32.totalorder %s21, 0
    %p48 = por %p46, %p47
    %s50 = sadd.s32 %s49, 1
    %p53 = scmp.eq.s32.totalorder %s15, 1
    %p54 = scmp.ne.s32.totalorder %s49, %s51
    %p55 = scmp.eq.s32.totalorder %s15, 0
    %p56 = por %p54, %p55
    %p57 = scmp.ne.s32.totalorder %s49, %s51
    %p58 = scmp.eq.s32.totalorder %s20, 1
    %p59 = por %p57, %p58
    %p60 = scmp.ne.s32.totalorder %s51, %s52
    %p61 = scmp.eq.s32.totalorder %s20, 0
    %p62 = por %p60, %p61
    %p63 = scmp.ne.s32.totalorder %s51, %s52
    %p64 = scmp.eq.s32.totalorder %s21, 1
    %p65 = por %p63, %p64
    %p67 = scmp.ne.s32.totalorder %s52, %s66
    %p68 = scmp.eq.s32.totalorder %s21, 0
    %p69 = por %p67, %p68
    %s71 = sadd.s32 %s70, 1
    %p74 = scmp.eq.s32.totalorder %s15, 1
    %p75 = scmp.ne.s32.totalorder %s70, %s72
    %p76 = scmp.eq.s32.totalorder %s15, 0
    %p77 = por %p75, %p76
    %p78 = scmp.ne.s32.totalorder %s70, %s72
    %p79 = scmp.eq.s32.totalorder %s20, 1
    %p80 = por %p78, %p79
    %p81 = scmp.ne.s32.totalorder %s72, %s73
    %p82 = scmp.eq.s32.totalorder %s20, 0
    %p83 = por %p81, %p82
    %p84 = scmp.ne.s32.totalorder %s72, %s73
    %p85 = scmp.eq.s32.totalorder %s21, 1
    %p86 = por %p84, %p85
    %p88 = scmp.ne.s32.totalorder %s73, %s87
    %p89 = scmp.eq.s32.totalorder %s21, 0
    %p90 = por %p88, %p89
    %s92 = sadd.s32 %s91, 1
    %p95 = scmp.eq.s32.totalorder %s15, 1
    %p96 = scmp.ne.s32.totalorder %s91, %s93
    %p97 = scmp.eq.s32.totalorder %s15, 0
    %p98 = por %p96, %p97
    %p99 = scmp.ne.s32.totalorder %s91, %s93
    %p100 = scmp.eq.s32.totalorder %s20, 1
    %p101 = por %p99, %p100
    %p102 = scmp.ne.s32.totalorder %s93, %s94
    %p103 = scmp.eq.s32.totalorder %s20, 0
    %p104 = por %p102, %p103
    %p105 = scmp.ne.s32.totalorder %s93, %s94
    %p106 = scmp.eq.s32.totalorder %s21, 1
    %p107 = por %p105, %p106
    %p109 = scmp.ne.s32.totalorder %s94, %s108
    %p110 = scmp.eq.s32.totalorder %s21, 0
    %p111 = por %p109, %p110
    %s113 = sadd.s32 %s112, 1
    %p116 = scmp.eq.s32.totalorder %s15, 1
    %p117 = scmp.ne.s32.totalorder %s112, %s114
    %p118 = scmp.eq.s32.totalorder %s15, 0
    %p119 = por %p117, %p118
    %p120 = scmp.ne.s32.totalorder %s112, %s114
    %p121 = scmp.eq.s32.totalorder %s20, 1
    %p122 = por %p120, %p121
    %p123 = scmp.ne.s32.totalorder %s114, %s115
    %p124 = scmp.eq.s32.totalorder %s20, 0
    %p125 = por %p123, %p124
    %p126 = scmp.ne.s32.totalorder %s114, %s115
    %p127 = scmp.eq.s32.totalorder %s21, 1
    %p128 = por %p126, %p127
    %p130 = scmp.ne.s32.totalorder %s115, %s129
    %p131 = scmp.eq.s32.totalorder %s21, 0
    %p132 = por %p130, %p131
    %s134 = sadd.s32 %s133, 1
    %p137 = scmp.eq.s32.totalorder %s15, 1
    %p138 = scmp.ne.s32.totalorder %s133, %s135
    %p139 = scmp.eq.s32.totalorder %s15, 0
    %p140 = por %p138, %p139
    %p141 = scmp.ne.s32.totalorder %s133, %s135
    %p142 = scmp.eq.s32.totalorder %s20, 1
    %p143 = por %p141, %p142
    %p144 = scmp.ne.s32.totalorder %s135, %s136
    %p145 = scmp.eq.s32.totalorder %s20, 0
    %p146 = por %p144, %p145
    %p147 = scmp.ne.s32.totalorder %s135, %s136
    %p148 = scmp.eq.s32.totalorder %s21, 1
    %p149 = por %p147, %p148
    %p151 = scmp.ne.s32.totalorder %s136, %s150
    %p152 = scmp.eq.s32.totalorder %s21, 0
    %p153 = por %p151, %p152
    %s155 = sadd.s32 %s154, 1
    %p158 = scmp.eq.s32.totalorder %s15, 1
    %p159 = scmp.ne.s32.totalorder %s154, %s156
    %p160 = scmp.eq.s32.totalorder %s15, 0
    %p161 = por %p159, %p160
    %p162 = scmp.ne.s32.totalorder %s154, %s156
    %p163 = scmp.eq.s32.totalorder %s20, 1
    %p164 = por %p162, %p163
    %p165 = scmp.ne.s32.totalorder %s156, %s157
    %p166 = scmp.eq.s32.totalorder %s20, 0
    %p167 = por %p165, %p166
    %p168 = scmp.ne.s32.totalorder %s156, %s157
    %p169 = scmp.eq.s32.totalorder %s21, 1
    %p170 = por %p168, %p169
    %p172 = scmp.ne.s32.totalorder %s157, %s171
    %p173 = scmp.eq.s32.totalorder %s21, 0
    %p174 = por %p172, %p173
    %s176 = sadd.s32 %s175, 1
    %p179 = scmp.eq.s32.totalorder %s15, 1
    %p180 = scmp.ne.s32.totalorder %s175, %s177
    %p181 = scmp.eq.s32.totalorder %s15, 0
    %p182 = por %p180, %p181
    %p183 = scmp.ne.s32.totalorder %s175, %s177
    %p184 = scmp.eq.s32.totalorder %s20, 1
    %p185 = por %p183, %p184
    %p186 = scmp.ne.s32.totalorder %s177, %s178
    %p187 = scmp.eq.s32.totalorder %s20, 0
    %p188 = por %p186, %p187
    %p189 = scmp.ne.s32.totalorder %s177, %s178
    %p190 = scmp.eq.s32.totalorder %s21, 1
    %p191 = por %p189, %p190
    %p193 = scmp.ne.s32.totalorder %s178, %s192
    %p194 = scmp.eq.s32.totalorder %s21, 0
    %p195 = por %p193, %p194
    %s197 = sadd.s32 %s196, 1
    %p200 = scmp.eq.s32.totalorder %s15, 1
    %p201 = scmp.ne.s32.totalorder %s196, %s198
    %p202 = scmp.eq.s32.totalorder %s15, 0
    %p203 = por %p201, %p202
    %p204 = scmp.ne.s32.totalorder %s196, %s198
    %p205 = scmp.eq.s32.totalorder %s20, 1
    %p206 = por %p204, %p205
    %p207 = scmp.ne.s32.totalorder %s198, %s199
    %p208 = scmp.eq.s32.totalorder %s20, 0
    %p209 = por %p207, %p208
    %p210 = scmp.ne.s32.totalorder %s198, %s199
    %p211 = scmp.eq.s32.totalorder %s21, 1
    %p212 = por %p210, %p211
    %p214 = scmp.ne.s32.totalorder %s199, %s213
    %p215 = scmp.eq.s32.totalorder %s21, 0
    %p216 = por %p214, %p215
    %s217 = ssub.s32 %s15, %s22
    %p218 = scmp.eq.s32.totalorder %s217, 0
    %s220 = sadd.s32 %s219, 1
    %s221 = scalar_select %p218, %s219, %s220
    %p224 = pneg %p218
    %p225 = scmp.eq.s32.totalorder %s15, 1
    %p226 = por %p224, %p225
    %p227 = scmp.ne.s32.totalorder %s219, %s222
    %p228 = scmp.eq.s32.totalorder %s15, 0
    %p229 = por %p227, %p228
    %p230 = scmp.ne.s32.totalorder %s219, %s222
    %p231 = scmp.eq.s32.totalorder %s20, 1
    %p232 = por %p230, %p231
    %p233 = scmp.ne.s32.totalorder %s222, %s223
    %p234 = scmp.eq.s32.totalorder %s20, 0
    %p235 = por %p233, %p234
    %p236 = scmp.ne.s32.totalorder %s222, %s223
    %p237 = scmp.eq.s32.totalorder %s21, 1
    %p238 = por %p236, %p237
    %p240 = scmp.ne.s32.totalorder %s223, %s239
    %p241 = scmp.eq.s32.totalorder %s21, 0
    %p242 = por %p240, %p241
    %p243 = scmp.le.s32.totalorder 1, %s15
    %p244 = scmp.lt.s32.totalorder %s15, 3
    %p245 = pnand %p243, %p244
    %p246 = pneg %p245
    // Predicated region
    $region9: #{_lambda_.9} parent=5 // pred_check
      _
    $region10: #{_lambda_.9} parent=5 // pred_check_branch
      %248 = sbr.rel (%p245) target = $region12
    $region11: #{_lambda_.9} parent=5 // pred_region
      %s249 = ssub.s32 %s15, 1
      // Predicated region
      $region13: #{_lambda_.9} parent=11 // pred_check
        %p250 = pneg %p62
      $region14: #{_lambda_.9} parent=11 // pred_check_branch
        %252 = sbr.rel (%p250) target = $region16
      $region15: #{_lambda_.9} parent=11 // pred_region
        _
      $region16: #{_lambda_.9} parent=11 // pred_fallthru
        _
      // Predicated region
      $region17: #{_lambda_.9} parent=11 // pred_check
        %p253 = pneg %p83
      $region18: #{_lambda_.9} parent=11 // pred_check_branch
        %255 = sbr.rel (%p253) target = $region20
      $region19: #{_lambda_.9} parent=11 // pred_region
        _
      $region20: #{_lambda_.9} parent=11 // pred_fallthru
        _
      // Predicated region
      $region21: #{_lambda_.9} parent=11 // pred_check
        %p256 = pneg %p104
      $region22: #{_lambda_.9} parent=11 // pred_check_branch
        %258 = sbr.rel (%p256) target = $region24
      $region23: #{_lambda_.9} parent=11 // pred_region
        _
      $region24: #{_lambda_.9} parent=11 // pred_fallthru
        _
      // Predicated region
      $region25: #{_lambda_.9} parent=11 // pred_check
        %p259 = pneg %p125
      $region26: #{_lambda_.9} parent=11 // pred_check_branch
        %261 = sbr.rel (%p259) target = $region28
      $region27: #{_lambda_.9} parent=11 // pred_region
        _
      $region28: #{_lambda_.9} parent=11 // pred_fallthru
        _
      // Predicated region
      $region29: #{_lambda_.9} parent=11 // pred_check
        %p262 = pneg %p146
      $region30: #{_lambda_.9} parent=11 // pred_check_branch
        %264 = sbr.rel (%p262) target = $region32
      $region31: #{_lambda_.9} parent=11 // pred_region
        _
      $region32: #{_lambda_.9} parent=11 // pred_fallthru
        _
      // Predicated region
      $region33: #{_lambda_.9} parent=11 // pred_check
        %p265 = pneg %p167
      $region34: #{_lambda_.9} parent=11 // pred_check_branch
        %267 = sbr.rel (%p265) target = $region36
      $region35: #{_lambda_.9} parent=11 // pred_region
        _
      $region36: #{_lambda_.9} parent=11 // pred_fallthru
        _
      // Predicated region
      $region37: #{_lambda_.9} parent=11 // pred_check
        %p268 = pneg %p188
      $region38: #{_lambda_.9} parent=11 // pred_check_branch
        %270 = sbr.rel (%p268) target = $region40
      $region39: #{_lambda_.9} parent=11 // pred_region
        _
      $region40: #{_lambda_.9} parent=11 // pred_fallthru
        _
      // Predicated region
      $region41: #{_lambda_.9} parent=11 // pred_check
        %p271 = pneg %p209
      $region42: #{_lambda_.9} parent=11 // pred_check_branch
        %273 = sbr.rel (%p271) target = $region44
      $region43: #{_lambda_.9} parent=11 // pred_region
        _
      $region44: #{_lambda_.9} parent=11 // pred_fallthru
        _
    $region12: #{_lambda_.9} parent=5 // pred_fallthru
      _
    %p274 = scmp.lt.s32.totalorder %s15, 2
    // Predicated region
    $region45: #{_lambda_.9} parent=5 // pred_check
      %p275 = pneg %p274
    $region46: #{_lambda_.9} parent=5 // pred_check_branch
      %277 = sbr.rel (%p275) target = $region48
    $region47: #{_lambda_.9} parent=5 // pred_region
      // Predicated region
      $region49: #{_lambda_.9} parent=47 // pred_check
        %p278 = pneg %p35
      $region50: #{_lambda_.9} parent=47 // pred_check_branch
        %280 = sbr.rel (%p278) target = $region52
      $region51: #{_lambda_.9} parent=47 // pred_region
        %p281 = scmp.lt.s32.totalorder %s15, 1
        %s282 = scalar_select %p281, %s15, 1
        %s283 = smul.addr %s282, 8
        %s284 = scalar_lea.vmem %s0, %s283
      $region52: #{_lambda_.9} parent=47 // pred_fallthru
        _
    $region48: #{_lambda_.9} parent=5 // pred_fallthru
      _
    %p285 = scmp.le.s32.totalorder 1, %s15
    %p286 = scmp.lt.s32.totalorder %s15, 3
    %p287 = pnand %p285, %p286
    %p288 = pneg %p287
    // Predicated region
    $region53: #{_lambda_.9} parent=5 // pred_check
      _
    $region54: #{_lambda_.9} parent=5 // pred_check_branch
      %290 = sbr.rel (%p287) target = $region56
    $region55: #{_lambda_.9} parent=5 // pred_region
      %s291 = ssub.s32 %s15, 1
      %p292 = scmp.lt.s32.totalorder %s20, 1
      %s293 = scalar_select %p292, %s20, 1
      %s294 = smul.addr %s293, 8
      %s295 = scalar_lea.vmem %s0, %s294
      %p296 = pneg %p41
      %p297 = pneg %p38
      %p298 = pneg %p62
      %p299 = pneg %p59
      %p300 = pneg %p83
      %p301 = pneg %p80
      %p302 = pneg %p104
      %p303 = pneg %p101
      %p304 = pneg %p125
      %p305 = pneg %p122
      %p306 = pneg %p146
      %p307 = pneg %p143
      %p308 = pneg %p167
      %p309 = pneg %p164
      %p310 = pneg %p188
      %p311 = pneg %p185
      %p312 = pneg %p209
      %p313 = pneg %p206
      %p314 = pneg %p235
      %p315 = pneg %p232
      %p316 = scmp.lt.s32.totalorder %s20, 1
      %s317 = scalar_select %p316, %s20, 1
      %s318 = smul.addr %s317, 4
      %s319 = scalar_lea.vmem %s9, %s318
      %p320 = scmp.lt.s32.totalorder %s20, 1
      %s321 = scalar_select %p320, %s20, 1
      %s322 = smul.addr %s321, 8
      %s323 = scalar_lea.vmem %s0, %s322
      %p324 = scmp.lt.s32.totalorder %s20, 1
      %s325 = scalar_select %p324, %s20, 1
      %s326 = smul.addr %s325, 4
      %s327 = scalar_lea.vmem %s9, %s326
      %v329 = vld [vmem:[%s323] sm:$0x1f]
      %v330 = vld [vmem:[%s1] sm:$0x1]
      %v331 = vld [vmem:[%s2] sm:$0x1]
      %vm332 = vcmask 258048
      %v333 = vsel %vm332, %v329, 0.0
      %334 = vadd.xlane.f32.xlu0 %v333
      %v335 = vpop.xlane.xlu0 %334
      %v336 = vrcp.pop 32.0
      %v337 = vmul.f32 %v335, %v336
      %v338 = vsub.f32 %v329, %v337
      %v339 = vmul.f32 %v338, %v338
      %v340 = vsel %vm332, %v339, 0.0
      %341 = vadd.xlane.f32.xlu0 %v340
      %v342 = vpop.xlane.xlu0 %341
      %v343 = vmul.f32 %v342, %v336
      %v344 = vadd.f32 %v343, 1e-05
      %v345 = vrsqrt.pop %v344
      %v346 = vmul.f32 %v338, %v345
      %v348 = vlaneseq
      %v349 = vshrl.u32 %v348, 7
      %v350 = vsub.s32 0, %v349
      %v351 = vrot.slane %v330, %v350
      %v353 = vmul.f32 %v346, %v351
      %v355 = vlaneseq
      %v356 = vshrl.u32 %v355, 7
      %v357 = vsub.s32 0, %v356
      %v358 = vrot.slane %v331, %v357
      %v360 = vadd.f32 %v353, %v358
      %v361 = vpack.c.bf16 %v360, %v360
      %v362 = vld [vmem:[%s3] sm:$0xf]
      %v363 = vld [vmem:[%s3 + $0x4] sm:$0xf]
      %v364 = vld [vmem:[%s3 + $0x8] sm:$0xf]
      %v365 = vld [vmem:[%s3 + $0xc] sm:$0xf]
      %v366 = vld [vmem:[%s6] sm:$0x1]
      %v368 = vlaneseq
      %v369 = vshrl.u32 %v368, 7
      %v370 = vsub.s32 0, %v369
      %v371 = vrot.slane %v366, %v370
      %v377 = vunpack.c.l.b16 %v362
      %v378 = vunpack.c.l.b16 %v363
      %v379 = vunpack.c.l.b16 %v364
      %v380 = vunpack.c.l.b16 %v365
      %v381 = vpack.c.b16 %v378, %v377
      %v382 = vpack.c.b16 %v380, %v379
      %vm385 = vcmask 261120
      %v387 = vsel %vm385, %v361, 0
      %389 = vmatprep.subr.bf16.mxu0 0
      %390 = vmatpush1.bf16.msra.mxu0 0
      %391 = vmatprep.subr.bf16.mxu0 0
      %392 = vmatpush1.bf16.msra.mxu0 0
      %393 = vmatprep.subr.bf16.mxu0 0
      %394 = vmatpush1.bf16.msra.mxu0 0
      %395 = vmatprep.subr.bf16.mxu0 0
      %396 = vmatpush1.bf16.msra.mxu0 0
      %397 = vmatprep.subr.bf16.mxu0 0
      %398 = vmatpush1.bf16.msra.mxu0 0
      %399 = vmatprep.subr.bf16.mxu0 0
      %400 = vmatpush1.bf16.msra.mxu0 0
      %401 = vmatprep.subr.bf16.mxu0 0
      %402 = vmatpush1.bf16.msra.mxu0 %v382
      %403 = vmatprep.subr.bf16.mxu0 0
      %404 = vmatpush1.bf16.msra.mxu0 %v381
      %405 = vmatprep.subr.bf16.mxu0 0
      %406 = vmatpush2.bf16.msra.mxu0 0
      %407 = vmatprep.subr.bf16.mxu0 0
      %408 = vmatpush2.bf16.msra.mxu0 0
      %409 = vmatprep.subr.bf16.mxu0 0
      %410 = vmatpush2.bf16.msra.mxu0 0
      %411 = vmatprep.subr.bf16.mxu0 0
      %412 = vmatpush2.bf16.msra.mxu0 0
      %413 = vmatprep.subr.bf16.mxu0 0
      %414 = vmatpush2.bf16.msra.mxu0 0
      %415 = vmatprep.subr.bf16.mxu0 0
      %416 = vmatpush2.bf16.msra.mxu0 0
      %417 = vmatprep.subr.bf16.mxu0 0
      %418 = vmatpush2.bf16.msra.mxu0 0
      %419 = vmatprep.subr.bf16.mxu0 0
      %420 = vmatpush2.bf16.msra.mxu0 0
      %421 = vmatprep.mubr.bf16.mxu0 0
      %422 = vmatmul.mubr.bf16.gmra.mxu0 %v387
      %v423 = vpop.f32.mrf.mxu0
      %v424 = vadd.f32 %v371, %v423
      %v425 = vpop.f32.mrf.mxu0
      %v426 = vpop.f32.mrf.mxu0
      %v427 = vpop.f32.mrf.mxu0
      %428 = vdwg.mxu0
      %v429 = vld [vmem:[%s4] sm:$0xf]
      %v430 = vld [vmem:[%s4 + $0x4] sm:$0xf]
      %v431 = vld [vmem:[%s4 + $0x8] sm:$0xf]
      %v432 = vld [vmem:[%s4 + $0xc] sm:$0xf]
      %v433 = vld [vmem:[%s7] sm:$0x1]
      %v435 = vlaneseq
      %v436 = vshrl.u32 %v435, 7
      %v437 = vsub.s32 0, %v436
      %v438 = vrot.slane %v433, %v437
      %v444 = vunpack.c.l.b16 %v429
      %v445 = vunpack.c.l.b16 %v430
      %v446 = vunpack.c.l.b16 %v431
      %v447 = vunpack.c.l.b16 %v432
      %v448 = vpack.c.b16 %v445, %v444
      %v449 = vpack.c.b16 %v447, %v446
      %452 = vmatprep.subr.bf16.mxu0 0
      %453 = vmatpush1.bf16.msra.mxu0 0
      %454 = vmatprep.subr.bf16.mxu0 0
      %455 = vmatpush1.bf16.msra.mxu0 0
      %456 = vmatprep.subr.bf16.mxu0 0
      %457 = vmatpush1.bf16.msra.mxu0 0
      %458 = vmatprep.subr.bf16.mxu0 0
      %459 = vmatpush1.bf16.msra.mxu0 0
      %460 = vmatprep.subr.bf16.mxu0 0
      %461 = vmatpush1.bf16.msra.mxu0 0
      %462 = vmatprep.subr.bf16.mxu0 0
      %463 = vmatpush1.bf16.msra.mxu0 0
      %464 = vmatprep.subr.bf16.mxu0 0
      %465 = vmatpush1.bf16.msra.mxu0 %v449
      %466 = vmatprep.subr.bf16.mxu0 0
      %467 = vmatpush1.bf16.msra.mxu0 %v448
      %468 = vmatprep.subr.bf16.mxu0 0
      %469 = vmatpush2.bf16.msra.mxu0 0
      %470 = vmatprep.subr.bf16.mxu0 0
      %471 = vmatpush2.bf16.msra.mxu0 0
      %472 = vmatprep.subr.bf16.mxu0 0
      %473 = vmatpush2.bf16.msra.mxu0 0
      %474 = vmatprep.subr.bf16.mxu0 0
      %475 = vmatpush2.bf16.msra.mxu0 0
      %476 = vmatprep.subr.bf16.mxu0 0
      %477 = vmatpush2.bf16.msra.mxu0 0
      %478 = vmatprep.subr.bf16.mxu0 0
      %479 = vmatpush2.bf16.msra.mxu0 0
      %480 = vmatprep.subr.bf16.mxu0 0
      %481 = vmatpush2.bf16.msra.mxu0 0
      %482 = vmatprep.subr.bf16.mxu0 0
      %483 = vmatpush2.bf16.msra.mxu0 0
      %484 = vmatprep.mubr.bf16.mxu0 0
      %485 = vmatmul.mubr.bf16.gmra.mxu0 %v387
      %v486 = vpop.f32.mrf.mxu0
      %v487 = vadd.f32 %v438, %v486
      %v488 = vpop.f32.mrf.mxu0
      %v489 = vpop.f32.mrf.mxu0
      %v490 = vpop.f32.mrf.mxu0
      %491 = vdwg.mxu0
      %v492 = vld [vmem:[%s5] sm:$0xf]
      %v493 = vld [vmem:[%s5 + $0x4] sm:$0xf]
      %v494 = vld [vmem:[%s5 + $0x8] sm:$0xf]
      %v495 = vld [vmem:[%s5 + $0xc] sm:$0xf]
      %v496 = vld [vmem:[%s8] sm:$0x1]
      %v498 = vlaneseq
      %v499 = vshrl.u32 %v498, 7
      %v500 = vsub.s32 0, %v499
      %v501 = vrot.slane %v496, %v500
      %v507 = vunpack.c.l.b16 %v492
      %v508 = vunpack.c.l.b16 %v493
      %v509 = vunpack.c.l.b16 %v494
      %v510 = vunpack.c.l.b16 %v495
      %v511 = vpack.c.b16 %v508, %v507
      %v512 = vpack.c.b16 %v510, %v509
      %515 = vmatprep.subr.bf16.mxu0 0
      %516 = vmatpush1.bf16.msra.mxu0 0
      %517 = vmatprep.subr.bf16.mxu0 0
      %518 = vmatpush1.bf16.msra.mxu0 0
      %519 = vmatprep.subr.bf16.mxu0 0
      %520 = vmatpush1.bf16.msra.mxu0 0
      %521 = vmatprep.subr.bf16.mxu0 0
      %522 = vmatpush1.bf16.msra.mxu0 0
      %523 = vmatprep.subr.bf16.mxu0 0
      %524 = vmatpush1.bf16.msra.mxu0 0
      %525 = vmatprep.subr.bf16.mxu0 0
      %526 = vmatpush1.bf16.msra.mxu0 0
      %527 = vmatprep.subr.bf16.mxu0 0
      %528 = vmatpush1.bf16.msra.mxu0 %v512
      %529 = vmatprep.subr.bf16.mxu0 0
      %530 = vmatpush1.bf16.msra.mxu0 %v511
      %531 = vmatprep.subr.bf16.mxu0 0
      %532 = vmatpush2.bf16.msra.mxu0 0
      %533 = vmatprep.subr.bf16.mxu0 0
      %534 = vmatpush2.bf16.msra.mxu0 0
      %535 = vmatprep.subr.bf16.mxu0 0
      %536 = vmatpush2.bf16.msra.mxu0 0
      %537 = vmatprep.subr.bf16.mxu0 0
      %538 = vmatpush2.bf16.msra.mxu0 0
      %539 = vmatprep.subr.bf16.mxu0 0
      %540 = vmatpush2.bf16.msra.mxu0 0
      %541 = vmatprep.subr.bf16.mxu0 0
      %542 = vmatpush2.bf16.msra.mxu0 0
      %543 = vmatprep.subr.bf16.mxu0 0
      %544 = vmatpush2.bf16.msra.mxu0 0
      %545 = vmatprep.subr.bf16.mxu0 0
      %546 = vmatpush2.bf16.msra.mxu0 0
      %547 = vmatprep.mubr.bf16.mxu0 0
      %548 = vmatmul.mubr.bf16.gmra.mxu0 %v387
      %v549 = vpop.f32.mrf.mxu0
      %v550 = vadd.f32 %v501, %v549
      %v551 = vpop.f32.mrf.mxu0
      %v552 = vpop.f32.mrf.mxu0
      %v553 = vpop.f32.mrf.mxu0
      %554 = vdwg.mxu0
      %v555 = vpack.c.bf16 %v424, %v424
      %v556 = vpack.c.bf16 %v487, %v487
      %v558 = vsel %vm385, %v555, 0
      %v561 = vsel %vm385, %v556, 0
      %563 = vmatprep.subr.bf16.mxu0 0
      %564 = vmatpush1.bf16.xpose.msra.mxu0 0
      %565 = vmatprep.subr.bf16.mxu0 0
      %566 = vmatpush1.bf16.xpose.msra.mxu0 0
      %567 = vmatprep.subr.bf16.mxu0 0
      %568 = vmatpush1.bf16.xpose.msra.mxu0 0
      %569 = vmatprep.subr.bf16.mxu0 0
      %570 = vmatpush1.bf16.xpose.msra.mxu0 0
      %571 = vmatprep.subr.bf16.mxu0 0
      %572 = vmatpush1.bf16.xpose.msra.mxu0 0
      %573 = vmatprep.subr.bf16.mxu0 0
      %574 = vmatpush1.bf16.xpose.msra.mxu0 0
      %575 = vmatprep.subr.bf16.mxu0 0
      %576 = vmatpush1.bf16.xpose.msra.mxu0 0
      %577 = vmatprep.subr.bf16.mxu0 0
      %578 = vmatpush1.bf16.xpose.msra.mxu0 %v561
      %579 = vmatprep.subr.bf16.mxu0 0
      %580 = vmatpush2.bf16.xpose.msra.mxu0 0
      %581 = vmatprep.subr.bf16.mxu0 0
      %582 = vmatpush2.bf16.xpose.msra.mxu0 0
      %583 = vmatprep.subr.bf16.mxu0 0
      %584 = vmatpush2.bf16.xpose.msra.mxu0 0
      %585 = vmatprep.subr.bf16.mxu0 0
      %586 = vmatpush2.bf16.xpose.msra.mxu0 0
      %587 = vmatprep.subr.bf16.mxu0 0
      %588 = vmatpush2.bf16.xpose.msra.mxu0 0
      %589 = vmatprep.subr.bf16.mxu0 0
      %590 = vmatpush2.bf16.xpose.msra.mxu0 0
      %591 = vmatprep.subr.bf16.mxu0 0
      %592 = vmatpush2.bf16.xpose.msra.mxu0 0
      %593 = vmatprep.subr.bf16.mxu0 0
      %594 = vmatpush2.bf16.xpose.msra.mxu0 0
      %595 = vmatprep.mubr.bf16.mxu0 0
      %596 = vmatmul.mubr.bf16.gmra.mxu0 %v558
      %v597 = vpop.f32.mrf.mxu0
      %v598 = vadd.f32 0.0, %v597
      %v599 = vpop.f32.mrf.mxu0
      %v600 = vpop.f32.mrf.mxu0
      %v601 = vpop.f32.mrf.mxu0
      %602 = vdwg.mxu0
      %vm603 = vcmask 36864
      %v604 = vsel %vm603, %v598, -inf
      %605 = vmax.xlane.f32.xlu0 %v604
      %v606 = vpop.xlane.xlu0 %605
      %v607 = vsub.f32 %v598, %v606
      %v608 = vmul.f32 %v607, 1.442695
      %v609 = vpow.pop %v608
      %v610 = vsel %vm603, %v609, 0.0
      %611 = vadd.xlane.f32.xlu0 %v610
      %v612 = vpop.xlane.xlu0 %611
      %v613 = vrcp.pop %v612
      %v614 = vmul.f32 %v609, %v613
      %v615 = vpack.c.bf16 %v614, %v614
      %v616 = vpack.c.bf16 %v550, %v550
      %vm617 = vcmask 39936
      %v619 = vsel %vm617, %v615, 0
      %vm621 = vcmask 1041408
      %vm622 = vcmask 1042432
      %v623 = vsel %vm621, 4294967295, 65535
      %v624 = vsel %vm622, %v623, 0
      %v626 = vand.u32 %v616, %v624
      %628 = vmatprep.subr.bf16.mxu0 0
      %629 = vmatpush1.bf16.msra.mxu0 0
      %630 = vmatprep.subr.bf16.mxu0 0
      %631 = vmatpush1.bf16.msra.mxu0 0
      %632 = vmatprep.subr.bf16.mxu0 0
      %633 = vmatpush1.bf16.msra.mxu0 0
      %634 = vmatprep.subr.bf16.mxu0 0
      %635 = vmatpush1.bf16.msra.mxu0 0
      %636 = vmatprep.subr.bf16.mxu0 0
      %637 = vmatpush1.bf16.msra.mxu0 0
      %638 = vmatprep.subr.bf16.mxu0 0
      %639 = vmatpush1.bf16.msra.mxu0 0
      %640 = vmatprep.subr.bf16.mxu0 0
      %641 = vmatpush1.bf16.msra.mxu0 0
      %642 = vmatprep.subr.bf16.mxu0 0
      %643 = vmatpush1.bf16.msra.mxu0 %v626
      %644 = vmatprep.subr.bf16.mxu0 0
      %645 = vmatpush2.bf16.msra.mxu0 0
      %646 = vmatprep.subr.bf16.mxu0 0
      %647 = vmatpush2.bf16.msra.mxu0 0
      %648 = vmatprep.subr.bf16.mxu0 0
      %649 = vmatpush2.bf16.msra.mxu0 0
      %650 = vmatprep.subr.bf16.mxu0 0
      %651 = vmatpush2.bf16.msra.mxu0 0
      %652 = vmatprep.subr.bf16.mxu0 0
      %653 = vmatpush2.bf16.msra.mxu0 0
      %654 = vmatprep.subr.bf16.mxu0 0
      %655 = vmatpush2.bf16.msra.mxu0 0
      %656 = vmatprep.subr.bf16.mxu0 0
      %657 = vmatpush2.bf16.msra.mxu0 0
      %658 = vmatprep.subr.bf16.mxu0 0
      %659 = vmatpush2.bf16.msra.mxu0 0
      %660 = vmatprep.mubr.bf16.mxu0 0
      %661 = vmatmul.mubr.bf16.gmra.mxu0 %v619
      %v662 = vpop.f32.mrf.mxu0
      %v663 = vadd.f32 0.0, %v662
      %v664 = vpop.f32.mrf.mxu0
      %v665 = vpop.f32.mrf.mxu0
      %v666 = vpop.f32.mrf.mxu0
      %667 = vdwg.mxu0
      %v668 = vpack.c.bf16 %v663, %v663
      %vm669 = vcmask 256000
      %vm670 = vsmask.f32 2304
      %vm671 = vmand %vm669, %vm670
      %v672 = vld [vmem:[%s327] sm:$0x7]
      %v673 = vsel %vm671, %v668, %v672
      %674 = vst [vmem:[%s327] sm:$0x7] %v673
      %p675 = scmp.lt.s32.totalorder %s20, 1
      %s676 = scalar_select %p675, %s20, 1
      %s677 = smul.addr %s676, 4
      %s678 = scalar_lea.vmem %s9, %s677
      // Predicated region
      $region57: #{_lambda_.9} parent=55 // pred_check
        %p679 = pneg %p232
      $region58: #{_lambda_.9} parent=55 // pred_check_branch
        %681 = sbr.rel (%p679) target = $region60
      $region59: #{_lambda_.9} parent=55 // pred_region
        _
      $region60: #{_lambda_.9} parent=55 // pred_fallthru
        _
    $region56: #{_lambda_.9} parent=5 // pred_fallthru
      _
    %p682 = scmp.le.s32.totalorder 2, %s15
    // Predicated region
    $region61: #{_lambda_.9} parent=5 // pred_check
      %p683 = pneg %p682
    $region62: #{_lambda_.9} parent=5 // pred_check_branch
      %685 = sbr.rel (%p683) target = $region64
    $region63: #{_lambda_.9} parent=5 // pred_region
      %s686 = ssub.s32 %s15, 2
      // Predicated region
      $region65: #{_lambda_.9} parent=63 // pred_check
        %p687 = pneg %p238
      $region66: #{_lambda_.9} parent=63 // pred_check_branch
        %689 = sbr.rel (%p687) target = $region68
      $region67: #{_lambda_.9} parent=63 // pred_region
        %p690 = scmp.lt.s32.totalorder %s21, 1
        %s691 = scalar_select %p690, %s21, 1
        %s692 = smul.addr %s691, 4
        %s693 = scalar_lea.vmem %s9, %s692
      $region68: #{_lambda_.9} parent=63 // pred_fallthru
        _
    $region64: #{_lambda_.9} parent=5 // pred_fallthru
      _
  $region6: #{_lambda_.9} parent=0 // loop_footer
    %s19 = sadd.s32 1, %s15
  $region7: #{_lambda_.9} parent=0 // loop_footer_branch
    %14 = sbr.rel target = $region3
  $region8: #{_lambda_.9} parent=0 // loop_exit
    _

// kernel: _lambda_.8
$region0: #{_lambda_.8}
  #allocation0 [shape = 'u32[]', space=smem, size = 0x4, offset = 0x4, fixed_abs, tag = 'smem constant byte address 0x4 - core index']
  #allocation1 [shape = 'u32[144,128]{1,0:T(1,128)}', space=vmem, size = 0x12000, scoped, tag = 'internal scratch']
  %s0 = inlined_call_operand.vmem [shape: f32[2,5,32], index: 0, kind: input, shape index: {}]
  %s1 = inlined_call_operand.vmem [shape: f32[5,32], index: 1, kind: input, shape index: {}]
  %s2 = inlined_call_operand.vmem [shape: f32[1,32], index: 2, kind: input, shape index: {}]
  %s3 = inlined_call_operand.vmem [shape: f32[1,32], index: 3, kind: input, shape index: {}]
  %s4 = inlined_call_operand.vmem [shape: f32[2,5,32], index: 4, kind: output, shape index: {}]
  %s5 = sld [smem:[#allocation0]]
  $region49: #{_lambda_.8} parent=0
    _
  %s7 = ssub.s32 1, %s5
  %s8 = scalar_select 0, %s7, %s5
  loop: start=0, step=1, limit=4
  $region2: #{_lambda_.8} parent=0 // loop_pre_header
    _
  $region3: #{_lambda_.8} parent=0 // loop_header
    %s10 = sphi 0, %s14
    %p11 = scmp.ge.s32.totalorder %s10, 4
    %s20 = sphi 0, %s22
    %s23 = sphi 0, %s20
    %s24 = sphi 0, %s23
    %s40 = sphi 0, %s24
    %s44 = sphi 0, %s44
    %s46 = sphi 0, %s44
    %s47 = sphi 0, %s46
    %s61 = sphi 0, %s47
    %s65 = sphi 0, %s65
    %s67 = sphi 0, %s65
    %s68 = sphi 0, %s67
    %s82 = sphi 0, %s68
    %s86 = sphi 0, %s86
    %s88 = sphi 0, %s86
    %s89 = sphi 0, %s88
    %s103 = sphi 0, %s89
    %s109 = sphi 0, %s111
    %s112 = sphi 0, %s109
    %s113 = sphi 0, %s112
    %s129 = sphi 0, %s113
  $region4: #{_lambda_.8} parent=0 // loop_header_branch
    %13 = sbr.rel (%p11) target = $region8
  $region5: #{_lambda_.8} parent=0 // loop_body
    %s15 = ssub.s32 %s10, 1
    %s16 = ssub.s32 %s10, 2
    %s17 = sadd.s32 %s10, 1
    %s18 = ssub.s32 %s10, %s17
    %p19 = scmp.eq.s32.totalorder %s18, 0
    %s21 = sadd.s32 %s20, 1
    %s22 = scalar_select %p19, %s20, %s21
    %p25 = pneg %p19
    %p26 = scmp.eq.s32.totalorder %s10, 1
    %p27 = por %p25, %p26
    %p28 = scmp.ne.s32.totalorder %s20, %s23
    %p29 = scmp.eq.s32.totalorder %s10, 0
    %p30 = por %p28, %p29
    %p31 = scmp.ne.s32.totalorder %s20, %s23
    %p32 = scmp.eq.s32.totalorder %s15, 1
    %p33 = por %p31, %p32
    %p34 = scmp.ne.s32.totalorder %s23, %s24
    %p35 = scmp.eq.s32.totalorder %s15, 0
    %p36 = por %p34, %p35
    %p37 = scmp.ne.s32.totalorder %s23, %s24
    %p38 = scmp.eq.s32.totalorder %s16, 1
    %p39 = por %p37, %p38
    %p41 = scmp.ne.s32.totalorder %s24, %s40
    %p42 = scmp.eq.s32.totalorder %s16, 0
    %p43 = por %p41, %p42
    %s45 = sadd.s32 %s44, 1
    %p48 = scmp.eq.s32.totalorder %s10, 1
    %p49 = scmp.ne.s32.totalorder %s44, %s46
    %p50 = scmp.eq.s32.totalorder %s10, 0
    %p51 = por %p49, %p50
    %p52 = scmp.ne.s32.totalorder %s44, %s46
    %p53 = scmp.eq.s32.totalorder %s15, 1
    %p54 = por %p52, %p53
    %p55 = scmp.ne.s32.totalorder %s46, %s47
    %p56 = scmp.eq.s32.totalorder %s15, 0
    %p57 = por %p55, %p56
    %p58 = scmp.ne.s32.totalorder %s46, %s47
    %p59 = scmp.eq.s32.totalorder %s16, 1
    %p60 = por %p58, %p59
    %p62 = scmp.ne.s32.totalorder %s47, %s61
    %p63 = scmp.eq.s32.totalorder %s16, 0
    %p64 = por %p62, %p63
    %s66 = sadd.s32 %s65, 1
    %p69 = scmp.eq.s32.totalorder %s10, 1
    %p70 = scmp.ne.s32.totalorder %s65, %s67
    %p71 = scmp.eq.s32.totalorder %s10, 0
    %p72 = por %p70, %p71
    %p73 = scmp.ne.s32.totalorder %s65, %s67
    %p74 = scmp.eq.s32.totalorder %s15, 1
    %p75 = por %p73, %p74
    %p76 = scmp.ne.s32.totalorder %s67, %s68
    %p77 = scmp.eq.s32.totalorder %s15, 0
    %p78 = por %p76, %p77
    %p79 = scmp.ne.s32.totalorder %s67, %s68
    %p80 = scmp.eq.s32.totalorder %s16, 1
    %p81 = por %p79, %p80
    %p83 = scmp.ne.s32.totalorder %s68, %s82
    %p84 = scmp.eq.s32.totalorder %s16, 0
    %p85 = por %p83, %p84
    %s87 = sadd.s32 %s86, 1
    %p90 = scmp.eq.s32.totalorder %s10, 1
    %p91 = scmp.ne.s32.totalorder %s86, %s88
    %p92 = scmp.eq.s32.totalorder %s10, 0
    %p93 = por %p91, %p92
    %p94 = scmp.ne.s32.totalorder %s86, %s88
    %p95 = scmp.eq.s32.totalorder %s15, 1
    %p96 = por %p94, %p95
    %p97 = scmp.ne.s32.totalorder %s88, %s89
    %p98 = scmp.eq.s32.totalorder %s15, 0
    %p99 = por %p97, %p98
    %p100 = scmp.ne.s32.totalorder %s88, %s89
    %p101 = scmp.eq.s32.totalorder %s16, 1
    %p102 = por %p100, %p101
    %p104 = scmp.ne.s32.totalorder %s89, %s103
    %p105 = scmp.eq.s32.totalorder %s16, 0
    %p106 = por %p104, %p105
    %s107 = ssub.s32 %s10, %s17
    %p108 = scmp.eq.s32.totalorder %s107, 0
    %s110 = sadd.s32 %s109, 1
    %s111 = scalar_select %p108, %s109, %s110
    %p114 = pneg %p108
    %p115 = scmp.eq.s32.totalorder %s10, 1
    %p116 = por %p114, %p115
    %p117 = scmp.ne.s32.totalorder %s109, %s112
    %p118 = scmp.eq.s32.totalorder %s10, 0
    %p119 = por %p117, %p118
    %p120 = scmp.ne.s32.totalorder %s109, %s112
    %p121 = scmp.eq.s32.totalorder %s15, 1
    %p122 = por %p120, %p121
    %p123 = scmp.ne.s32.totalorder %s112, %s113
    %p124 = scmp.eq.s32.totalorder %s15, 0
    %p125 = por %p123, %p124
    %p126 = scmp.ne.s32.totalorder %s112, %s113
    %p127 = scmp.eq.s32.totalorder %s16, 1
    %p128 = por %p126, %p127
    %p130 = scmp.ne.s32.totalorder %s113, %s129
    %p131 = scmp.eq.s32.totalorder %s16, 0
    %p132 = por %p130, %p131
    %p133 = scmp.le.s32.totalorder 1, %s10
    %p134 = scmp.lt.s32.totalorder %s10, 3
    %p135 = pnand %p133, %p134
    %p136 = pneg %p135
    // Predicated region
    $region9: #{_lambda_.8} parent=5 // pred_check
      _
    $region10: #{_lambda_.8} parent=5 // pred_check_branch
      %138 = sbr.rel (%p135) target = $region12
    $region11: #{_lambda_.8} parent=5 // pred_region
      %s139 = ssub.s32 %s10, 1
      // Predicated region
      $region13: #{_lambda_.8} parent=11 // pred_check
        %p140 = pneg %p57
      $region14: #{_lambda_.8} parent=11 // pred_check_branch
        %142 = sbr.rel (%p140) target = $region16
      $region15: #{_lambda_.8} parent=11 // pred_region
        _
      $region16: #{_lambda_.8} parent=11 // pred_fallthru
        _
      // Predicated region
      $region17: #{_lambda_.8} parent=11 // pred_check
        %p143 = pneg %p78
      $region18: #{_lambda_.8} parent=11 // pred_check_branch
        %145 = sbr.rel (%p143) target = $region20
      $region19: #{_lambda_.8} parent=11 // pred_region
        _
      $region20: #{_lambda_.8} parent=11 // pred_fallthru
        _
      // Predicated region
      $region21: #{_lambda_.8} parent=11 // pred_check
        %p146 = pneg %p99
      $region22: #{_lambda_.8} parent=11 // pred_check_branch
        %148 = sbr.rel (%p146) target = $region24
      $region23: #{_lambda_.8} parent=11 // pred_region
        _
      $region24: #{_lambda_.8} parent=11 // pred_fallthru
        _
    $region12: #{_lambda_.8} parent=5 // pred_fallthru
      _
    %p149 = scmp.lt.s32.totalorder %s10, 2
    // Predicated region
    $region25: #{_lambda_.8} parent=5 // pred_check
      %p150 = pneg %p149
    $region26: #{_lambda_.8} parent=5 // pred_check_branch
      %152 = sbr.rel (%p150) target = $region28
    $region27: #{_lambda_.8} parent=5 // pred_region
      // Predicated region
      $region29: #{_lambda_.8} parent=27 // pred_check
        %p153 = pneg %p30
      $region30: #{_lambda_.8} parent=27 // pred_check_branch
        %155 = sbr.rel (%p153) target = $region32
      $region31: #{_lambda_.8} parent=27 // pred_region
        %p156 = scmp.lt.s32.totalorder %s10, 1
        %s157 = scalar_select %p156, %s10, 1
        %s158 = smul.addr %s157, 8
        %s159 = scalar_lea.vmem %s0, %s158
      $region32: #{_lambda_.8} parent=27 // pred_fallthru
        _
    $region28: #{_lambda_.8} parent=5 // pred_fallthru
      _
    %p160 = scmp.le.s32.totalorder 1, %s10
    %p161 = scmp.lt.s32.totalorder %s10, 3
    %p162 = pnand %p160, %p161
    %p163 = pneg %p162
    // Predicated region
    $region33: #{_lambda_.8} parent=5 // pred_check
      _
    $region34: #{_lambda_.8} parent=5 // pred_check_branch
      %165 = sbr.rel (%p162) target = $region36
    $region35: #{_lambda_.8} parent=5 // pred_region
      %s166 = ssub.s32 %s10, 1
      %p167 = scmp.lt.s32.totalorder %s15, 1
      %s168 = scalar_select %p167, %s15, 1
      %s169 = smul.addr %s168, 8
      %s170 = scalar_lea.vmem %s0, %s169
      %p171 = pneg %p36
      %p172 = pneg %p33
      %p173 = pneg %p57
      %p174 = pneg %p54
      %p175 = pneg %p78
      %p176 = pneg %p75
      %p177 = pneg %p99
      %p178 = pneg %p96
      %p179 = pneg %p125
      %p180 = pneg %p122
      %p181 = scmp.lt.s32.totalorder %s15, 1
      %s182 = scalar_select %p181, %s15, 1
      %s183 = smul.addr %s182, 8
      %s184 = scalar_lea.vmem %s4, %s183
      %p185 = scmp.lt.s32.totalorder %s15, 1
      %s186 = scalar_select %p185, %s15, 1
      %s187 = smul.addr %s186, 8
      %s188 = scalar_lea.vmem %s0, %s187
      %p189 = scmp.lt.s32.totalorder %s15, 1
      %s190 = scalar_select %p189, %s15, 1
      %s191 = smul.addr %s190, 8
      %s192 = scalar_lea.vmem %s4, %s191
      %v193 = vld [vmem:[%s188] sm:$0x1f]
      %v194 = vld [vmem:[%s1] sm:$0x1f]
      %v195 = vadd.f32 %v193, %v194
      %v196 = vld [vmem:[%s2] sm:$0x1]
      %v197 = vld [vmem:[%s3] sm:$0x1]
      %vm198 = vcmask 258048
      %v199 = vsel %vm198, %v195, 0.0
      %200 = vadd.xlane.f32.xlu0 %v199
      %v201 = vpop.xlane.xlu0 %200
      %v202 = vrcp.pop 32.0
      %v203 = vmul.f32 %v201, %v202
      %v204 = vsub.f32 %v195, %v203
      %v205 = vmul.f32 %v204, %v204
      %v206 = vsel %vm198, %v205, 0.0
      %207 = vadd.xlane.f32.xlu0 %v206
      %v208 = vpop.xlane.xlu0 %207
      %v209 = vmul.f32 %v208, %v202
      %v210 = vadd.f32 %v209, 1e-05
      %v211 = vrsqrt.pop %v210
      %v212 = vmul.f32 %v204, %v211
      %v214 = vlaneseq
      %v215 = vshrl.u32 %v214, 7
      %v216 = vsub.s32 0, %v215
      %v217 = vrot.slane %v196, %v216
      %v219 = vmul.f32 %v212, %v217
      %v221 = vlaneseq
      %v222 = vshrl.u32 %v221, 7
      %v223 = vsub.s32 0, %v222
      %v224 = vrot.slane %v197, %v223
      %v226 = vadd.f32 %v219, %v224
      %227 = vst.msk [vmem:[%s192] sm:$0x1f] %vm198, %v226
      %p228 = scmp.lt.s32.totalorder %s15, 1
      %s229 = scalar_select %p228, %s15, 1
      %s230 = smul.addr %s229, 8
      %s231 = scalar_lea.vmem %s4, %s230
      // Predicated region
      $region37: #{_lambda_.8} parent=35 // pred_check
        %p232 = pneg %p122
      $region38: #{_lambda_.8} parent=35 // pred_check_branch
        %234 = sbr.rel (%p232) target = $region40
      $region39: #{_lambda_.8} parent=35 // pred_region
        _
      $region40: #{_lambda_.8} parent=35 // pred_fallthru
        _
    $region36: #{_lambda_.8} parent=5 // pred_fallthru
      _
    %p235 = scmp.le.s32.totalorder 2, %s10
    // Predicated region
    $region41: #{_lambda_.8} parent=5 // pred_check
      %p236 = pneg %p235
    $region42: #{_lambda_.8} parent=5 // pred_check_branch
      %238 = sbr.rel (%p236) target = $region44
    $region43: #{_lambda_.8} parent=5 // pred_region
      %s239 = ssub.s32 %s10, 2
      // Predicated region
      $region45: #{_lambda_.8} parent=43 // pred_check
        %p240 = pneg %p128
      $region46: #{_lambda_.8} parent=43 // pred_check_branch
        %242 = sbr.rel (%p240) target = $region48
      $region47: #{_lambda_.8} parent=43 // pred_region
        %p243 = scmp.lt.s32.totalorder %s16, 1
        %s244 = scalar_select %p243, %s16, 1
        %s245 = smul.addr %s244, 8
        %s246 = scalar_lea.vmem %s4, %s245
      $region48: #{_lambda_.8} parent=43 // pred_fallthru
        _
    $region44: #{_lambda_.8} parent=5 // pred_fallthru
      _
  $region6: #{_lambda_.8} parent=0 // loop_footer
    %s14 = sadd.s32 1, %s10
  $region7: #{_lambda_.8} parent=0 // loop_footer_branch
    %9 = sbr.rel target = $region3
  $region8: #{_lambda_.8} parent=0 // loop_exit
    _

// kernel: _lambda_.7
$region0: #{_lambda_.7}
  #allocation0 [shape = 'u32[]', space=smem, size = 0x4, offset = 0x4, fixed_abs, tag = 'smem constant byte address 0x4 - core index']
  #allocation1 [shape = 'u32[144,128]{1,0:T(1,128)}', space=vmem, size = 0x12000, scoped, tag = 'internal scratch']
  %s0 = inlined_call_operand.vmem [shape: bf16[2,4,256], index: 0, kind: input, shape index: {}]
  %s1 = inlined_call_operand.vmem [shape: bf16[256,32], index: 1, kind: input, shape index: {}]
  %s2 = inlined_call_operand.vmem [shape: f32[2,4,32], index: 2, kind: output, shape index: {}]
  %s3 = sld [smem:[#allocation0]]
  $region41: #{_lambda_.7} parent=0
    _
  %s5 = ssub.s32 1, %s3
  %s6 = scalar_select 0, %s5, %s3
  loop: start=0, step=1, limit=4
  $region2: #{_lambda_.7} parent=0 // loop_pre_header
    _
  $region3: #{_lambda_.7} parent=0 // loop_header
    %s8 = sphi 0, %s12
    %p9 = scmp.ge.s32.totalorder %s8, 4
    %s18 = sphi 0, %s20
    %s21 = sphi 0, %s18
    %s22 = sphi 0, %s21
    %s38 = sphi 0, %s22
    %s42 = sphi 0, %s42
    %s44 = sphi 0, %s42
    %s45 = sphi 0, %s44
    %s59 = sphi 0, %s45
    %s65 = sphi 0, %s67
    %s68 = sphi 0, %s65
    %s69 = sphi 0, %s68
    %s85 = sphi 0, %s69
  $region4: #{_lambda_.7} parent=0 // loop_header_branch
    %11 = sbr.rel (%p9) target = $region8
  $region5: #{_lambda_.7} parent=0 // loop_body
    %s13 = ssub.s32 %s8, 1
    %s14 = ssub.s32 %s8, 2
    %s15 = sadd.s32 %s8, 1
    %s16 = ssub.s32 %s8, %s15
    %p17 = scmp.eq.s32.totalorder %s16, 0
    %s19 = sadd.s32 %s18, 1
    %s20 = scalar_select %p17, %s18, %s19
    %p23 = pneg %p17
    %p24 = scmp.eq.s32.totalorder %s8, 1
    %p25 = por %p23, %p24
    %p26 = scmp.ne.s32.totalorder %s18, %s21
    %p27 = scmp.eq.s32.totalorder %s8, 0
    %p28 = por %p26, %p27
    %p29 = scmp.ne.s32.totalorder %s18, %s21
    %p30 = scmp.eq.s32.totalorder %s13, 1
    %p31 = por %p29, %p30
    %p32 = scmp.ne.s32.totalorder %s21, %s22
    %p33 = scmp.eq.s32.totalorder %s13, 0
    %p34 = por %p32, %p33
    %p35 = scmp.ne.s32.totalorder %s21, %s22
    %p36 = scmp.eq.s32.totalorder %s14, 1
    %p37 = por %p35, %p36
    %p39 = scmp.ne.s32.totalorder %s22, %s38
    %p40 = scmp.eq.s32.totalorder %s14, 0
    %p41 = por %p39, %p40
    %s43 = sadd.s32 %s42, 1
    %p46 = scmp.eq.s32.totalorder %s8, 1
    %p47 = scmp.ne.s32.totalorder %s42, %s44
    %p48 = scmp.eq.s32.totalorder %s8, 0
    %p49 = por %p47, %p48
    %p50 = scmp.ne.s32.totalorder %s42, %s44
    %p51 = scmp.eq.s32.totalorder %s13, 1
    %p52 = por %p50, %p51
    %p53 = scmp.ne.s32.totalorder %s44, %s45
    %p54 = scmp.eq.s32.totalorder %s13, 0
    %p55 = por %p53, %p54
    %p56 = scmp.ne.s32.totalorder %s44, %s45
    %p57 = scmp.eq.s32.totalorder %s14, 1
    %p58 = por %p56, %p57
    %p60 = scmp.ne.s32.totalorder %s45, %s59
    %p61 = scmp.eq.s32.totalorder %s14, 0
    %p62 = por %p60, %p61
    %s63 = ssub.s32 %s8, %s15
    %p64 = scmp.eq.s32.totalorder %s63, 0
    %s66 = sadd.s32 %s65, 1
    %s67 = scalar_select %p64, %s65, %s66
    %p70 = pneg %p64
    %p71 = scmp.eq.s32.totalorder %s8, 1
    %p72 = por %p70, %p71
    %p73 = scmp.ne.s32.totalorder %s65, %s68
    %p74 = scmp.eq.s32.totalorder %s8, 0
    %p75 = por %p73, %p74
    %p76 = scmp.ne.s32.totalorder %s65, %s68
    %p77 = scmp.eq.s32.totalorder %s13, 1
    %p78 = por %p76, %p77
    %p79 = scmp.ne.s32.totalorder %s68, %s69
    %p80 = scmp.eq.s32.totalorder %s13, 0
    %p81 = por %p79, %p80
    %p82 = scmp.ne.s32.totalorder %s68, %s69
    %p83 = scmp.eq.s32.totalorder %s14, 1
    %p84 = por %p82, %p83
    %p86 = scmp.ne.s32.totalorder %s69, %s85
    %p87 = scmp.eq.s32.totalorder %s14, 0
    %p88 = por %p86, %p87
    %p89 = scmp.le.s32.totalorder 1, %s8
    %p90 = scmp.lt.s32.totalorder %s8, 3
    %p91 = pnand %p89, %p90
    %p92 = pneg %p91
    // Predicated region
    $region9: #{_lambda_.7} parent=5 // pred_check
      _
    $region10: #{_lambda_.7} parent=5 // pred_check_branch
      %94 = sbr.rel (%p91) target = $region12
    $region11: #{_lambda_.7} parent=5 // pred_region
      %s95 = ssub.s32 %s8, 1
      // Predicated region
      $region13: #{_lambda_.7} parent=11 // pred_check
        %p96 = pneg %p55
      $region14: #{_lambda_.7} parent=11 // pred_check_branch
        %98 = sbr.rel (%p96) target = $region16
      $region15: #{_lambda_.7} parent=11 // pred_region
        _
      $region16: #{_lambda_.7} parent=11 // pred_fallthru
        _
    $region12: #{_lambda_.7} parent=5 // pred_fallthru
      _
    %p99 = scmp.lt.s32.totalorder %s8, 2
    // Predicated region
    $region17: #{_lambda_.7} parent=5 // pred_check
      %p100 = pneg %p99
    $region18: #{_lambda_.7} parent=5 // pred_check_branch
      %102 = sbr.rel (%p100) target = $region20
    $region19: #{_lambda_.7} parent=5 // pred_region
      // Predicated region
      $region21: #{_lambda_.7} parent=19 // pred_check
        %p103 = pneg %p28
      $region22: #{_lambda_.7} parent=19 // pred_check_branch
        %105 = sbr.rel (%p103) target = $region24
      $region23: #{_lambda_.7} parent=19 // pred_region
        %p106 = scmp.lt.s32.totalorder %s8, 1
        %s107 = scalar_select %p106, %s8, 1
        %s108 = smul.addr %s107, 2
        %s109 = smul.addr %s108, 2
        %s110 = scalar_lea.vmem %s0, %s109
      $region24: #{_lambda_.7} parent=19 // pred_fallthru
        _
    $region20: #{_lambda_.7} parent=5 // pred_fallthru
      _
    %p111 = scmp.le.s32.totalorder 1, %s8
    %p112 = scmp.lt.s32.totalorder %s8, 3
    %p113 = pnand %p111, %p112
    %p114 = pneg %p113
    // Predicated region
    $region25: #{_lambda_.7} parent=5 // pred_check
      _
    $region26: #{_lambda_.7} parent=5 // pred_check_branch
      %116 = sbr.rel (%p113) target = $region28
    $region27: #{_lambda_.7} parent=5 // pred_region
      %s117 = ssub.s32 %s8, 1
      %p118 = scmp.lt.s32.totalorder %s13, 1
      %s119 = scalar_select %p118, %s13, 1
      %s120 = smul.addr %s119, 2
      %s121 = smul.addr %s120, 2
      %s122 = scalar_lea.vmem %s0, %s121
      %p123 = pneg %p34
      %p124 = pneg %p31
      %p125 = pneg %p55
      %p126 = pneg %p52
      %p127 = pneg %p81
      %p128 = pneg %p78
      %p129 = scmp.lt.s32.totalorder %s13, 1
      %s130 = scalar_select %p129, %s13, 1
      %s131 = smul.addr %s130, 4
      %s132 = scalar_lea.vmem %s2, %s131
      %p133 = scmp.lt.s32.totalorder %s13, 1
      %s134 = scalar_select %p133, %s13, 1
      %s135 = smul.addr %s134, 2
      %s136 = smul.addr %s135, 2
      %s137 = scalar_lea.vmem %s0, %s136
      %p138 = scmp.lt.s32.totalorder %s13, 1
      %s139 = scalar_select %p138, %s13, 1
      %s140 = smul.addr %s139, 4
      %s141 = scalar_lea.vmem %s2, %s140
      %v143 = vld [vmem:[%s137] sm:$0xf]
      %v144 = vld [vmem:[%s1] sm:$0xf]
      %v145 = vld [vmem:[%s1 + $0x4] sm:$0xf]
      %v146 = vld [vmem:[%s1 + $0x8] sm:$0xf]
      %v147 = vld [vmem:[%s1 + $0xc] sm:$0xf]
      %v148 = vld [vmem:[%s1 + $0x10] sm:$0xf]
      %v149 = vld [vmem:[%s1 + $0x14] sm:$0xf]
      %v150 = vld [vmem:[%s1 + $0x18] sm:$0xf]
      %v151 = vld [vmem:[%s1 + $0x1c] sm:$0xf]
      %v152 = vld [vmem:[%s1 + $0x20] sm:$0xf]
      %v153 = vld [vmem:[%s1 + $0x24] sm:$0xf]
      %v154 = vld [vmem:[%s1 + $0x28] sm:$0xf]
      %v155 = vld [vmem:[%s1 + $0x2c] sm:$0xf]
      %v156 = vld [vmem:[%s1 + $0x30] sm:$0xf]
      %v157 = vld [vmem:[%s1 + $0x34] sm:$0xf]
      %v158 = vld [vmem:[%s1 + $0x38] sm:$0xf]
      %v159 = vld [vmem:[%s1 + $0x3c] sm:$0xf]
      %v160 = vld [vmem:[%s1 + $0x40] sm:$0xf]
      %v161 = vld [vmem:[%s1 + $0x44] sm:$0xf]
      %v162 = vld [vmem:[%s1 + $0x48] sm:$0xf]
      %v163 = vld [vmem:[%s1 + $0x4c] sm:$0xf]
      %v164 = vld [vmem:[%s1 + $0x50] sm:$0xf]
      %v165 = vld [vmem:[%s1 + $0x54] sm:$0xf]
      %v166 = vld [vmem:[%s1 + $0x58] sm:$0xf]
      %v167 = vld [vmem:[%s1 + $0x5c] sm:$0xf]
      %v168 = vld [vmem:[%s1 + $0x60] sm:$0xf]
      %v169 = vld [vmem:[%s1 + $0x64] sm:$0xf]
      %v170 = vld [vmem:[%s1 + $0x68] sm:$0xf]
      %v171 = vld [vmem:[%s1 + $0x6c] sm:$0xf]
      %v172 = vld [vmem:[%s1 + $0x70] sm:$0xf]
      %v173 = vld [vmem:[%s1 + $0x74] sm:$0xf]
      %v174 = vld [vmem:[%s1 + $0x78] sm:$0xf]
      %v175 = vld [vmem:[%s1 + $0x7c] sm:$0xf]
      %v178 = vunpack.c.l.s4 1983009808
      %v179 = vunpack.c.0.s8 %v178
      %v180 = vlaneseq
      %v181 = vshrl.u32 %v180, 7
      %v182 = vsub.s32 %v179, %v181
      %v183 = vrot.slane %v143, %v182
      %v184 = vcombine.high %v183, %v183
      %v219 = vunpack.c.l.b16 %v144
      %v220 = vunpack.c.l.b16 %v145
      %v221 = vunpack.c.l.b16 %v146
      %v222 = vunpack.c.l.b16 %v147
      %v223 = vunpack.c.l.b16 %v148
      %v224 = vunpack.c.l.b16 %v149
      %v225 = vunpack.c.l.b16 %v150
      %v226 = vunpack.c.l.b16 %v151
      %v227 = vunpack.c.l.b16 %v152
      %v228 = vunpack.c.l.b16 %v153
      %v229 = vunpack.c.l.b16 %v154
      %v230 = vunpack.c.l.b16 %v155
      %v231 = vunpack.c.l.b16 %v156
      %v232 = vunpack.c.l.b16 %v157
      %v233 = vunpack.c.l.b16 %v158
      %v234 = vunpack.c.l.b16 %v159
      %v235 = vunpack.c.l.b16 %v160
      %v236 = vunpack.c.l.b16 %v161
      %v237 = vunpack.c.l.b16 %v162
      %v238 = vunpack.c.l.b16 %v163
      %v239 = vunpack.c.l.b16 %v164
      %v240 = vunpack.c.l.b16 %v165
      %v241 = vunpack.c.l.b16 %v166
      %v242 = vunpack.c.l.b16 %v167
      %v243 = vunpack.c.l.b16 %v168
      %v244 = vunpack.c.l.b16 %v169
      %v245 = vunpack.c.l.b16 %v170
      %v246 = vunpack.c.l.b16 %v171
      %v247 = vunpack.c.l.b16 %v172
      %v248 = vunpack.c.l.b16 %v173
      %v249 = vunpack.c.l.b16 %v174
      %v250 = vunpack.c.l.b16 %v175
      %v251 = vpack.c.b16 %v220, %v219
      %v252 = vpack.c.b16 %v222, %v221
      %v253 = vpack.c.b16 %v224, %v223
      %v254 = vpack.c.b16 %v226, %v225
      %v255 = vpack.c.b16 %v228, %v227
      %v256 = vpack.c.b16 %v230, %v229
      %v257 = vpack.c.b16 %v232, %v231
      %v258 = vpack.c.b16 %v234, %v233
      %v259 = vpack.c.b16 %v236, %v235
      %v260 = vpack.c.b16 %v238, %v237
      %v261 = vpack.c.b16 %v240, %v239
      %v262 = vpack.c.b16 %v242, %v241
      %v263 = vpack.c.b16 %v244, %v243
      %v264 = vpack.c.b16 %v246, %v245
      %v265 = vpack.c.b16 %v248, %v247
      %v266 = vpack.c.b16 %v250, %v249
      %283 = vmatprep.subr.bf16.mxu0 0
      %284 = vmatpush1.bf16.msra.mxu0 %v258
      %285 = vmatprep.subr.bf16.mxu0 0
      %286 = vmatpush1.bf16.msra.mxu0 %v257
      %287 = vmatprep.subr.bf16.mxu0 0
      %288 = vmatpush1.bf16.msra.mxu0 %v256
      %289 = vmatprep.subr.bf16.mxu0 0
      %290 = vmatpush1.bf16.msra.mxu0 %v255
      %291 = vmatprep.subr.bf16.mxu0 0
      %292 = vmatpush1.bf16.msra.mxu0 %v254
      %293 = vmatprep.subr.bf16.mxu0 0
      %294 = vmatpush1.bf16.msra.mxu0 %v253
      %295 = vmatprep.subr.bf16.mxu0 0
      %296 = vmatpush1.bf16.msra.mxu0 %v252
      %297 = vmatprep.subr.bf16.mxu0 0
      %298 = vmatpush1.bf16.msra.mxu0 %v251
      %299 = vmatprep.subr.bf16.mxu0 0
      %300 = vmatpush2.bf16.msra.mxu0 %v266
      %301 = vmatprep.subr.bf16.mxu0 0
      %302 = vmatpush2.bf16.msra.mxu0 %v265
      %303 = vmatprep.subr.bf16.mxu0 0
      %304 = vmatpush2.bf16.msra.mxu0 %v264
      %305 = vmatprep.subr.bf16.mxu0 0
      %306 = vmatpush2.bf16.msra.mxu0 %v263
      %307 = vmatprep.subr.bf16.mxu0 0
      %308 = vmatpush2.bf16.msra.mxu0 %v262
      %309 = vmatprep.subr.bf16.mxu0 0
      %310 = vmatpush2.bf16.msra.mxu0 %v261
      %311 = vmatprep.subr.bf16.mxu0 0
      %312 = vmatpush2.bf16.msra.mxu0 %v260
      %313 = vmatprep.subr.bf16.mxu0 0
      %314 = vmatpush2.bf16.msra.mxu0 %v259
      %315 = vmatprep.mubr.bf16.mxu0 %v184
      %316 = vmatmul.mubr.bf16.gmra.mxu0 %v183
      %v317 = vpop.f32.mrf.mxu0
      %v318 = vadd.f32 0.0, %v317
      %v319 = vpop.f32.mrf.mxu0
      %v320 = vpop.f32.mrf.mxu0
      %v321 = vpop.f32.mrf.mxu0
      %322 = vdwg.mxu0
      %vm323 = vcmask 257024
      %324 = vst.msk [vmem:[%s141] sm:$0xf] %vm323, %v318
      %p325 = scmp.lt.s32.totalorder %s13, 1
      %s326 = scalar_select %p325, %s13, 1
      %s327 = smul.addr %s326, 4
      %s328 = scalar_lea.vmem %s2, %s327
      // Predicated region
      $region29: #{_lambda_.7} parent=27 // pred_check
        %p329 = pneg %p78
      $region30: #{_lambda_.7} parent=27 // pred_check_branch
        %331 = sbr.rel (%p329) target = $region32
      $region31: #{_lambda_.7} parent=27 // pred_region
        _
      $region32: #{_lambda_.7} parent=27 // pred_fallthru
        _
    $region28: #{_lambda_.7} parent=5 // pred_fallthru
      _
    %p332 = scmp.le.s32.totalorder 2, %s8
    // Predicated region
    $region33: #{_lambda_.7} parent=5 // pred_check
      %p333 = pneg %p332
    $region34: #{_lambda_.7} parent=5 // pred_check_branch
      %335 = sbr.rel (%p333) target = $region36
    $region35: #{_lambda_.7} parent=5 // pred_region
      %s336 = ssub.s32 %s8, 2
      // Predicated region
      $region37: #{_lambda_.7} parent=35 // pred_check
        %p337 = pneg %p84
      $region38: #{_lambda_.7} parent=35 // pred_check_branch
        %339 = sbr.rel (%p337) target = $region40
      $region39: #{_lambda_.7} parent=35 // pred_region
        %p340 = scmp.lt.s32.totalorder %s14, 1
        %s341 = scalar_select %p340, %s14, 1
        %s342 = smul.addr %s341, 4
        %s343 = scalar_lea.vmem %s2, %s342
      $region40: #{_lambda_.7} parent=35 // pred_fallthru
        _
    $region36: #{_lambda_.7} parent=5 // pred_fallthru
      _
  $region6: #{_lambda_.7} parent=0 // loop_footer
    %s12 = sadd.s32 1, %s8
  $region7: #{_lambda_.7} parent=0 // loop_footer_branch
    %7 = sbr.rel target = $region3
  $region8: #{_lambda_.7} parent=0 // loop_exit
    _

// kernel: _lambda_.13
$region0: #{_lambda_.13}
  #allocation0 [shape = 'u32[]', space=smem, size = 0x4, offset = 0x4, fixed_abs, tag = 'smem constant byte address 0x4 - core index']
  #allocation1 [shape = 'u32[144,128]{1,0:T(1,128)}', space=vmem, size = 0x12000, scoped, tag = 'internal scratch']
  %s0 = inlined_call_operand.vmem [shape: f32[2,32], index: 0, kind: input, shape index: {}]
  %s1 = inlined_call_operand.vmem [shape: f32[1,32], index: 1, kind: input, shape index: {}]
  %s2 = inlined_call_operand.vmem [shape: f32[1,32], index: 2, kind: input, shape index: {}]
  %s3 = inlined_call_operand.vmem [shape: bf16[32,16], index: 3, kind: input, shape index: {}]
  %s4 = inlined_call_operand.hbm [shape: f32[2,16], index: 4, kind: output, shape index: {}]
  %s5 = sld [smem:[#allocation0]]
  $region26: #{_lambda_.13} parent=0
    _
  %s7 = ssub.s32 1, %s5
  %s8 = scalar_select 0, %s7, %s5
  $region1: #{_lambda_.13} parent=0
    #allocation2 [shape = 'u8[1024]{0}', space=vmem, size = 0x400, scoped, tag = 'output window, operand 0, single buffered']
    #allocation3 [shape = 's32[1]{0}', space=sflag, size = 0x4, scoped, tag = 'scoped memory for _lambda_.13']
    %9 = vsyncpa [#allocation3], 0
    // Predicated region
    $region2: #{_lambda_.13} parent=1 // pred_check
      _
    $region3: #{_lambda_.13} parent=1 // pred_check_branch
      %11 = sbr.rel (0) target = $region5
    $region4: #{_lambda_.13} parent=1 // pred_region
      _
    $region5: #{_lambda_.13} parent=1 // pred_fallthru
      _
    // Predicated region
    $region6: #{_lambda_.13} parent=1 // pred_check
      _
    $region7: #{_lambda_.13} parent=1 // pred_check_branch
      %13 = sbr.rel (0) target = $region9
    $region8: #{_lambda_.13} parent=1 // pred_region
      _
    $region9: #{_lambda_.13} parent=1 // pred_fallthru
      _
    // Predicated region
    $region10: #{_lambda_.13} parent=1 // pred_check
      _
    $region11: #{_lambda_.13} parent=1 // pred_check_branch
      %15 = sbr.rel (0) target = $region13
    $region12: #{_lambda_.13} parent=1 // pred_region
      _
    $region13: #{_lambda_.13} parent=1 // pred_fallthru
      _
    // Predicated region
    $region14: #{_lambda_.13} parent=1 // pred_check
      _
    $region15: #{_lambda_.13} parent=1 // pred_check_branch
      %17 = sbr.rel (0) target = $region17
    $region16: #{_lambda_.13} parent=1 // pred_region
      _
    $region17: #{_lambda_.13} parent=1 // pred_fallthru
      _
    %v19 = vld [vmem:[%s0] sm:$0x3]
    %v20 = vld [vmem:[%s1] sm:$0x1]
    %v21 = vld [vmem:[%s2] sm:$0x1]
    %vm22 = vcmask 254976
    %v23 = vsel %vm22, %v19, 0.0
    %24 = vadd.xlane.f32.xlu0 %v23
    %v25 = vpop.xlane.xlu0 %24
    %v26 = vrcp.pop 32.0
    %v27 = vmul.f32 %v25, %v26
    %v28 = vsub.f32 %v19, %v27
    %v29 = vmul.f32 %v28, %v28
    %v30 = vsel %vm22, %v29, 0.0
    %31 = vadd.xlane.f32.xlu0 %v30
    %v32 = vpop.xlane.xlu0 %31
    %v33 = vmul.f32 %v32, %v26
    %v34 = vadd.f32 %v33, 1e-05
    %v35 = vrsqrt.pop %v34
    %v36 = vmul.f32 %v28, %v35
    %v38 = vlaneseq
    %v39 = vshrl.u32 %v38, 7
    %v40 = vsub.s32 0, %v39
    %v41 = vrot.slane %v20, %v40
    %v43 = vmul.f32 %v36, %v41
    %v45 = vlaneseq
    %v46 = vshrl.u32 %v45, 7
    %v47 = vsub.s32 0, %v46
    %v48 = vrot.slane %v21, %v47
    %v50 = vadd.f32 %v43, %v48
    %v51 = vpack.c.bf16 %v50, %v50
    %v52 = vld [vmem:[%s3] sm:$0xf]
    %v53 = vld [vmem:[%s3 + $0x4] sm:$0xf]
    %v54 = vld [vmem:[%s3 + $0x8] sm:$0xf]
    %v55 = vld [vmem:[%s3 + $0xc] sm:$0xf]
    %v60 = vunpack.c.l.b16 %v52
    %v61 = vunpack.c.l.b16 %v53
    %v62 = vunpack.c.l.b16 %v54
    %v63 = vunpack.c.l.b16 %v55
    %v64 = vpack.c.b16 %v61, %v60
    %v65 = vpack.c.b16 %v63, %v62
    %vm68 = vcmask 261120
    %v70 = vsel %vm68, %v51, 0
    %72 = vmatprep.subr.bf16.mxu0 0
    %73 = vmatpush1.bf16.msra.mxu0 0
    %74 = vmatprep.subr.bf16.mxu0 0
    %75 = vmatpush1.bf16.msra.mxu0 0
    %76 = vmatprep.subr.bf16.mxu0 0
    %77 = vmatpush1.bf16.msra.mxu0 0
    %78 = vmatprep.subr.bf16.mxu0 0
    %79 = vmatpush1.bf16.msra.mxu0 0
    %80 = vmatprep.subr.bf16.mxu0 0
    %81 = vmatpush1.bf16.msra.mxu0 0
    %82 = vmatprep.subr.bf16.mxu0 0
    %83 = vmatpush1.bf16.msra.mxu0 0
    %84 = vmatprep.subr.bf16.mxu0 0
    %85 = vmatpush1.bf16.msra.mxu0 %v65
    %86 = vmatprep.subr.bf16.mxu0 0
    %87 = vmatpush1.bf16.msra.mxu0 %v64
    %88 = vmatprep.subr.bf16.mxu0 0
    %89 = vmatpush2.bf16.msra.mxu0 0
    %90 = vmatprep.subr.bf16.mxu0 0
    %91 = vmatpush2.bf16.msra.mxu0 0
    %92 = vmatprep.subr.bf16.mxu0 0
    %93 = vmatpush2.bf16.msra.mxu0 0
    %94 = vmatprep.subr.bf16.mxu0 0
    %95 = vmatpush2.bf16.msra.mxu0 0
    %96 = vmatprep.subr.bf16.mxu0 0
    %97 = vmatpush2.bf16.msra.mxu0 0
    %98 = vmatprep.subr.bf16.mxu0 0
    %99 = vmatpush2.bf16.msra.mxu0 0
    %100 = vmatprep.subr.bf16.mxu0 0
    %101 = vmatpush2.bf16.msra.mxu0 0
    %102 = vmatprep.subr.bf16.mxu0 0
    %103 = vmatpush2.bf16.msra.mxu0 0
    %104 = vmatprep.mubr.bf16.mxu0 0
    %105 = vmatmul.mubr.bf16.gmra.mxu0 %v70
    %v106 = vpop.f32.mrf.mxu0
    %v107 = vadd.f32 0.0, %v106
    %v108 = vpop.f32.mrf.mxu0
    %v109 = vpop.f32.mrf.mxu0
    %v110 = vpop.f32.mrf.mxu0
    %111 = vdwg.mxu0
    %vm112 = vcmask 123904
    %113 = vst.msk [vmem:[#allocation2] sm:$0x3] %vm112, %v107
    // Predicated region
    $region18: #{_lambda_.13} parent=1 // pred_check
      _
    $region19: #{_lambda_.13} parent=1 // pred_check_branch
      %115 = sbr.rel (0) target = $region21
    $region20: #{_lambda_.13} parent=1 // pred_region
      %s117 = ssub.s32 32, 32
      %118 = vsyncadd [#allocation3], %s117
      %s120 = sshll.u32 [#allocation2], 4
      %s121 = int_to_ptr.vmem [resolvable:$true] %s120
      %123 = dma.vmem_to_hbm [thread:$0]  %s121, 32, %s4, [#allocation3]
    $region21: #{_lambda_.13} parent=1 // pred_fallthru
      _
    // Predicated region
    $region22: #{_lambda_.13} parent=1 // pred_check
      _
    $region23: #{_lambda_.13} parent=1 // pred_check_branch
      %125 = sbr.rel (0) target = $region25
    $region24: #{_lambda_.13} parent=1 // pred_region
      %126 = dma.done [#allocation3], 32
    $region25: #{_lambda_.13} parent=1 // pred_fallthru
      _
    %127 = vsyncpa [#allocation3], 1

// kernel: _lambda_.10
$region0: #{_lambda_.10}
  #allocation0 [shape = 'u32[]', space=smem, size = 0x4, offset = 0x4, fixed_abs, tag = 'smem constant byte address 0x4 - core index']
  #allocation1 [shape = 'u32[144,128]{1,0:T(1,128)}', space=vmem, size = 0x12000, scoped, tag = 'internal scratch']
  #allocation2 [shape = 'f32[5,32]{1,0:T(8,128)}', space=vmem, size = 0x1000, scoped, tag = 'scratch operand']
  #allocation3 [shape = 'bf16[5,32]{1,0:T(8,128)(2,1)}', space=vmem, size = 0x800, scoped, tag = 'scratch operand']
  #allocation4 [shape = 'f32[5,32]{1,0:T(8,128)}', space=vmem, size = 0x1000, scoped, tag = 'scratch operand']
  %s0 = inlined_call_operand.vmem [shape: f32[2,5,32], index: 0, kind: input, shape index: {}]
  %s1 = inlined_call_operand.vmem [shape: bf16[2,5,32], index: 1, kind: input, shape index: {}]
  %s2 = inlined_call_operand.vmem [shape: bf16[32,32], index: 2, kind: input, shape index: {}]
  %s3 = inlined_call_operand.vmem [shape: f32[1,32], index: 3, kind: input, shape index: {}, may-alias: {3,5,9}]
  %s4 = inlined_call_operand.vmem [shape: f32[1,32], index: 4, kind: input, shape index: {}]
  %s5 = inlined_call_operand.vmem [shape: f32[1,32], index: 5, kind: input, shape index: {}, may-alias: {3,5,9}]
  %s6 = inlined_call_operand.vmem [shape: bf16[32,128], index: 6, kind: input, shape index: {}]
  %s7 = inlined_call_operand.vmem [shape: f32[1,128], index: 7, kind: input, shape index: {}]
  %s8 = inlined_call_operand.vmem [shape: bf16[128,32], index: 8, kind: input, shape index: {}]
  %s9 = inlined_call_operand.vmem [shape: f32[1,32], index: 9, kind: input, shape index: {}, may-alias: {3,5,9}]
  %s10 = inlined_call_operand.vmem [shape: f32[2,5,32], index: 10, kind: output, shape index: {}]
  %s11 = sld [smem:[#allocation0]]
  $region81: #{_lambda_.10} parent=0
    _
  %s13 = ssub.s32 1, %s11
  %s14 = scalar_select 0, %s13, %s11
  loop: start=0, step=1, limit=4
  $region2: #{_lambda_.10} parent=0 // loop_pre_header
    _
  $region3: #{_lambda_.10} parent=0 // loop_header
    %s16 = sphi 0, %s20
    %p17 = scmp.ge.s32.totalorder %s16, 4
    %s23 = sphi 0, %s35
    %s24 = sphi 0, %s31
    %s25 = sphi 0, %s23
    %s26 = sphi 0, %s24
    %s27 = sphi 0, %s25
    %s28 = sphi 0, %s26
    %s38 = sphi 0, %s40
    %s41 = sphi 0, %s38
    %s42 = sphi 0, %s41
    %s58 = sphi 0, %s42
    %s64 = sphi 0, %s66
    %s67 = sphi 0, %s64
    %s68 = sphi 0, %s67
    %s84 = sphi 0, %s68
    %s88 = sphi 0, %s88
    %s90 = sphi 0, %s88
    %s91 = sphi 0, %s90
    %s105 = sphi 0, %s91
    %s109 = sphi 0, %s109
    %s111 = sphi 0, %s109
    %s112 = sphi 0, %s111
    %s126 = sphi 0, %s112
    %s130 = sphi 0, %s130
    %s132 = sphi 0, %s130
    %s133 = sphi 0, %s132
    %s147 = sphi 0, %s133
    %s151 = sphi 0, %s151
    %s153 = sphi 0, %s151
    %s154 = sphi 0, %s153
    %s168 = sphi 0, %s154
    %s174 = sphi 0, %s176
    %s177 = sphi 0, %s174
    %s178 = sphi 0, %s177
    %s194 = sphi 0, %s178
    %s200 = sphi 0, %s202
    %s203 = sphi 0, %s200
    %s204 = sphi 0, %s203
    %s220 = sphi 0, %s204
    %s226 = sphi 0, %s228
    %s229 = sphi 0, %s226
    %s230 = sphi 0, %s229
    %s246 = sphi 0, %s230
    %s250 = sphi 0, %s250
    %s252 = sphi 0, %s250
    %s253 = sphi 0, %s252
    %s267 = sphi 0, %s253
    %s273 = sphi 0, %s275
    %s276 = sphi 0, %s273
    %s277 = sphi 0, %s276
    %s293 = sphi 0, %s277
  $region4: #{_lambda_.10} parent=0 // loop_header_branch
    %19 = sbr.rel (%p17) target = $region8
  $region5: #{_lambda_.10} parent=0 // loop_body
    %s21 = ssub.s32 %s16, 1
    %s22 = ssub.s32 %s16, 2
    %s29 = sadd.s32 1, %s24
    %p30 = scmp.ge.s32.totalorder %s29, 1
    %s31 = scalar_select %p30, 0, %s29
    %s32 = sadd.s32 1, %s23
    %s33 = scalar_select %p30, %s32, %s23
    %p34 = scmp.ge.s32.totalorder %s33, 2
    %s35 = scalar_select %p34, 0, %s33
    %s36 = ssub.s32 %s23, %s35
    %p37 = scmp.eq.s32.totalorder %s36, 0
    %s39 = sadd.s32 %s38, 1
    %s40 = scalar_select %p37, %s38, %s39
    %p43 = pneg %p37
    %p44 = scmp.eq.s32.totalorder %s16, 1
    %p45 = por %p43, %p44
    %p46 = scmp.ne.s32.totalorder %s38, %s41
    %p47 = scmp.eq.s32.totalorder %s16, 0
    %p48 = por %p46, %p47
    %p49 = scmp.ne.s32.totalorder %s38, %s41
    %p50 = scmp.eq.s32.totalorder %s21, 1
    %p51 = por %p49, %p50
    %p52 = scmp.ne.s32.totalorder %s41, %s42
    %p53 = scmp.eq.s32.totalorder %s21, 0
    %p54 = por %p52, %p53
    %p55 = scmp.ne.s32.totalorder %s41, %s42
    %p56 = scmp.eq.s32.totalorder %s22, 1
    %p57 = por %p55, %p56
    %p59 = scmp.ne.s32.totalorder %s42, %s58
    %p60 = scmp.eq.s32.totalorder %s22, 0
    %p61 = por %p59, %p60
    %s62 = ssub.s32 %s23, %s35
    %p63 = scmp.eq.s32.totalorder %s62, 0
    %s65 = sadd.s32 %s64, 1
    %s66 = scalar_select %p63, %s64, %s65
    %p69 = pneg %p63
    %p70 = scmp.eq.s32.totalorder %s16, 1
    %p71 = por %p69, %p70
    %p72 = scmp.ne.s32.totalorder %s64, %s67
    %p73 = scmp.eq.s32.totalorder %s16, 0
    %p74 = por %p72, %p73
    %p75 = scmp.ne.s32.totalorder %s64, %s67
    %p76 = scmp.eq.s32.totalorder %s21, 1
    %p77 = por %p75, %p76
    %p78 = scmp.ne.s32.totalorder %s67, %s68
    %p79 = scmp.eq.s32.totalorder %s21, 0
    %p80 = por %p78, %p79
    %p81 = scmp.ne.s32.totalorder %s67, %s68
    %p82 = scmp.eq.s32.totalorder %s22, 1
    %p83 = por %p81, %p82
    %p85 = scmp.ne.s32.totalorder %s68, %s84
    %p86 = scmp.eq.s32.totalorder %s22, 0
    %p87 = por %p85, %p86
    %s89 = sadd.s32 %s88, 1
    %p92 = scmp.eq.s32.totalorder %s16, 1
    %p93 = scmp.ne.s32.totalorder %s88, %s90
    %p94 = scmp.eq.s32.totalorder %s16, 0
    %p95 = por %p93, %p94
    %p96 = scmp.ne.s32.totalorder %s88, %s90
    %p97 = scmp.eq.s32.totalorder %s21, 1
    %p98 = por %p96, %p97
    %p99 = scmp.ne.s32.totalorder %s90, %s91
    %p100 = scmp.eq.s32.totalorder %s21, 0
    %p101 = por %p99, %p100
    %p102 = scmp.ne.s32.totalorder %s90, %s91
    %p103 = scmp.eq.s32.totalorder %s22, 1
    %p104 = por %p102, %p103
    %p106 = scmp.ne.s32.totalorder %s91, %s105
    %p107 = scmp.eq.s32.totalorder %s22, 0
    %p108 = por %p106, %p107
    %s110 = sadd.s32 %s109, 1
    %p113 = scmp.eq.s32.totalorder %s16, 1
    %p114 = scmp.ne.s32.totalorder %s109, %s111
    %p115 = scmp.eq.s32.totalorder %s16, 0
    %p116 = por %p114, %p115
    %p117 = scmp.ne.s32.totalorder %s109, %s111
    %p118 = scmp.eq.s32.totalorder %s21, 1
    %p119 = por %p117, %p118
    %p120 = scmp.ne.s32.totalorder %s111, %s112
    %p121 = scmp.eq.s32.totalorder %s21, 0
    %p122 = por %p120, %p121
    %p123 = scmp.ne.s32.totalorder %s111, %s112
    %p124 = scmp.eq.s32.totalorder %s22, 1
    %p125 = por %p123, %p124
    %p127 = scmp.ne.s32.totalorder %s112, %s126
    %p128 = scmp.eq.s32.totalorder %s22, 0
    %p129 = por %p127, %p128
    %s131 = sadd.s32 %s130, 1
    %p134 = scmp.eq.s32.totalorder %s16, 1
    %p135 = scmp.ne.s32.totalorder %s130, %s132
    %p136 = scmp.eq.s32.totalorder %s16, 0
    %p137 = por %p135, %p136
    %p138 = scmp.ne.s32.totalorder %s130, %s132
    %p139 = scmp.eq.s32.totalorder %s21, 1
    %p140 = por %p138, %p139
    %p141 = scmp.ne.s32.totalorder %s132, %s133
    %p142 = scmp.eq.s32.totalorder %s21, 0
    %p143 = por %p141, %p142
    %p144 = scmp.ne.s32.totalorder %s132, %s133
    %p145 = scmp.eq.s32.totalorder %s22, 1
    %p146 = por %p144, %p145
    %p148 = scmp.ne.s32.totalorder %s133, %s147
    %p149 = scmp.eq.s32.totalorder %s22, 0
    %p150 = por %p148, %p149
    %s152 = sadd.s32 %s151, 1
    %p155 = scmp.eq.s32.totalorder %s16, 1
    %p156 = scmp.ne.s32.totalorder %s151, %s153
    %p157 = scmp.eq.s32.totalorder %s16, 0
    %p158 = por %p156, %p157
    %p159 = scmp.ne.s32.totalorder %s151, %s153
    %p160 = scmp.eq.s32.totalorder %s21, 1
    %p161 = por %p159, %p160
    %p162 = scmp.ne.s32.totalorder %s153, %s154
    %p163 = scmp.eq.s32.totalorder %s21, 0
    %p164 = por %p162, %p163
    %p165 = scmp.ne.s32.totalorder %s153, %s154
    %p166 = scmp.eq.s32.totalorder %s22, 1
    %p167 = por %p165, %p166
    %p169 = scmp.ne.s32.totalorder %s154, %s168
    %p170 = scmp.eq.s32.totalorder %s22, 0
    %p171 = por %p169, %p170
    %s172 = ssub.s32 %s24, %s31
    %p173 = scmp.eq.s32.totalorder %s172, 0
    %s175 = sadd.s32 %s174, 1
    %s176 = scalar_select %p173, %s174, %s175
    %p179 = pneg %p173
    %p180 = scmp.eq.s32.totalorder %s16, 1
    %p181 = por %p179, %p180
    %p182 = scmp.ne.s32.totalorder %s174, %s177
    %p183 = scmp.eq.s32.totalorder %s16, 0
    %p184 = por %p182, %p183
    %p185 = scmp.ne.s32.totalorder %s174, %s177
    %p186 = scmp.eq.s32.totalorder %s21, 1
    %p187 = por %p185, %p186
    %p188 = scmp.ne.s32.totalorder %s177, %s178
    %p189 = scmp.eq.s32.totalorder %s21, 0
    %p190 = por %p188, %p189
    %p191 = scmp.ne.s32.totalorder %s177, %s178
    %p192 = scmp.eq.s32.totalorder %s22, 1
    %p193 = por %p191, %p192
    %p195 = scmp.ne.s32.totalorder %s178, %s194
    %p196 = scmp.eq.s32.totalorder %s22, 0
    %p197 = por %p195, %p196
    %s198 = ssub.s32 %s24, %s31
    %p199 = scmp.eq.s32.totalorder %s198, 0
    %s201 = sadd.s32 %s200, 1
    %s202 = scalar_select %p199, %s200, %s201
    %p205 = pneg %p199
    %p206 = scmp.eq.s32.totalorder %s16, 1
    %p207 = por %p205, %p206
    %p208 = scmp.ne.s32.totalorder %s200, %s203
    %p209 = scmp.eq.s32.totalorder %s16, 0
    %p210 = por %p208, %p209
    %p211 = scmp.ne.s32.totalorder %s200, %s203
    %p212 = scmp.eq.s32.totalorder %s21, 1
    %p213 = por %p211, %p212
    %p214 = scmp.ne.s32.totalorder %s203, %s204
    %p215 = scmp.eq.s32.totalorder %s21, 0
    %p216 = por %p214, %p215
    %p217 = scmp.ne.s32.totalorder %s203, %s204
    %p218 = scmp.eq.s32.totalorder %s22, 1
    %p219 = por %p217, %p218
    %p221 = scmp.ne.s32.totalorder %s204, %s220
    %p222 = scmp.eq.s32.totalorder %s22, 0
    %p223 = por %p221, %p222
    %s224 = ssub.s32 %s24, %s31
    %p225 = scmp.eq.s32.totalorder %s224, 0
    %s227 = sadd.s32 %s226, 1
    %s228 = scalar_select %p225, %s226, %s227
    %p231 = pneg %p225
    %p232 = scmp.eq.s32.totalorder %s16, 1
    %p233 = por %p231, %p232
    %p234 = scmp.ne.s32.totalorder %s226, %s229
    %p235 = scmp.eq.s32.totalorder %s16, 0
    %p236 = por %p234, %p235
    %p237 = scmp.ne.s32.totalorder %s226, %s229
    %p238 = scmp.eq.s32.totalorder %s21, 1
    %p239 = por %p237, %p238
    %p240 = scmp.ne.s32.totalorder %s229, %s230
    %p241 = scmp.eq.s32.totalorder %s21, 0
    %p242 = por %p240, %p241
    %p243 = scmp.ne.s32.totalorder %s229, %s230
    %p244 = scmp.eq.s32.totalorder %s22, 1
    %p245 = por %p243, %p244
    %p247 = scmp.ne.s32.totalorder %s230, %s246
    %p248 = scmp.eq.s32.totalorder %s22, 0
    %p249 = por %p247, %p248
    %s251 = sadd.s32 %s250, 1
    %p254 = scmp.eq.s32.totalorder %s16, 1
    %p255 = scmp.ne.s32.totalorder %s250, %s252
    %p256 = scmp.eq.s32.totalorder %s16, 0
    %p257 = por %p255, %p256
    %p258 = scmp.ne.s32.totalorder %s250, %s252
    %p259 = scmp.eq.s32.totalorder %s21, 1
    %p260 = por %p258, %p259
    %p261 = scmp.ne.s32.totalorder %s252, %s253
    %p262 = scmp.eq.s32.totalorder %s21, 0
    %p263 = por %p261, %p262
    %p264 = scmp.ne.s32.totalorder %s252, %s253
    %p265 = scmp.eq.s32.totalorder %s22, 1
    %p266 = por %p264, %p265
    %p268 = scmp.ne.s32.totalorder %s253, %s267
    %p269 = scmp.eq.s32.totalorder %s22, 0
    %p270 = por %p268, %p269
    %s271 = ssub.s32 %s23, %s35
    %p272 = scmp.eq.s32.totalorder %s271, 0
    %s274 = sadd.s32 %s273, 1
    %s275 = scalar_select %p272, %s273, %s274
    %p278 = pneg %p272
    %p279 = scmp.eq.s32.totalorder %s16, 1
    %p280 = por %p278, %p279
    %p281 = scmp.ne.s32.totalorder %s273, %s276
    %p282 = scmp.eq.s32.totalorder %s16, 0
    %p283 = por %p281, %p282
    %p284 = scmp.ne.s32.totalorder %s273, %s276
    %p285 = scmp.eq.s32.totalorder %s21, 1
    %p286 = por %p284, %p285
    %p287 = scmp.ne.s32.totalorder %s276, %s277
    %p288 = scmp.eq.s32.totalorder %s21, 0
    %p289 = por %p287, %p288
    %p290 = scmp.ne.s32.totalorder %s276, %s277
    %p291 = scmp.eq.s32.totalorder %s22, 1
    %p292 = por %p290, %p291
    %p294 = scmp.ne.s32.totalorder %s277, %s293
    %p295 = scmp.eq.s32.totalorder %s22, 0
    %p296 = por %p294, %p295
    %p297 = scmp.le.s32.totalorder 1, %s16
    %p298 = scmp.lt.s32.totalorder %s16, 3
    %p299 = pnand %p297, %p298
    %p300 = pneg %p299
    // Predicated region
    $region9: #{_lambda_.10} parent=5 // pred_check
      _
    $region10: #{_lambda_.10} parent=5 // pred_check_branch
      %302 = sbr.rel (%p299) target = $region12
    $region11: #{_lambda_.10} parent=5 // pred_region
      %s303 = ssub.s32 %s16, 1
      // Predicated region
      $region13: #{_lambda_.10} parent=11 // pred_check
        %p304 = pneg %p101
      $region14: #{_lambda_.10} parent=11 // pred_check_branch
        %306 = sbr.rel (%p304) target = $region16
      $region15: #{_lambda_.10} parent=11 // pred_region
        _
      $region16: #{_lambda_.10} parent=11 // pred_fallthru
        _
      // Predicated region
      $region17: #{_lambda_.10} parent=11 // pred_check
        %p307 = pneg %p122
      $region18: #{_lambda_.10} parent=11 // pred_check_branch
        %309 = sbr.rel (%p307) target = $region20
      $region19: #{_lambda_.10} parent=11 // pred_region
        _
      $region20: #{_lambda_.10} parent=11 // pred_fallthru
        _
      // Predicated region
      $region21: #{_lambda_.10} parent=11 // pred_check
        %p310 = pneg %p143
      $region22: #{_lambda_.10} parent=11 // pred_check_branch
        %312 = sbr.rel (%p310) target = $region24
      $region23: #{_lambda_.10} parent=11 // pred_region
        _
      $region24: #{_lambda_.10} parent=11 // pred_fallthru
        _
      // Predicated region
      $region25: #{_lambda_.10} parent=11 // pred_check
        %p313 = pneg %p164
      $region26: #{_lambda_.10} parent=11 // pred_check_branch
        %315 = sbr.rel (%p313) target = $region28
      $region27: #{_lambda_.10} parent=11 // pred_region
        _
      $region28: #{_lambda_.10} parent=11 // pred_fallthru
        _
      // Predicated region
      $region29: #{_lambda_.10} parent=11 // pred_check
        %p316 = pneg %p190
      $region30: #{_lambda_.10} parent=11 // pred_check_branch
        %318 = sbr.rel (%p316) target = $region32
      $region31: #{_lambda_.10} parent=11 // pred_region
        %p319 = scmp.lt.s32.totalorder %s26, 0
        %s320 = scalar_select %p319, %s26, 0
        %s321 = smul.addr %s320, 4
        %s322 = scalar_lea.vmem %s6, %s321
      $region32: #{_lambda_.10} parent=11 // pred_fallthru
        _
      // Predicated region
      $region33: #{_lambda_.10} parent=11 // pred_check
        %p323 = pneg %p216
      $region34: #{_lambda_.10} parent=11 // pred_check_branch
        %325 = sbr.rel (%p323) target = $region36
      $region35: #{_lambda_.10} parent=11 // pred_region
        %p326 = scmp.lt.s32.totalorder %s26, 0
        %s327 = scalar_select %p326, %s26, 0
        %s328 = scalar_lea.vmem %s7, %s327
      $region36: #{_lambda_.10} parent=11 // pred_fallthru
        _
      // Predicated region
      $region37: #{_lambda_.10} parent=11 // pred_check
        %p329 = pneg %p242
      $region38: #{_lambda_.10} parent=11 // pred_check_branch
        %331 = sbr.rel (%p329) target = $region40
      $region39: #{_lambda_.10} parent=11 // pred_region
        %s332 = smul.u32 16, %s26
        %p333 = scmp.lt.s32.totalorder %s332, 15
        %s334 = scalar_select %p333, %s332, 15
        %s335 = smul.addr %s334, 4
        %s336 = scalar_lea.vmem %s8, %s335
        %s337 = smul.u32 16, %s26
      $region40: #{_lambda_.10} parent=11 // pred_fallthru
        _
      // Predicated region
      $region41: #{_lambda_.10} parent=11 // pred_check
        %p338 = pneg %p263
      $region42: #{_lambda_.10} parent=11 // pred_check_branch
        %340 = sbr.rel (%p338) target = $region44
      $region43: #{_lambda_.10} parent=11 // pred_region
        _
      $region44: #{_lambda_.10} parent=11 // pred_fallthru
        _
    $region12: #{_lambda_.10} parent=5 // pred_fallthru
      _
    %p341 = scmp.lt.s32.totalorder %s16, 2
    // Predicated region
    $region45: #{_lambda_.10} parent=5 // pred_check
      %p342 = pneg %p341
    $region46: #{_lambda_.10} parent=5 // pred_check_branch
      %344 = sbr.rel (%p342) target = $region48
    $region47: #{_lambda_.10} parent=5 // pred_region
      // Predicated region
      $region49: #{_lambda_.10} parent=47 // pred_check
        %p345 = pneg %p48
      $region50: #{_lambda_.10} parent=47 // pred_check_branch
        %347 = sbr.rel (%p345) target = $region52
      $region51: #{_lambda_.10} parent=47 // pred_region
        %p348 = scmp.lt.s32.totalorder %s23, 1
        %s349 = scalar_select %p348, %s23, 1
        %s350 = smul.addr %s349, 8
        %s351 = scalar_lea.vmem %s0, %s350
      $region52: #{_lambda_.10} parent=47 // pred_fallthru
        _
      // Predicated region
      $region53: #{_lambda_.10} parent=47 // pred_check
        %p352 = pneg %p74
      $region54: #{_lambda_.10} parent=47 // pred_check_branch
        %354 = sbr.rel (%p352) target = $region56
      $region55: #{_lambda_.10} parent=47 // pred_region
        %p355 = scmp.lt.s32.totalorder %s23, 1
        %s356 = scalar_select %p355, %s23, 1
        %s357 = smul.addr %s356, 4
        %s358 = scalar_lea.vmem %s1, %s357
      $region56: #{_lambda_.10} parent=47 // pred_fallthru
        _
    $region48: #{_lambda_.10} parent=5 // pred_fallthru
      _
    %p359 = scmp.le.s32.totalorder 1, %s16
    %p360 = scmp.lt.s32.totalorder %s16, 3
    %p361 = pnand %p359, %p360
    %p362 = pneg %p361
    // Predicated region
    $region57: #{_lambda_.10} parent=5 // pred_check
      _
    $region58: #{_lambda_.10} parent=5 // pred_check_branch
      %364 = sbr.rel (%p361) target = $region60
    $region59: #{_lambda_.10} parent=5 // pred_region
      %s365 = ssub.s32 %s16, 1
      %p366 = scmp.lt.s32.totalorder %s25, 1
      %s367 = scalar_select %p366, %s25, 1
      %s368 = smul.addr %s367, 8
      %s369 = scalar_lea.vmem %s0, %s368
      %p370 = pneg %p54
      %p371 = pneg %p51
      %p372 = scmp.lt.s32.totalorder %s25, 1
      %s373 = scalar_select %p372, %s25, 1
      %s374 = smul.addr %s373, 4
      %s375 = scalar_lea.vmem %s1, %s374
      %p376 = pneg %p80
      %p377 = pneg %p77
      %p378 = pneg %p101
      %p379 = pneg %p98
      %p380 = pneg %p122
      %p381 = pneg %p119
      %p382 = pneg %p143
      %p383 = pneg %p140
      %p384 = pneg %p164
      %p385 = pneg %p161
      %p386 = scmp.lt.s32.totalorder %s26, 0
      %s387 = scalar_select %p386, %s26, 0
      %s388 = smul.addr %s387, 4
      %s389 = scalar_lea.vmem %s6, %s388
      %p390 = pneg %p190
      %p391 = pneg %p187
      %p392 = scmp.lt.s32.totalorder %s26, 0
      %s393 = scalar_select %p392, %s26, 0
      %s394 = scalar_lea.vmem %s7, %s393
      %p395 = pneg %p216
      %p396 = pneg %p213
      %s397 = smul.u32 16, %s26
      %p398 = scmp.lt.s32.totalorder %s397, 15
      %s399 = scalar_select %p398, %s397, 15
      %s400 = smul.addr %s399, 4
      %s401 = scalar_lea.vmem %s8, %s400
      %p402 = pneg %p242
      %p403 = pneg %p239
      %p404 = pneg %p263
      %p405 = pneg %p260
      %p406 = pneg %p289
      %p407 = pneg %p286
      %p408 = scmp.lt.s32.totalorder %s25, 1
      %s409 = scalar_select %p408, %s25, 1
      %s410 = smul.addr %s409, 8
      %s411 = scalar_lea.vmem %s10, %s410
      %p412 = scmp.lt.s32.totalorder %s25, 1
      %s413 = scalar_select %p412, %s25, 1
      %s414 = smul.addr %s413, 8
      %s415 = scalar_lea.vmem %s0, %s414
      %p416 = scmp.lt.s32.totalorder %s25, 1
      %s417 = scalar_select %p416, %s25, 1
      %s418 = smul.addr %s417, 4
      %s419 = scalar_lea.vmem %s1, %s418
      %p420 = scmp.lt.s32.totalorder %s26, 0
      %s421 = scalar_select %p420, %s26, 0
      %s422 = smul.addr %s421, 4
      %s423 = scalar_lea.vmem %s6, %s422
      %p424 = scmp.lt.s32.totalorder %s26, 0
      %s425 = scalar_select %p424, %s26, 0
      %s426 = scalar_lea.vmem %s7, %s425
      %s427 = smul.u32 16, %s26
      %p428 = scmp.lt.s32.totalorder %s427, 15
      %s429 = scalar_select %p428, %s427, 15
      %s430 = smul.addr %s429, 4
      %s431 = scalar_lea.vmem %s8, %s430
      %s432 = smul.u32 16, %s26
      %p433 = scmp.lt.s32.totalorder %s25, 1
      %s434 = scalar_select %p433, %s25, 1
      %s435 = smul.addr %s434, 8
      %s436 = scalar_lea.vmem %s10, %s435
      %p438 = scmp.eq.s32.totalorder %s26, 0
      // Predicated region
      $region61: #{_lambda_.10} parent=59 // pred_check
        %p439 = pneg %p438
      $region62: #{_lambda_.10} parent=59 // pred_check_branch
        %441 = sbr.rel (%p439) target = $region64
      $region63: #{_lambda_.10} parent=59 // pred_region
        %v442 = vld [vmem:[%s419] sm:$0x7]
        %v443 = vld [vmem:[%s2] sm:$0xf]
        %v444 = vld [vmem:[%s2 + $0x4] sm:$0xf]
        %v445 = vld [vmem:[%s2 + $0x8] sm:$0xf]
        %v446 = vld [vmem:[%s2 + $0xc] sm:$0xf]
        %v447 = vld [vmem:[%s3] sm:$0x1]
        %v449 = vlaneseq
        %v450 = vshrl.u32 %v449, 7
        %v451 = vsub.s32 0, %v450
        %v452 = vrot.slane %v447, %v451
        %v458 = vunpack.c.l.b16 %v443
        %v459 = vunpack.c.l.b16 %v444
        %v460 = vunpack.c.l.b16 %v445
        %v461 = vunpack.c.l.b16 %v446
        %v462 = vpack.c.b16 %v459, %v458
        %v463 = vpack.c.b16 %v461, %v460
        %vm466 = vcmask 261120
        %v468 = vsel %vm466, %v442, 0
        %470 = vmatprep.subr.bf16.mxu0 0
        %471 = vmatpush1.bf16.msra.mxu0 0
        %472 = vmatprep.subr.bf16.mxu0 0
        %473 = vmatpush1.bf16.msra.mxu0 0
        %474 = vmatprep.subr.bf16.mxu0 0
        %475 = vmatpush1.bf16.msra.mxu0 0
        %476 = vmatprep.subr.bf16.mxu0 0
        %477 = vmatpush1.bf16.msra.mxu0 0
        %478 = vmatprep.subr.bf16.mxu0 0
        %479 = vmatpush1.bf16.msra.mxu0 0
        %480 = vmatprep.subr.bf16.mxu0 0
        %481 = vmatpush1.bf16.msra.mxu0 0
        %482 = vmatprep.subr.bf16.mxu0 0
        %483 = vmatpush1.bf16.msra.mxu0 %v463
        %484 = vmatprep.subr.bf16.mxu0 0
        %485 = vmatpush1.bf16.msra.mxu0 %v462
        %486 = vmatprep.subr.bf16.mxu0 0
        %487 = vmatpush2.bf16.msra.mxu0 0
        %488 = vmatprep.subr.bf16.mxu0 0
        %489 = vmatpush2.bf16.msra.mxu0 0
        %490 = vmatprep.subr.bf16.mxu0 0
        %491 = vmatpush2.bf16.msra.mxu0 0
        %492 = vmatprep.subr.bf16.mxu0 0
        %493 = vmatpush2.bf16.msra.mxu0 0
        %494 = vmatprep.subr.bf16.mxu0 0
        %495 = vmatpush2.bf16.msra.mxu0 0
        %496 = vmatprep.subr.bf16.mxu0 0
        %497 = vmatpush2.bf16.msra.mxu0 0
        %498 = vmatprep.subr.bf16.mxu0 0
        %499 = vmatpush2.bf16.msra.mxu0 0
        %500 = vmatprep.subr.bf16.mxu0 0
        %501 = vmatpush2.bf16.msra.mxu0 0
        %502 = vmatprep.mubr.bf16.mxu0 0
        %503 = vmatmul.mubr.bf16.gmra.mxu0 %v468
        %v504 = vpop.f32.mrf.mxu0
        %v505 = vadd.f32 %v452, %v504
        %v506 = vpop.f32.mrf.mxu0
        %v507 = vpop.f32.mrf.mxu0
        %v508 = vpop.f32.mrf.mxu0
        %509 = vdwg.mxu0
        %v510 = vld [vmem:[%s415] sm:$0x1f]
        %v511 = vadd.f32 %v510, %v505
        %vm512 = vcmask 258048
        %513 = vst.msk [vmem:[#allocation2] sm:$0x1f] %vm512, %v511
        %v514 = vld [vmem:[%s4] sm:$0x1]
        %v515 = vld [vmem:[%s5] sm:$0x1]
        %v516 = vsel %vm512, %v511, 0.0
        %517 = vadd.xlane.f32.xlu0 %v516
        %v518 = vpop.xlane.xlu0 %517
        %v519 = vrcp.pop 32.0
        %v520 = vmul.f32 %v518, %v519
        %v521 = vsub.f32 %v511, %v520
        %v522 = vmul.f32 %v521, %v521
        %v523 = vsel %vm512, %v522, 0.0
        %524 = vadd.xlane.f32.xlu0 %v523
        %v525 = vpop.xlane.xlu0 %524
        %v526 = vmul.f32 %v525, %v519
        %v527 = vadd.f32 %v526, 1e-05
        %v528 = vrsqrt.pop %v527
        %v529 = vmul.f32 %v521, %v528
        %v531 = vlaneseq
        %v532 = vshrl.u32 %v531, 7
        %v533 = vsub.s32 0, %v532
        %v534 = vrot.slane %v514, %v533
        %v536 = vmul.f32 %v529, %v534
        %v538 = vlaneseq
        %v539 = vshrl.u32 %v538, 7
        %v540 = vsub.s32 0, %v539
        %v541 = vrot.slane %v515, %v540
        %v543 = vadd.f32 %v536, %v541
        %v544 = vpack.c.bf16 %v543, %v543
        %vm545 = vcmask 256000
        %vm546 = vsmask.f32 2304
        %vm547 = vmand %vm545, %vm546
        %v548 = vld [vmem:[#allocation3] sm:$0x7]
        %v549 = vsel %vm547, %v544, %v548
        %550 = vst [vmem:[#allocation3] sm:$0x7] %v549
        %551 = vst.msk [vmem:[#allocation4] sm:$0x1f] %vm512, 0.0
      $region64: #{_lambda_.10} parent=59 // pred_fallthru
        _
      %v552 = vld [vmem:[#allocation3] sm:$0x7]
      %v553 = vld [vmem:[%s423] sm:$0xf]
      %v554 = vld [vmem:[%s423 + $0x4] sm:$0xf]
      %v555 = vld [vmem:[%s423 + $0x8] sm:$0xf]
      %v556 = vld [vmem:[%s423 + $0xc] sm:$0xf]
      %v557 = vld [vmem:[%s426] sm:$0x1]
      %v559 = vlaneseq
      %v560 = vshrl.u32 %v559, 7
      %v561 = vsub.s32 0, %v560
      %v562 = vrot.slane %v557, %v561
      %v568 = vunpack.c.l.b16 %v553
      %v569 = vunpack.c.l.b16 %v554
      %v570 = vunpack.c.l.b16 %v555
      %v571 = vunpack.c.l.b16 %v556
      %v572 = vpack.c.b16 %v569, %v568
      %v573 = vpack.c.b16 %v571, %v570
      %vm576 = vcmask 261120
      %v578 = vsel %vm576, %v552, 0
      %580 = vmatprep.subr.bf16.mxu0 0
      %581 = vmatpush1.bf16.msra.mxu0 0
      %582 = vmatprep.subr.bf16.mxu0 0
      %583 = vmatpush1.bf16.msra.mxu0 0
      %584 = vmatprep.subr.bf16.mxu0 0
      %585 = vmatpush1.bf16.msra.mxu0 0
      %586 = vmatprep.subr.bf16.mxu0 0
      %587 = vmatpush1.bf16.msra.mxu0 0
      %588 = vmatprep.subr.bf16.mxu0 0
      %589 = vmatpush1.bf16.msra.mxu0 0
      %590 = vmatprep.subr.bf16.mxu0 0
      %591 = vmatpush1.bf16.msra.mxu0 0
      %592 = vmatprep.subr.bf16.mxu0 0
      %593 = vmatpush1.bf16.msra.mxu0 %v573
      %594 = vmatprep.subr.bf16.mxu0 0
      %595 = vmatpush1.bf16.msra.mxu0 %v572
      %596 = vmatprep.subr.bf16.mxu0 0
      %597 = vmatpush2.bf16.msra.mxu0 0
      %598 = vmatprep.subr.bf16.mxu0 0
      %599 = vmatpush2.bf16.msra.mxu0 0
      %600 = vmatprep.subr.bf16.mxu0 0
      %601 = vmatpush2.bf16.msra.mxu0 0
      %602 = vmatprep.subr.bf16.mxu0 0
      %603 = vmatpush2.bf16.msra.mxu0 0
      %604 = vmatprep.subr.bf16.mxu0 0
      %605 = vmatpush2.bf16.msra.mxu0 0
      %606 = vmatprep.subr.bf16.mxu0 0
      %607 = vmatpush2.bf16.msra.mxu0 0
      %608 = vmatprep.subr.bf16.mxu0 0
      %609 = vmatpush2.bf16.msra.mxu0 0
      %610 = vmatprep.subr.bf16.mxu0 0
      %611 = vmatpush2.bf16.msra.mxu0 0
      %612 = vmatprep.mubr.bf16.mxu0 0
      %613 = vmatmul.mubr.bf16.gmra.mxu0 %v578
      %v614 = vpop.f32.mrf.mxu0
      %v615 = vadd.f32 %v562, %v614
      %v616 = vpop.f32.mrf.mxu0
      %v617 = vpop.f32.mrf.mxu0
      %v618 = vpop.f32.mrf.mxu0
      %619 = vdwg.mxu0
      %v620 = vmul.f32 %v615, 1.702
      %v621 = vxor.u32 %v620, 2147483648
      %v622 = vmul.f32 %v621, 1.442695
      %v623 = vpow.pop %v622
      %v624 = vadd.f32 %v623, 1.0
      %v625 = vrcp.pop %v624
      %v626 = vmul.f32 1.0, %v625
      %v627 = vmul.f32 %v615, %v626
      %v628 = vld [vmem:[#allocation4] sm:$0x1f]
      %v629 = vpack.c.bf16 %v627, %v627
      %v630 = vld [vmem:[%s431] sm:$0xf]
      %v631 = vld [vmem:[%s431 + $0x4] sm:$0xf]
      %v632 = vld [vmem:[%s431 + $0x8] sm:$0xf]
      %v633 = vld [vmem:[%s431 + $0xc] sm:$0xf]
      %v634 = vld [vmem:[%s431 + $0x10] sm:$0xf]
      %v635 = vld [vmem:[%s431 + $0x14] sm:$0xf]
      %v636 = vld [vmem:[%s431 + $0x18] sm:$0xf]
      %v637 = vld [vmem:[%s431 + $0x1c] sm:$0xf]
      %v638 = vld [vmem:[%s431 + $0x20] sm:$0xf]
      %v639 = vld [vmem:[%s431 + $0x24] sm:$0xf]
      %v640 = vld [vmem:[%s431 + $0x28] sm:$0xf]
      %v641 = vld [vmem:[%s431 + $0x2c] sm:$0xf]
      %v642 = vld [vmem:[%s431 + $0x30] sm:$0xf]
      %v643 = vld [vmem:[%s431 + $0x34] sm:$0xf]
      %v644 = vld [vmem:[%s431 + $0x38] sm:$0xf]
      %v645 = vld [vmem:[%s431 + $0x3c] sm:$0xf]
      %v662 = vunpack.c.l.b16 %v630
      %v663 = vunpack.c.l.b16 %v631
      %v664 = vunpack.c.l.b16 %v632
      %v665 = vunpack.c.l.b16 %v633
      %v666 = vunpack.c.l.b16 %v634
      %v667 = vunpack.c.l.b16 %v635
      %v668 = vunpack.c.l.b16 %v636
      %v669 = vunpack.c.l.b16 %v637
      %v670 = vunpack.c.l.b16 %v638
      %v671 = vunpack.c.l.b16 %v639
      %v672 = vunpack.c.l.b16 %v640
      %v673 = vunpack.c.l.b16 %v641
      %v674 = vunpack.c.l.b16 %v642
      %v675 = vunpack.c.l.b16 %v643
      %v676 = vunpack.c.l.b16 %v644
      %v677 = vunpack.c.l.b16 %v645
      %v678 = vpack.c.b16 %v663, %v662
      %v679 = vpack.c.b16 %v665, %v664
      %v680 = vpack.c.b16 %v667, %v666
      %v681 = vpack.c.b16 %v669, %v668
      %v682 = vpack.c.b16 %v671, %v670
      %v683 = vpack.c.b16 %v673, %v672
      %v684 = vpack.c.b16 %v675, %v674
      %v685 = vpack.c.b16 %v677, %v676
      %694 = vmatprep.subr.bf16.mxu0 0
      %695 = vmatpush1.bf16.msra.mxu0 %v685
      %696 = vmatprep.subr.bf16.mxu0 0
      %697 = vmatpush1.bf16.msra.mxu0 %v684
      %698 = vmatprep.subr.bf16.mxu0 0
      %699 = vmatpush1.bf16.msra.mxu0 %v683
      %700 = vmatprep.subr.bf16.mxu0 0
      %701 = vmatpush1.bf16.msra.mxu0 %v682
      %702 = vmatprep.subr.bf16.mxu0 0
      %703 = vmatpush1.bf16.msra.mxu0 %v681
      %704 = vmatprep.subr.bf16.mxu0 0
      %705 = vmatpush1.bf16.msra.mxu0 %v680
      %706 = vmatprep.subr.bf16.mxu0 0
      %707 = vmatpush1.bf16.msra.mxu0 %v679
      %708 = vmatprep.subr.bf16.mxu0 0
      %709 = vmatpush1.bf16.msra.mxu0 %v678
      %710 = vmatprep.subr.bf16.mxu0 0
      %711 = vmatpush2.bf16.msra.mxu0 0
      %712 = vmatprep.subr.bf16.mxu0 0
      %713 = vmatpush2.bf16.msra.mxu0 0
      %714 = vmatprep.subr.bf16.mxu0 0
      %715 = vmatpush2.bf16.msra.mxu0 0
      %716 = vmatprep.subr.bf16.mxu0 0
      %717 = vmatpush2.bf16.msra.mxu0 0
      %718 = vmatprep.subr.bf16.mxu0 0
      %719 = vmatpush2.bf16.msra.mxu0 0
      %720 = vmatprep.subr.bf16.mxu0 0
      %721 = vmatpush2.bf16.msra.mxu0 0
      %722 = vmatprep.subr.bf16.mxu0 0
      %723 = vmatpush2.bf16.msra.mxu0 0
      %724 = vmatprep.subr.bf16.mxu0 0
      %725 = vmatpush2.bf16.msra.mxu0 0
      %726 = vmatprep.mubr.bf16.mxu0 0
      %727 = vmatmul.mubr.bf16.gmra.mxu0 %v629
      %v728 = vpop.f32.mrf.mxu0
      %v729 = vadd.f32 0.0, %v728
      %v730 = vpop.f32.mrf.mxu0
      %v731 = vpop.f32.mrf.mxu0
      %v732 = vpop.f32.mrf.mxu0
      %733 = vdwg.mxu0
      %v734 = vadd.f32 %v628, %v729
      %vm735 = vcmask 258048
      %736 = vst.msk [vmem:[#allocation4] sm:$0x1f] %vm735, %v734
      // Predicated region
      $region65: #{_lambda_.10} parent=59 // pred_check
        %p737 = pneg %p438
      $region66: #{_lambda_.10} parent=59 // pred_check_branch
        %739 = sbr.rel (%p737) target = $region68
      $region67: #{_lambda_.10} parent=59 // pred_region
        %v740 = vld [vmem:[#allocation2] sm:$0x1f]
        %v741 = vld [vmem:[#allocation4] sm:$0x1f]
        %v742 = vadd.f32 %v740, %v741
        %v743 = vld [vmem:[%s9] sm:$0x1]
        %v745 = vlaneseq
        %v746 = vshrl.u32 %v745, 7
        %v747 = vsub.s32 0, %v746
        %v748 = vrot.slane %v743, %v747
        %v750 = vadd.f32 %v742, %v748
        %751 = vst.msk [vmem:[%s436] sm:$0x1f] %vm735, %v750
      $region68: #{_lambda_.10} parent=59 // pred_fallthru
        _
      %p752 = scmp.lt.s32.totalorder %s25, 1
      %s753 = scalar_select %p752, %s25, 1
      %s754 = smul.addr %s753, 8
      %s755 = scalar_lea.vmem %s10, %s754
      // Predicated region
      $region69: #{_lambda_.10} parent=59 // pred_check
        %p756 = pneg %p286
      $region70: #{_lambda_.10} parent=59 // pred_check_branch
        %758 = sbr.rel (%p756) target = $region72
      $region71: #{_lambda_.10} parent=59 // pred_region
        _
      $region72: #{_lambda_.10} parent=59 // pred_fallthru
        _
    $region60: #{_lambda_.10} parent=5 // pred_fallthru
      _
    %p759 = scmp.le.s32.totalorder 2, %s16
    // Predicated region
    $region73: #{_lambda_.10} parent=5 // pred_check
      %p760 = pneg %p759
    $region74: #{_lambda_.10} parent=5 // pred_check_branch
      %762 = sbr.rel (%p760) target = $region76
    $region75: #{_lambda_.10} parent=5 // pred_region
      %s763 = ssub.s32 %s16, 2
      // Predicated region
      $region77: #{_lambda_.10} parent=75 // pred_check
        %p764 = pneg %p292
      $region78: #{_lambda_.10} parent=75 // pred_check_branch
        %766 = sbr.rel (%p764) target = $region80
      $region79: #{_lambda_.10} parent=75 // pred_region
        %p767 = scmp.lt.s32.totalorder %s27, 1
        %s768 = scalar_select %p767, %s27, 1
        %s769 = smul.addr %s768, 8
        %s770 = scalar_lea.vmem %s10, %s769
      $region80: #{_lambda_.10} parent=75 // pred_fallthru
        _
    $region76: #{_lambda_.10} parent=5 // pred_fallthru
      _
  $region6: #{_lambda_.10} parent=0 // loop_footer
    %s20 = sadd.s32 1, %s16
  $region7: #{_lambda_.10} parent=0 // loop_footer_branch
    %15 = sbr.rel target = $region3
  $region8: #{_lambda_.10} parent=0 // loop_exit
    _

</llo_original>
